<compile_context>
chip_gen: v5e
topology: v5e:2x2
jax: 0.10.0
libtpu: 0.0.40
codegen_flags: <defaults>
</compile_context>

<pallas_src>
import numpy as np
import jax
import jax.numpy as jnp
from jax import lax
from jax.experimental import pallas as pl
from jax.experimental.pallas import tpu as pltpu

K = 8          # conv kernel size (all layers)
STRIDE = 4     # conv stride (all layers)
C_HID = 32     # conv / MLP hidden width
N_OUT = 6      # classifier output width


def _conv_out_len(L_in, dilation):
    return (L_in - dilation * (K - 1) - 1) // STRIDE + 1


# ------------------------------ fused kernel --------------------------------

def _fused_kernel(x_ref, w1_ref, b1_ref,
                  s2_ref, w2_ref, b2_ref,
                  s3_ref, w3_ref, b3_ref,
                  s4_ref, w4_ref, b4_ref,
                  fw1_ref, fb1_ref, fw2_ref, fb2_ref, fw3_ref, fb3_ref,
                  o_ref):
    f32 = jnp.float32
    L1 = s2_ref.shape[2]   # conv1 output length

    # ---- conv1: C_in=1, K=8, stride=4, dilation=2 -> 8 VPU FMAs ------------
    # x_ref block is (1, L/4, 4) with x_ref[0, p, q] == x[4p + q]; the tap t of
    # output position i is x[4i + 2t] = x_ref[0, i + t//2, 2*(t % 2)].
    acc = jnp.zeros((L1, C_HID), f32)
    for u in range(K // 2):
        for v in range(2):
            t = 2 * u + v
            col = x_ref[0, pl.ds(u, L1), pl.ds(2 * v, 1)]     # (L1, 1)
            row = w1_ref[pl.ds(t, 1), :]                      # (1, C_HID)
            acc = acc + col * row                             # broadcast FMA (VPU)
    h = jnp.maximum(acc + b1_ref[...], 0.0)                   # (L1, 32)

    # ---- conv2..conv4: gather-as-matmul with 0/1 selection matrices (MXU) --
    def conv_stage(h_in, s_ref, w_ref, b_ref):
        L_out = s_ref.shape[1]
        acc = jnp.zeros((L_out, C_HID), f32)
        for t in range(K):
            tap = jnp.dot(s_ref[t], h_in, preferred_element_type=f32)     # gather rows
            acc = acc + jnp.dot(tap, w_ref[t], preferred_element_type=f32)
        return jnp.maximum(acc + b_ref[...], 0.0)

    h = conv_stage(h, s2_ref, w2_ref, b2_ref)                 # (L2, 32)
    h = conv_stage(h, s3_ref, w3_ref, b3_ref)                 # (L3, 32)
    h = conv_stage(h, s4_ref, w4_ref, b4_ref)                 # (L4, 32)

    # Dropout layers are identity in eval mode.
    # ---- mean pool over remaining positions + 3-layer MLP head -------------
    m = jnp.mean(h, axis=0, keepdims=True)                    # (1, 32)
    z = jnp.maximum(
        jnp.dot(m, fw1_ref[...], preferred_element_type=f32) + fb1_ref[...], 0.0)
    z = jnp.maximum(
        jnp.dot(z, fw2_ref[...], preferred_element_type=f32) + fb2_ref[...], 0.0)
    z = jnp.dot(z, fw3_ref[...], preferred_element_type=f32) + fb3_ref[...]   # (1, 6)
    o_ref[0] = z


def _const_spec(shape):
    nd = len(shape)
    return pl.BlockSpec(shape, lambda b, nd=nd: (0,) * nd)


@jax.jit
def dil_model_forward(x_ncw, packed):
    """x_ncw: PyTorch-style (B, 1, L) input. Returns (B, 6) logits."""
    B, _, L = x_ncw.shape
    assert L % STRIDE == 0, "input length must be a multiple of the stride"
    # Free (metadata-only) reshape: x_r[b, p, q] = x[b, 0, 4p + q].
    x_r = x_ncw.astype(jnp.float32).reshape(B, L // STRIDE, STRIDE)

    consts = (packed["w1"], packed["b1"],
              packed["S2"], packed["w2"], packed["b2"],
              packed["S3"], packed["w3"], packed["b3"],
              packed["S4"], packed["w4"], packed["b4"],
              packed["fw1"], packed["fb1"], packed["fw2"], packed["fb2"],
              packed["fw3"], packed["fb3"])

    out = pl.pallas_call(
        _fused_kernel,
        grid=(B,),
        in_specs=[pl.BlockSpec((1, L // STRIDE, STRIDE), lambda b: (b, 0, 0))]
                 + [_const_spec(c.shape) for c in consts],
        out_specs=pl.BlockSpec((1, 1, N_OUT), lambda b: (b, 0, 0)),
        out_shape=jax.ShapeDtypeStruct((B, 1, N_OUT), jnp.float32),
        compiler_params=pltpu.CompilerParams(dimension_semantics=("parallel",)),
    )(x_r, *consts)
    return out.reshape(B, N_OUT)


# ------------------------------- parameters ---------------------------------

def _xavier_uniform(key, shape, fan_in, fan_out):
    bound = float(np.sqrt(6.0 / (fan_in + fan_out)))
    return jax.random.uniform(key, shape, jnp.float32, -bound, bound)


def init_params(key):
    keys = jax.random.split(key, 7)
    p = {}
    conv_cfg = [(1, C_HID), (C_HID, C_HID), (C_HID, C_HID), (C_HID, C_HID)]
    for i, (cin, cout) in enumerate(conv_cfg):
        # PyTorch Conv1d weight layout (C_out, C_in, K); torch xavier fans = (C_in*K, C_out*K).
        p[f"conv{i+1}_w"] = _xavier_uniform(keys[i], (cout, cin, K), cin * K, cout * K)
        p[f"conv{i+1}_b"] = jnp.zeros((cout,), jnp.float32)
    lin_cfg = [(C_HID, C_HID), (C_HID, C_HID), (C_HID, N_OUT)]
    for i, (fin, fout) in enumerate(lin_cfg):
        p[f"fc{i+1}_w"] = _xavier_uniform(keys[4 + i], (fin, fout), fin, fout)  # (in, out)
        p[f"fc{i+1}_b"] = jnp.zeros((fout,), jnp.float32)
    return p


def _selection_matrices(L_in, L_out, dilation):
    """S[t, i, j] = 1 iff j == stride*i + dilation*t (tap gather as matmul)."""
    S = np.zeros((K, L_out, L_in), np.float32)
    rows = np.arange(L_out)
    for t in range(K):
        S[t, rows, STRIDE * rows + dilation * t] = 1.0
    return jnp.asarray(S)


def pack_params(params, L):
    """One-time repack outside the jitted hot path: conv weights to
    (K, C_in, C_out) matmul layout, biases to (1, C), plus the constant
    tap-selection matrices for conv2..conv4."""
    L1 = _conv_out_len(L, 2)
    L2 = _conv_out_len(L1, 2)
    L3 = _conv_out_len(L2, 1)
    L4 = _conv_out_len(L3, 1)
    return {
        "w1": jnp.transpose(params["conv1_w"], (2, 1, 0)).reshape(K, C_HID),
        "b1": params["conv1_b"].reshape(1, C_HID),
        "S2": _selection_matrices(L1, L2, 2),
        "w2": jnp.transpose(params["conv2_w"], (2, 1, 0)),
        "b2": params["conv2_b"].reshape(1, C_HID),
        "S3": _selection_matrices(L2, L3, 1),
        "w3": jnp.transpose(params["conv3_w"], (2, 1, 0)),
        "b3": params["conv3_b"].reshape(1, C_HID),
        "S4": _selection_matrices(L3, L4, 1),
        "w4": jnp.transpose(params["conv4_w"], (2, 1, 0)),
        "b4": params["conv4_b"].reshape(1, C_HID),
        "fw1": params["fc1_w"], "fb1": params["fc1_b"].reshape(1, C_HID),
        "fw2": params["fc2_w"], "fb2": params["fc2_b"].reshape(1, C_HID),
        "fw3": params["fc3_w"], "fb3": params["fc3_b"].reshape(1, N_OUT),
    }


# ------------------------------- reference ----------------------------------

def ref_forward(x_ncw, params):
    """Pure-JAX reference (mirrors the PyTorch forward in eval mode)."""
    h = x_ncw.astype(jnp.float32)
    cfgs = [("conv1", 2), ("conv2", 2), ("conv3", 1), ("conv4", 1)]
    for name, dil in cfgs:
        h = lax.conv_general_dilated(
            h, params[name + "_w"], window_strides=(STRIDE,), padding="VALID",
            rhs_dilation=(dil,), dimension_numbers=("NCH", "OIH", "NCH"))
        h = jnp.maximum(h + params[name + "_b"][None, :, None], 0.0)
    m = jnp.mean(h, axis=-1)
    h = jnp.maximum(m @ params["fc1_w"] + params["fc1_b"], 0.0)
    h = jnp.maximum(h @ params["fc2_w"] + params["fc2_b"], 0.0)
    return h @ params["fc3_w"] + params["fc3_b"]


# ---------------------------------- main -------------------------------------

if __name__ == "__main__":
    key = jax.random.PRNGKey(0)
    kx, kp = jax.random.split(key)
    # Smallest power-of-two length that survives all four stride-4 convs:
    # L=1024 -> 253 -> 60 -> 14 -> 2.
    B, L = 2, 1024
    x = jax.random.normal(kx, (B, 1, L), jnp.float32)   # PyTorch NCW: (B, C=1, L)
    params = init_params(kp)
    packed = pack_params(params, L)

    out = dil_model_forward(x, packed)
    out = jax.block_until_ready(out)

    ref = ref_forward(x, params)
    assert out.shape == (B, N_OUT), out.shape
    assert jnp.allclose(out, ref, atol=1e-4, rtol=1e-4), (out, ref)
    print("KERNEL_OK")
</pallas_src>

<mosaic_0001>
module attributes {stable_mosaic.version = 11 : i64} {
  func.func @_fused_kernel(%arg0: i32, %arg1: memref<1x256x4xf32, #tpu.memory_space<vmem>>, %arg2: memref<8x32xf32, #tpu.memory_space<vmem>>, %arg3: memref<1x32xf32, #tpu.memory_space<vmem>>, %arg4: memref<8x60x253xf32, #tpu.memory_space<vmem>>, %arg5: memref<8x32x32xf32, #tpu.memory_space<vmem>>, %arg6: memref<1x32xf32, #tpu.memory_space<vmem>>, %arg7: memref<8x14x60xf32, #tpu.memory_space<vmem>>, %arg8: memref<8x32x32xf32, #tpu.memory_space<vmem>>, %arg9: memref<1x32xf32, #tpu.memory_space<vmem>>, %arg10: memref<8x2x14xf32, #tpu.memory_space<vmem>>, %arg11: memref<8x32x32xf32, #tpu.memory_space<vmem>>, %arg12: memref<1x32xf32, #tpu.memory_space<vmem>>, %arg13: memref<32x32xf32, #tpu.memory_space<vmem>>, %arg14: memref<1x32xf32, #tpu.memory_space<vmem>>, %arg15: memref<32x32xf32, #tpu.memory_space<vmem>>, %arg16: memref<1x32xf32, #tpu.memory_space<vmem>>, %arg17: memref<32x6xf32, #tpu.memory_space<vmem>>, %arg18: memref<1x6xf32, #tpu.memory_space<vmem>>, %arg19: memref<1x1x6xf32, #tpu.memory_space<vmem>>) attributes {dimension_semantics = [#tpu.dimension_semantics<parallel>], iteration_bounds = array<i64: 2>, scalar_prefetch = 0 : i64, scratch_operands = 0 : i64, tpu.core_type = #tpu.core_type<tc>, window_params = [{transform_indices = @transform_0, window_bounds = array<i64: 1, 256, 4>}, {pipeline_mode = #tpu.pipeline_mode<synchronous>, transform_indices = @transform_1, window_bounds = array<i64: 8, 32>}, {pipeline_mode = #tpu.pipeline_mode<synchronous>, transform_indices = @transform_2, window_bounds = array<i64: 1, 32>}, {pipeline_mode = #tpu.pipeline_mode<synchronous>, transform_indices = @transform_3, window_bounds = array<i64: 8, 60, 253>}, {pipeline_mode = #tpu.pipeline_mode<synchronous>, transform_indices = @transform_4, window_bounds = array<i64: 8, 32, 32>}, {pipeline_mode = #tpu.pipeline_mode<synchronous>, transform_indices = @transform_5, window_bounds = array<i64: 1, 32>}, {pipeline_mode = #tpu.pipeline_mode<synchronous>, transform_indices = @transform_6, window_bounds = array<i64: 8, 14, 60>}, {pipeline_mode = #tpu.pipeline_mode<synchronous>, transform_indices = @transform_7, window_bounds = array<i64: 8, 32, 32>}, {pipeline_mode = #tpu.pipeline_mode<synchronous>, transform_indices = @transform_8, window_bounds = array<i64: 1, 32>}, {pipeline_mode = #tpu.pipeline_mode<synchronous>, transform_indices = @transform_9, window_bounds = array<i64: 8, 2, 14>}, {pipeline_mode = #tpu.pipeline_mode<synchronous>, transform_indices = @transform_10, window_bounds = array<i64: 8, 32, 32>}, {pipeline_mode = #tpu.pipeline_mode<synchronous>, transform_indices = @transform_11, window_bounds = array<i64: 1, 32>}, {pipeline_mode = #tpu.pipeline_mode<synchronous>, transform_indices = @transform_12, window_bounds = array<i64: 32, 32>}, {pipeline_mode = #tpu.pipeline_mode<synchronous>, transform_indices = @transform_13, window_bounds = array<i64: 1, 32>}, {pipeline_mode = #tpu.pipeline_mode<synchronous>, transform_indices = @transform_14, window_bounds = array<i64: 32, 32>}, {pipeline_mode = #tpu.pipeline_mode<synchronous>, transform_indices = @transform_15, window_bounds = array<i64: 1, 32>}, {pipeline_mode = #tpu.pipeline_mode<synchronous>, transform_indices = @transform_16, window_bounds = array<i64: 32, 6>}, {pipeline_mode = #tpu.pipeline_mode<synchronous>, transform_indices = @transform_17, window_bounds = array<i64: 1, 6>}, {transform_indices = @transform_18, window_bounds = array<i64: 1, 1, 6>}]} {
    %cst = arith.constant 0.000000e+00 : f32
    %0 = vector.broadcast %cst : f32 to vector<253x32xf32>
    %c0 = arith.constant 0 : index
    %c0_0 = arith.constant 0 : index
    %c0_1 = arith.constant 0 : index
    %1 = vector.load %arg1[%c0, %c0_0, %c0_1] : memref<1x256x4xf32, #tpu.memory_space<vmem>>, vector<1x253x1xf32>
    %2 = vector.shape_cast %1 : vector<1x253x1xf32> to vector<253x1xf32>
    %c0_2 = arith.constant 0 : index
    %c0_3 = arith.constant 0 : index
    %3 = vector.load %arg2[%c0_2, %c0_3] : memref<8x32xf32, #tpu.memory_space<vmem>>, vector<1x32xf32>
    %4 = vector.broadcast %2 : vector<253x1xf32> to vector<253x32xf32>
    %5 = vector.broadcast %3 : vector<1x32xf32> to vector<253x32xf32>
    %6 = arith.mulf %4, %5 : vector<253x32xf32>
    %7 = arith.addf %0, %6 : vector<253x32xf32>
    %c0_4 = arith.constant 0 : index
    %c0_5 = arith.constant 0 : index
    %c2 = arith.constant 2 : index
    %8 = vector.load %arg1[%c0_4, %c0_5, %c2] : memref<1x256x4xf32, #tpu.memory_space<vmem>>, vector<1x253x1xf32>
    %9 = vector.shape_cast %8 : vector<1x253x1xf32> to vector<253x1xf32>
    %c1 = arith.constant 1 : index
    %c0_6 = arith.constant 0 : index
    %10 = vector.load %arg2[%c1, %c0_6] : memref<8x32xf32, #tpu.memory_space<vmem>>, vector<1x32xf32>
    %11 = vector.broadcast %9 : vector<253x1xf32> to vector<253x32xf32>
    %12 = vector.broadcast %10 : vector<1x32xf32> to vector<253x32xf32>
    %13 = arith.mulf %11, %12 : vector<253x32xf32>
    %14 = arith.addf %7, %13 : vector<253x32xf32>
    %c0_7 = arith.constant 0 : index
    %c1_8 = arith.constant 1 : index
    %c0_9 = arith.constant 0 : index
    %15 = vector.load %arg1[%c0_7, %c1_8, %c0_9] : memref<1x256x4xf32, #tpu.memory_space<vmem>>, vector<1x253x1xf32>
    %16 = vector.shape_cast %15 : vector<1x253x1xf32> to vector<253x1xf32>
    %c2_10 = arith.constant 2 : index
    %c0_11 = arith.constant 0 : index
    %17 = vector.load %arg2[%c2_10, %c0_11] : memref<8x32xf32, #tpu.memory_space<vmem>>, vector<1x32xf32>
    %18 = vector.broadcast %16 : vector<253x1xf32> to vector<253x32xf32>
    %19 = vector.broadcast %17 : vector<1x32xf32> to vector<253x32xf32>
    %20 = arith.mulf %18, %19 : vector<253x32xf32>
    %21 = arith.addf %14, %20 : vector<253x32xf32>
    %c0_12 = arith.constant 0 : index
    %c1_13 = arith.constant 1 : index
    %c2_14 = arith.constant 2 : index
    %22 = vector.load %arg1[%c0_12, %c1_13, %c2_14] : memref<1x256x4xf32, #tpu.memory_space<vmem>>, vector<1x253x1xf32>
    %23 = vector.shape_cast %22 : vector<1x253x1xf32> to vector<253x1xf32>
    %c3 = arith.constant 3 : index
    %c0_15 = arith.constant 0 : index
    %24 = vector.load %arg2[%c3, %c0_15] : memref<8x32xf32, #tpu.memory_space<vmem>>, vector<1x32xf32>
    %25 = vector.broadcast %23 : vector<253x1xf32> to vector<253x32xf32>
    %26 = vector.broadcast %24 : vector<1x32xf32> to vector<253x32xf32>
    %27 = arith.mulf %25, %26 : vector<253x32xf32>
    %28 = arith.addf %21, %27 : vector<253x32xf32>
    %c0_16 = arith.constant 0 : index
    %c2_17 = arith.constant 2 : index
    %c0_18 = arith.constant 0 : index
    %29 = vector.load %arg1[%c0_16, %c2_17, %c0_18] : memref<1x256x4xf32, #tpu.memory_space<vmem>>, vector<1x253x1xf32>
    %30 = vector.shape_cast %29 : vector<1x253x1xf32> to vector<253x1xf32>
    %c4 = arith.constant 4 : index
    %c0_19 = arith.constant 0 : index
    %31 = vector.load %arg2[%c4, %c0_19] : memref<8x32xf32, #tpu.memory_space<vmem>>, vector<1x32xf32>
    %32 = vector.broadcast %30 : vector<253x1xf32> to vector<253x32xf32>
    %33 = vector.broadcast %31 : vector<1x32xf32> to vector<253x32xf32>
    %34 = arith.mulf %32, %33 : vector<253x32xf32>
    %35 = arith.addf %28, %34 : vector<253x32xf32>
    %c0_20 = arith.constant 0 : index
    %c2_21 = arith.constant 2 : index
    %c2_22 = arith.constant 2 : index
    %36 = vector.load %arg1[%c0_20, %c2_21, %c2_22] : memref<1x256x4xf32, #tpu.memory_space<vmem>>, vector<1x253x1xf32>
    %37 = vector.shape_cast %36 : vector<1x253x1xf32> to vector<253x1xf32>
    %c5 = arith.constant 5 : index
    %c0_23 = arith.constant 0 : index
    %38 = vector.load %arg2[%c5, %c0_23] : memref<8x32xf32, #tpu.memory_space<vmem>>, vector<1x32xf32>
    %39 = vector.broadcast %37 : vector<253x1xf32> to vector<253x32xf32>
    %40 = vector.broadcast %38 : vector<1x32xf32> to vector<253x32xf32>
    %41 = arith.mulf %39, %40 : vector<253x32xf32>
    %42 = arith.addf %35, %41 : vector<253x32xf32>
    %c0_24 = arith.constant 0 : index
    %c3_25 = arith.constant 3 : index
    %c0_26 = arith.constant 0 : index
    %43 = vector.load %arg1[%c0_24, %c3_25, %c0_26] : memref<1x256x4xf32, #tpu.memory_space<vmem>>, vector<1x253x1xf32>
    %44 = vector.shape_cast %43 : vector<1x253x1xf32> to vector<253x1xf32>
    %c6 = arith.constant 6 : index
    %c0_27 = arith.constant 0 : index
    %45 = vector.load %arg2[%c6, %c0_27] : memref<8x32xf32, #tpu.memory_space<vmem>>, vector<1x32xf32>
    %46 = vector.broadcast %44 : vector<253x1xf32> to vector<253x32xf32>
    %47 = vector.broadcast %45 : vector<1x32xf32> to vector<253x32xf32>
    %48 = arith.mulf %46, %47 : vector<253x32xf32>
    %49 = arith.addf %42, %48 : vector<253x32xf32>
    %c0_28 = arith.constant 0 : index
    %c3_29 = arith.constant 3 : index
    %c2_30 = arith.constant 2 : index
    %50 = vector.load %arg1[%c0_28, %c3_29, %c2_30] : memref<1x256x4xf32, #tpu.memory_space<vmem>>, vector<1x253x1xf32>
    %51 = vector.shape_cast %50 : vector<1x253x1xf32> to vector<253x1xf32>
    %c7 = arith.constant 7 : index
    %c0_31 = arith.constant 0 : index
    %52 = vector.load %arg2[%c7, %c0_31] : memref<8x32xf32, #tpu.memory_space<vmem>>, vector<1x32xf32>
    %53 = vector.broadcast %51 : vector<253x1xf32> to vector<253x32xf32>
    %54 = vector.broadcast %52 : vector<1x32xf32> to vector<253x32xf32>
    %55 = arith.mulf %53, %54 : vector<253x32xf32>
    %56 = arith.addf %49, %55 : vector<253x32xf32>
    %c0_32 = arith.constant 0 : index
    %c0_33 = arith.constant 0 : index
    %57 = vector.load %arg3[%c0_32, %c0_33] : memref<1x32xf32, #tpu.memory_space<vmem>>, vector<1x32xf32>
    %58 = vector.broadcast %57 : vector<1x32xf32> to vector<253x32xf32>
    %59 = arith.addf %56, %58 : vector<253x32xf32>
    %cst_34 = arith.constant 0.000000e+00 : f32
    %60 = vector.broadcast %cst_34 : f32 to vector<253x32xf32>
    %61 = arith.maximumf %59, %60 : vector<253x32xf32>
    %cst_35 = arith.constant 0.000000e+00 : f32
    %62 = vector.broadcast %cst_35 : f32 to vector<60x32xf32>
    %c0_36 = arith.constant 0 : index
    %c0_37 = arith.constant 0 : index
    %c0_38 = arith.constant 0 : index
    %63 = vector.load %arg4[%c0_36, %c0_37, %c0_38] : memref<8x60x253xf32, #tpu.memory_space<vmem>>, vector<1x60x253xf32>
    %64 = vector.shape_cast %63 : vector<1x60x253xf32> to vector<60x253xf32>
    %cst_39 = arith.constant dense<0.000000e+00> : vector<60x32xf32>
    %65 = tpu.matmul %64, %61, %cst_39 {dimension_numbers = #tpu.dot_dimension_numbers<[1], [0], [0], [1], [0, 0, 1, 1], [], []>} : vector<60x253xf32>, vector<253x32xf32>, vector<60x32xf32> -> vector<60x32xf32>
    %c0_40 = arith.constant 0 : index
    %c0_41 = arith.constant 0 : index
    %c0_42 = arith.constant 0 : index
    %66 = vector.load %arg5[%c0_40, %c0_41, %c0_42] : memref<8x32x32xf32, #tpu.memory_space<vmem>>, vector<1x32x32xf32>
    %67 = vector.shape_cast %66 : vector<1x32x32xf32> to vector<32x32xf32>
    %cst_43 = arith.constant dense<0.000000e+00> : vector<60x32xf32>
    %68 = tpu.matmul %65, %67, %cst_43 {dimension_numbers = #tpu.dot_dimension_numbers<[1], [0], [0], [1], [0, 0, 1, 1], [], []>} : vector<60x32xf32>, vector<32x32xf32>, vector<60x32xf32> -> vector<60x32xf32>
    %69 = arith.addf %62, %68 : vector<60x32xf32>
    %c1_44 = arith.constant 1 : index
    %c0_45 = arith.constant 0 : index
    %c0_46 = arith.constant 0 : index
    %70 = vector.load %arg4[%c1_44, %c0_45, %c0_46] : memref<8x60x253xf32, #tpu.memory_space<vmem>>, vector<1x60x253xf32>
    %71 = vector.shape_cast %70 : vector<1x60x253xf32> to vector<60x253xf32>
    %cst_47 = arith.constant dense<0.000000e+00> : vector<60x32xf32>
    %72 = tpu.matmul %71, %61, %cst_47 {dimension_numbers = #tpu.dot_dimension_numbers<[1], [0], [0], [1], [0, 0, 1, 1], [], []>} : vector<60x253xf32>, vector<253x32xf32>, vector<60x32xf32> -> vector<60x32xf32>
    %c1_48 = arith.constant 1 : index
    %c0_49 = arith.constant 0 : index
    %c0_50 = arith.constant 0 : index
    %73 = vector.load %arg5[%c1_48, %c0_49, %c0_50] : memref<8x32x32xf32, #tpu.memory_space<vmem>>, vector<1x32x32xf32>
    %74 = vector.shape_cast %73 : vector<1x32x32xf32> to vector<32x32xf32>
    %cst_51 = arith.constant dense<0.000000e+00> : vector<60x32xf32>
    %75 = tpu.matmul %72, %74, %cst_51 {dimension_numbers = #tpu.dot_dimension_numbers<[1], [0], [0], [1], [0, 0, 1, 1], [], []>} : vector<60x32xf32>, vector<32x32xf32>, vector<60x32xf32> -> vector<60x32xf32>
    %76 = arith.addf %69, %75 : vector<60x32xf32>
    %c2_52 = arith.constant 2 : index
    %c0_53 = arith.constant 0 : index
    %c0_54 = arith.constant 0 : index
    %77 = vector.load %arg4[%c2_52, %c0_53, %c0_54] : memref<8x60x253xf32, #tpu.memory_space<vmem>>, vector<1x60x253xf32>
    %78 = vector.shape_cast %77 : vector<1x60x253xf32> to vector<60x253xf32>
    %cst_55 = arith.constant dense<0.000000e+00> : vector<60x32xf32>
    %79 = tpu.matmul %78, %61, %cst_55 {dimension_numbers = #tpu.dot_dimension_numbers<[1], [0], [0], [1], [0, 0, 1, 1], [], []>} : vector<60x253xf32>, vector<253x32xf32>, vector<60x32xf32> -> vector<60x32xf32>
    %c2_56 = arith.constant 2 : index
    %c0_57 = arith.constant 0 : index
    %c0_58 = arith.constant 0 : index
    %80 = vector.load %arg5[%c2_56, %c0_57, %c0_58] : memref<8x32x32xf32, #tpu.memory_space<vmem>>, vector<1x32x32xf32>
    %81 = vector.shape_cast %80 : vector<1x32x32xf32> to vector<32x32xf32>
    %cst_59 = arith.constant dense<0.000000e+00> : vector<60x32xf32>
    %82 = tpu.matmul %79, %81, %cst_59 {dimension_numbers = #tpu.dot_dimension_numbers<[1], [0], [0], [1], [0, 0, 1, 1], [], []>} : vector<60x32xf32>, vector<32x32xf32>, vector<60x32xf32> -> vector<60x32xf32>
    %83 = arith.addf %76, %82 : vector<60x32xf32>
    %c3_60 = arith.constant 3 : index
    %c0_61 = arith.constant 0 : index
    %c0_62 = arith.constant 0 : index
    %84 = vector.load %arg4[%c3_60, %c0_61, %c0_62] : memref<8x60x253xf32, #tpu.memory_space<vmem>>, vector<1x60x253xf32>
    %85 = vector.shape_cast %84 : vector<1x60x253xf32> to vector<60x253xf32>
    %cst_63 = arith.constant dense<0.000000e+00> : vector<60x32xf32>
    %86 = tpu.matmul %85, %61, %cst_63 {dimension_numbers = #tpu.dot_dimension_numbers<[1], [0], [0], [1], [0, 0, 1, 1], [], []>} : vector<60x253xf32>, vector<253x32xf32>, vector<60x32xf32> -> vector<60x32xf32>
    %c3_64 = arith.constant 3 : index
    %c0_65 = arith.constant 0 : index
    %c0_66 = arith.constant 0 : index
    %87 = vector.load %arg5[%c3_64, %c0_65, %c0_66] : memref<8x32x32xf32, #tpu.memory_space<vmem>>, vector<1x32x32xf32>
    %88 = vector.shape_cast %87 : vector<1x32x32xf32> to vector<32x32xf32>
    %cst_67 = arith.constant dense<0.000000e+00> : vector<60x32xf32>
    %89 = tpu.matmul %86, %88, %cst_67 {dimension_numbers = #tpu.dot_dimension_numbers<[1], [0], [0], [1], [0, 0, 1, 1], [], []>} : vector<60x32xf32>, vector<32x32xf32>, vector<60x32xf32> -> vector<60x32xf32>
    %90 = arith.addf %83, %89 : vector<60x32xf32>
    %c4_68 = arith.constant 4 : index
    %c0_69 = arith.constant 0 : index
    %c0_70 = arith.constant 0 : index
    %91 = vector.load %arg4[%c4_68, %c0_69, %c0_70] : memref<8x60x253xf32, #tpu.memory_space<vmem>>, vector<1x60x253xf32>
    %92 = vector.shape_cast %91 : vector<1x60x253xf32> to vector<60x253xf32>
    %cst_71 = arith.constant dense<0.000000e+00> : vector<60x32xf32>
    %93 = tpu.matmul %92, %61, %cst_71 {dimension_numbers = #tpu.dot_dimension_numbers<[1], [0], [0], [1], [0, 0, 1, 1], [], []>} : vector<60x253xf32>, vector<253x32xf32>, vector<60x32xf32> -> vector<60x32xf32>
    %c4_72 = arith.constant 4 : index
    %c0_73 = arith.constant 0 : index
    %c0_74 = arith.constant 0 : index
    %94 = vector.load %arg5[%c4_72, %c0_73, %c0_74] : memref<8x32x32xf32, #tpu.memory_space<vmem>>, vector<1x32x32xf32>
    %95 = vector.shape_cast %94 : vector<1x32x32xf32> to vector<32x32xf32>
    %cst_75 = arith.constant dense<0.000000e+00> : vector<60x32xf32>
    %96 = tpu.matmul %93, %95, %cst_75 {dimension_numbers = #tpu.dot_dimension_numbers<[1], [0], [0], [1], [0, 0, 1, 1], [], []>} : vector<60x32xf32>, vector<32x32xf32>, vector<60x32xf32> -> vector<60x32xf32>
    %97 = arith.addf %90, %96 : vector<60x32xf32>
    %c5_76 = arith.constant 5 : index
    %c0_77 = arith.constant 0 : index
    %c0_78 = arith.constant 0 : index
    %98 = vector.load %arg4[%c5_76, %c0_77, %c0_78] : memref<8x60x253xf32, #tpu.memory_space<vmem>>, vector<1x60x253xf32>
    %99 = vector.shape_cast %98 : vector<1x60x253xf32> to vector<60x253xf32>
    %cst_79 = arith.constant dense<0.000000e+00> : vector<60x32xf32>
    %100 = tpu.matmul %99, %61, %cst_79 {dimension_numbers = #tpu.dot_dimension_numbers<[1], [0], [0], [1], [0, 0, 1, 1], [], []>} : vector<60x253xf32>, vector<253x32xf32>, vector<60x32xf32> -> vector<60x32xf32>
    %c5_80 = arith.constant 5 : index
    %c0_81 = arith.constant 0 : index
    %c0_82 = arith.constant 0 : index
    %101 = vector.load %arg5[%c5_80, %c0_81, %c0_82] : memref<8x32x32xf32, #tpu.memory_space<vmem>>, vector<1x32x32xf32>
    %102 = vector.shape_cast %101 : vector<1x32x32xf32> to vector<32x32xf32>
    %cst_83 = arith.constant dense<0.000000e+00> : vector<60x32xf32>
    %103 = tpu.matmul %100, %102, %cst_83 {dimension_numbers = #tpu.dot_dimension_numbers<[1], [0], [0], [1], [0, 0, 1, 1], [], []>} : vector<60x32xf32>, vector<32x32xf32>, vector<60x32xf32> -> vector<60x32xf32>
    %104 = arith.addf %97, %103 : vector<60x32xf32>
    %c6_84 = arith.constant 6 : index
    %c0_85 = arith.constant 0 : index
    %c0_86 = arith.constant 0 : index
    %105 = vector.load %arg4[%c6_84, %c0_85, %c0_86] : memref<8x60x253xf32, #tpu.memory_space<vmem>>, vector<1x60x253xf32>
    %106 = vector.shape_cast %105 : vector<1x60x253xf32> to vector<60x253xf32>
    %cst_87 = arith.constant dense<0.000000e+00> : vector<60x32xf32>
    %107 = tpu.matmul %106, %61, %cst_87 {dimension_numbers = #tpu.dot_dimension_numbers<[1], [0], [0], [1], [0, 0, 1, 1], [], []>} : vector<60x253xf32>, vector<253x32xf32>, vector<60x32xf32> -> vector<60x32xf32>
    %c6_88 = arith.constant 6 : index
    %c0_89 = arith.constant 0 : index
    %c0_90 = arith.constant 0 : index
    %108 = vector.load %arg5[%c6_88, %c0_89, %c0_90] : memref<8x32x32xf32, #tpu.memory_space<vmem>>, vector<1x32x32xf32>
    %109 = vector.shape_cast %108 : vector<1x32x32xf32> to vector<32x32xf32>
    %cst_91 = arith.constant dense<0.000000e+00> : vector<60x32xf32>
    %110 = tpu.matmul %107, %109, %cst_91 {dimension_numbers = #tpu.dot_dimension_numbers<[1], [0], [0], [1], [0, 0, 1, 1], [], []>} : vector<60x32xf32>, vector<32x32xf32>, vector<60x32xf32> -> vector<60x32xf32>
    %111 = arith.addf %104, %110 : vector<60x32xf32>
    %c7_92 = arith.constant 7 : index
    %c0_93 = arith.constant 0 : index
    %c0_94 = arith.constant 0 : index
    %112 = vector.load %arg4[%c7_92, %c0_93, %c0_94] : memref<8x60x253xf32, #tpu.memory_space<vmem>>, vector<1x60x253xf32>
    %113 = vector.shape_cast %112 : vector<1x60x253xf32> to vector<60x253xf32>
    %cst_95 = arith.constant dense<0.000000e+00> : vector<60x32xf32>
    %114 = tpu.matmul %113, %61, %cst_95 {dimension_numbers = #tpu.dot_dimension_numbers<[1], [0], [0], [1], [0, 0, 1, 1], [], []>} : vector<60x253xf32>, vector<253x32xf32>, vector<60x32xf32> -> vector<60x32xf32>
    %c7_96 = arith.constant 7 : index
    %c0_97 = arith.constant 0 : index
    %c0_98 = arith.constant 0 : index
    %115 = vector.load %arg5[%c7_96, %c0_97, %c0_98] : memref<8x32x32xf32, #tpu.memory_space<vmem>>, vector<1x32x32xf32>
    %116 = vector.shape_cast %115 : vector<1x32x32xf32> to vector<32x32xf32>
    %cst_99 = arith.constant dense<0.000000e+00> : vector<60x32xf32>
    %117 = tpu.matmul %114, %116, %cst_99 {dimension_numbers = #tpu.dot_dimension_numbers<[1], [0], [0], [1], [0, 0, 1, 1], [], []>} : vector<60x32xf32>, vector<32x32xf32>, vector<60x32xf32> -> vector<60x32xf32>
    %118 = arith.addf %111, %117 : vector<60x32xf32>
    %c0_100 = arith.constant 0 : index
    %c0_101 = arith.constant 0 : index
    %119 = vector.load %arg6[%c0_100, %c0_101] : memref<1x32xf32, #tpu.memory_space<vmem>>, vector<1x32xf32>
    %120 = vector.broadcast %119 : vector<1x32xf32> to vector<60x32xf32>
    %121 = arith.addf %118, %120 : vector<60x32xf32>
    %cst_102 = arith.constant 0.000000e+00 : f32
    %122 = vector.broadcast %cst_102 : f32 to vector<60x32xf32>
    %123 = arith.maximumf %121, %122 : vector<60x32xf32>
    %cst_103 = arith.constant 0.000000e+00 : f32
    %124 = vector.broadcast %cst_103 : f32 to vector<14x32xf32>
    %c0_104 = arith.constant 0 : index
    %c0_105 = arith.constant 0 : index
    %c0_106 = arith.constant 0 : index
    %125 = vector.load %arg7[%c0_104, %c0_105, %c0_106] : memref<8x14x60xf32, #tpu.memory_space<vmem>>, vector<1x14x60xf32>
    %126 = vector.shape_cast %125 : vector<1x14x60xf32> to vector<14x60xf32>
    %cst_107 = arith.constant dense<0.000000e+00> : vector<14x32xf32>
    %127 = tpu.matmul %126, %123, %cst_107 {dimension_numbers = #tpu.dot_dimension_numbers<[1], [0], [0], [1], [0, 0, 1, 1], [], []>} : vector<14x60xf32>, vector<60x32xf32>, vector<14x32xf32> -> vector<14x32xf32>
    %c0_108 = arith.constant 0 : index
    %c0_109 = arith.constant 0 : index
    %c0_110 = arith.constant 0 : index
    %128 = vector.load %arg8[%c0_108, %c0_109, %c0_110] : memref<8x32x32xf32, #tpu.memory_space<vmem>>, vector<1x32x32xf32>
    %129 = vector.shape_cast %128 : vector<1x32x32xf32> to vector<32x32xf32>
    %cst_111 = arith.constant dense<0.000000e+00> : vector<14x32xf32>
    %130 = tpu.matmul %127, %129, %cst_111 {dimension_numbers = #tpu.dot_dimension_numbers<[1], [0], [0], [1], [0, 0, 1, 1], [], []>} : vector<14x32xf32>, vector<32x32xf32>, vector<14x32xf32> -> vector<14x32xf32>
    %131 = arith.addf %124, %130 : vector<14x32xf32>
    %c1_112 = arith.constant 1 : index
    %c0_113 = arith.constant 0 : index
    %c0_114 = arith.constant 0 : index
    %132 = vector.load %arg7[%c1_112, %c0_113, %c0_114] : memref<8x14x60xf32, #tpu.memory_space<vmem>>, vector<1x14x60xf32>
    %133 = vector.shape_cast %132 : vector<1x14x60xf32> to vector<14x60xf32>
    %cst_115 = arith.constant dense<0.000000e+00> : vector<14x32xf32>
    %134 = tpu.matmul %133, %123, %cst_115 {dimension_numbers = #tpu.dot_dimension_numbers<[1], [0], [0], [1], [0, 0, 1, 1], [], []>} : vector<14x60xf32>, vector<60x32xf32>, vector<14x32xf32> -> vector<14x32xf32>
    %c1_116 = arith.constant 1 : index
    %c0_117 = arith.constant 0 : index
    %c0_118 = arith.constant 0 : index
    %135 = vector.load %arg8[%c1_116, %c0_117, %c0_118] : memref<8x32x32xf32, #tpu.memory_space<vmem>>, vector<1x32x32xf32>
    %136 = vector.shape_cast %135 : vector<1x32x32xf32> to vector<32x32xf32>
    %cst_119 = arith.constant dense<0.000000e+00> : vector<14x32xf32>
    %137 = tpu.matmul %134, %136, %cst_119 {dimension_numbers = #tpu.dot_dimension_numbers<[1], [0], [0], [1], [0, 0, 1, 1], [], []>} : vector<14x32xf32>, vector<32x32xf32>, vector<14x32xf32> -> vector<14x32xf32>
    %138 = arith.addf %131, %137 : vector<14x32xf32>
    %c2_120 = arith.constant 2 : index
    %c0_121 = arith.constant 0 : index
    %c0_122 = arith.constant 0 : index
    %139 = vector.load %arg7[%c2_120, %c0_121, %c0_122] : memref<8x14x60xf32, #tpu.memory_space<vmem>>, vector<1x14x60xf32>
    %140 = vector.shape_cast %139 : vector<1x14x60xf32> to vector<14x60xf32>
    %cst_123 = arith.constant dense<0.000000e+00> : vector<14x32xf32>
    %141 = tpu.matmul %140, %123, %cst_123 {dimension_numbers = #tpu.dot_dimension_numbers<[1], [0], [0], [1], [0, 0, 1, 1], [], []>} : vector<14x60xf32>, vector<60x32xf32>, vector<14x32xf32> -> vector<14x32xf32>
    %c2_124 = arith.constant 2 : index
    %c0_125 = arith.constant 0 : index
    %c0_126 = arith.constant 0 : index
    %142 = vector.load %arg8[%c2_124, %c0_125, %c0_126] : memref<8x32x32xf32, #tpu.memory_space<vmem>>, vector<1x32x32xf32>
    %143 = vector.shape_cast %142 : vector<1x32x32xf32> to vector<32x32xf32>
    %cst_127 = arith.constant dense<0.000000e+00> : vector<14x32xf32>
    %144 = tpu.matmul %141, %143, %cst_127 {dimension_numbers = #tpu.dot_dimension_numbers<[1], [0], [0], [1], [0, 0, 1, 1], [], []>} : vector<14x32xf32>, vector<32x32xf32>, vector<14x32xf32> -> vector<14x32xf32>
    %145 = arith.addf %138, %144 : vector<14x32xf32>
    %c3_128 = arith.constant 3 : index
    %c0_129 = arith.constant 0 : index
    %c0_130 = arith.constant 0 : index
    %146 = vector.load %arg7[%c3_128, %c0_129, %c0_130] : memref<8x14x60xf32, #tpu.memory_space<vmem>>, vector<1x14x60xf32>
    %147 = vector.shape_cast %146 : vector<1x14x60xf32> to vector<14x60xf32>
    %cst_131 = arith.constant dense<0.000000e+00> : vector<14x32xf32>
    %148 = tpu.matmul %147, %123, %cst_131 {dimension_numbers = #tpu.dot_dimension_numbers<[1], [0], [0], [1], [0, 0, 1, 1], [], []>} : vector<14x60xf32>, vector<60x32xf32>, vector<14x32xf32> -> vector<14x32xf32>
    %c3_132 = arith.constant 3 : index
    %c0_133 = arith.constant 0 : index
    %c0_134 = arith.constant 0 : index
    %149 = vector.load %arg8[%c3_132, %c0_133, %c0_134] : memref<8x32x32xf32, #tpu.memory_space<vmem>>, vector<1x32x32xf32>
    %150 = vector.shape_cast %149 : vector<1x32x32xf32> to vector<32x32xf32>
    %cst_135 = arith.constant dense<0.000000e+00> : vector<14x32xf32>
    %151 = tpu.matmul %148, %150, %cst_135 {dimension_numbers = #tpu.dot_dimension_numbers<[1], [0], [0], [1], [0, 0, 1, 1], [], []>} : vector<14x32xf32>, vector<32x32xf32>, vector<14x32xf32> -> vector<14x32xf32>
    %152 = arith.addf %145, %151 : vector<14x32xf32>
    %c4_136 = arith.constant 4 : index
    %c0_137 = arith.constant 0 : index
    %c0_138 = arith.constant 0 : index
    %153 = vector.load %arg7[%c4_136, %c0_137, %c0_138] : memref<8x14x60xf32, #tpu.memory_space<vmem>>, vector<1x14x60xf32>
    %154 = vector.shape_cast %153 : vector<1x14x60xf32> to vector<14x60xf32>
    %cst_139 = arith.constant dense<0.000000e+00> : vector<14x32xf32>
    %155 = tpu.matmul %154, %123, %cst_139 {dimension_numbers = #tpu.dot_dimension_numbers<[1], [0], [0], [1], [0, 0, 1, 1], [], []>} : vector<14x60xf32>, vector<60x32xf32>, vector<14x32xf32> -> vector<14x32xf32>
    %c4_140 = arith.constant 4 : index
    %c0_141 = arith.constant 0 : index
    %c0_142 = arith.constant 0 : index
    %156 = vector.load %arg8[%c4_140, %c0_141, %c0_142] : memref<8x32x32xf32, #tpu.memory_space<vmem>>, vector<1x32x32xf32>
    %157 = vector.shape_cast %156 : vector<1x32x32xf32> to vector<32x32xf32>
    %cst_143 = arith.constant dense<0.000000e+00> : vector<14x32xf32>
    %158 = tpu.matmul %155, %157, %cst_143 {dimension_numbers = #tpu.dot_dimension_numbers<[1], [0], [0], [1], [0, 0, 1, 1], [], []>} : vector<14x32xf32>, vector<32x32xf32>, vector<14x32xf32> -> vector<14x32xf32>
    %159 = arith.addf %152, %158 : vector<14x32xf32>
    %c5_144 = arith.constant 5 : index
    %c0_145 = arith.constant 0 : index
    %c0_146 = arith.constant 0 : index
    %160 = vector.load %arg7[%c5_144, %c0_145, %c0_146] : memref<8x14x60xf32, #tpu.memory_space<vmem>>, vector<1x14x60xf32>
    %161 = vector.shape_cast %160 : vector<1x14x60xf32> to vector<14x60xf32>
    %cst_147 = arith.constant dense<0.000000e+00> : vector<14x32xf32>
    %162 = tpu.matmul %161, %123, %cst_147 {dimension_numbers = #tpu.dot_dimension_numbers<[1], [0], [0], [1], [0, 0, 1, 1], [], []>} : vector<14x60xf32>, vector<60x32xf32>, vector<14x32xf32> -> vector<14x32xf32>
    %c5_148 = arith.constant 5 : index
    %c0_149 = arith.constant 0 : index
    %c0_150 = arith.constant 0 : index
    %163 = vector.load %arg8[%c5_148, %c0_149, %c0_150] : memref<8x32x32xf32, #tpu.memory_space<vmem>>, vector<1x32x32xf32>
    %164 = vector.shape_cast %163 : vector<1x32x32xf32> to vector<32x32xf32>
    %cst_151 = arith.constant dense<0.000000e+00> : vector<14x32xf32>
    %165 = tpu.matmul %162, %164, %cst_151 {dimension_numbers = #tpu.dot_dimension_numbers<[1], [0], [0], [1], [0, 0, 1, 1], [], []>} : vector<14x32xf32>, vector<32x32xf32>, vector<14x32xf32> -> vector<14x32xf32>
    %166 = arith.addf %159, %165 : vector<14x32xf32>
    %c6_152 = arith.constant 6 : index
    %c0_153 = arith.constant 0 : index
    %c0_154 = arith.constant 0 : index
    %167 = vector.load %arg7[%c6_152, %c0_153, %c0_154] : memref<8x14x60xf32, #tpu.memory_space<vmem>>, vector<1x14x60xf32>
    %168 = vector.shape_cast %167 : vector<1x14x60xf32> to vector<14x60xf32>
    %cst_155 = arith.constant dense<0.000000e+00> : vector<14x32xf32>
    %169 = tpu.matmul %168, %123, %cst_155 {dimension_numbers = #tpu.dot_dimension_numbers<[1], [0], [0], [1], [0, 0, 1, 1], [], []>} : vector<14x60xf32>, vector<60x32xf32>, vector<14x32xf32> -> vector<14x32xf32>
    %c6_156 = arith.constant 6 : index
    %c0_157 = arith.constant 0 : index
    %c0_158 = arith.constant 0 : index
    %170 = vector.load %arg8[%c6_156, %c0_157, %c0_158] : memref<8x32x32xf32, #tpu.memory_space<vmem>>, vector<1x32x32xf32>
    %171 = vector.shape_cast %170 : vector<1x32x32xf32> to vector<32x32xf32>
    %cst_159 = arith.constant dense<0.000000e+00> : vector<14x32xf32>
    %172 = tpu.matmul %169, %171, %cst_159 {dimension_numbers = #tpu.dot_dimension_numbers<[1], [0], [0], [1], [0, 0, 1, 1], [], []>} : vector<14x32xf32>, vector<32x32xf32>, vector<14x32xf32> -> vector<14x32xf32>
    %173 = arith.addf %166, %172 : vector<14x32xf32>
    %c7_160 = arith.constant 7 : index
    %c0_161 = arith.constant 0 : index
    %c0_162 = arith.constant 0 : index
    %174 = vector.load %arg7[%c7_160, %c0_161, %c0_162] : memref<8x14x60xf32, #tpu.memory_space<vmem>>, vector<1x14x60xf32>
    %175 = vector.shape_cast %174 : vector<1x14x60xf32> to vector<14x60xf32>
    %cst_163 = arith.constant dense<0.000000e+00> : vector<14x32xf32>
    %176 = tpu.matmul %175, %123, %cst_163 {dimension_numbers = #tpu.dot_dimension_numbers<[1], [0], [0], [1], [0, 0, 1, 1], [], []>} : vector<14x60xf32>, vector<60x32xf32>, vector<14x32xf32> -> vector<14x32xf32>
    %c7_164 = arith.constant 7 : index
    %c0_165 = arith.constant 0 : index
    %c0_166 = arith.constant 0 : index
    %177 = vector.load %arg8[%c7_164, %c0_165, %c0_166] : memref<8x32x32xf32, #tpu.memory_space<vmem>>, vector<1x32x32xf32>
    %178 = vector.shape_cast %177 : vector<1x32x32xf32> to vector<32x32xf32>
    %cst_167 = arith.constant dense<0.000000e+00> : vector<14x32xf32>
    %179 = tpu.matmul %176, %178, %cst_167 {dimension_numbers = #tpu.dot_dimension_numbers<[1], [0], [0], [1], [0, 0, 1, 1], [], []>} : vector<14x32xf32>, vector<32x32xf32>, vector<14x32xf32> -> vector<14x32xf32>
    %180 = arith.addf %173, %179 : vector<14x32xf32>
    %c0_168 = arith.constant 0 : index
    %c0_169 = arith.constant 0 : index
    %181 = vector.load %arg9[%c0_168, %c0_169] : memref<1x32xf32, #tpu.memory_space<vmem>>, vector<1x32xf32>
    %182 = vector.broadcast %181 : vector<1x32xf32> to vector<14x32xf32>
    %183 = arith.addf %180, %182 : vector<14x32xf32>
    %cst_170 = arith.constant 0.000000e+00 : f32
    %184 = vector.broadcast %cst_170 : f32 to vector<14x32xf32>
    %185 = arith.maximumf %183, %184 : vector<14x32xf32>
    %cst_171 = arith.constant 0.000000e+00 : f32
    %186 = vector.broadcast %cst_171 : f32 to vector<2x32xf32>
    %c0_172 = arith.constant 0 : index
    %c0_173 = arith.constant 0 : index
    %c0_174 = arith.constant 0 : index
    %187 = vector.load %arg10[%c0_172, %c0_173, %c0_174] : memref<8x2x14xf32, #tpu.memory_space<vmem>>, vector<1x2x14xf32>
    %188 = vector.shape_cast %187 : vector<1x2x14xf32> to vector<2x14xf32>
    %cst_175 = arith.constant dense<0.000000e+00> : vector<2x32xf32>
    %189 = tpu.matmul %188, %185, %cst_175 {dimension_numbers = #tpu.dot_dimension_numbers<[1], [0], [0], [1], [0, 0, 1, 1], [], []>} : vector<2x14xf32>, vector<14x32xf32>, vector<2x32xf32> -> vector<2x32xf32>
    %c0_176 = arith.constant 0 : index
    %c0_177 = arith.constant 0 : index
    %c0_178 = arith.constant 0 : index
    %190 = vector.load %arg11[%c0_176, %c0_177, %c0_178] : memref<8x32x32xf32, #tpu.memory_space<vmem>>, vector<1x32x32xf32>
    %191 = vector.shape_cast %190 : vector<1x32x32xf32> to vector<32x32xf32>
    %cst_179 = arith.constant dense<0.000000e+00> : vector<2x32xf32>
    %192 = tpu.matmul %189, %191, %cst_179 {dimension_numbers = #tpu.dot_dimension_numbers<[1], [0], [0], [1], [0, 0, 1, 1], [], []>} : vector<2x32xf32>, vector<32x32xf32>, vector<2x32xf32> -> vector<2x32xf32>
    %193 = arith.addf %186, %192 : vector<2x32xf32>
    %c1_180 = arith.constant 1 : index
    %c0_181 = arith.constant 0 : index
    %c0_182 = arith.constant 0 : index
    %194 = vector.load %arg10[%c1_180, %c0_181, %c0_182] : memref<8x2x14xf32, #tpu.memory_space<vmem>>, vector<1x2x14xf32>
    %195 = vector.shape_cast %194 : vector<1x2x14xf32> to vector<2x14xf32>
    %cst_183 = arith.constant dense<0.000000e+00> : vector<2x32xf32>
    %196 = tpu.matmul %195, %185, %cst_183 {dimension_numbers = #tpu.dot_dimension_numbers<[1], [0], [0], [1], [0, 0, 1, 1], [], []>} : vector<2x14xf32>, vector<14x32xf32>, vector<2x32xf32> -> vector<2x32xf32>
    %c1_184 = arith.constant 1 : index
    %c0_185 = arith.constant 0 : index
    %c0_186 = arith.constant 0 : index
    %197 = vector.load %arg11[%c1_184, %c0_185, %c0_186] : memref<8x32x32xf32, #tpu.memory_space<vmem>>, vector<1x32x32xf32>
    %198 = vector.shape_cast %197 : vector<1x32x32xf32> to vector<32x32xf32>
    %cst_187 = arith.constant dense<0.000000e+00> : vector<2x32xf32>
    %199 = tpu.matmul %196, %198, %cst_187 {dimension_numbers = #tpu.dot_dimension_numbers<[1], [0], [0], [1], [0, 0, 1, 1], [], []>} : vector<2x32xf32>, vector<32x32xf32>, vector<2x32xf32> -> vector<2x32xf32>
    %200 = arith.addf %193, %199 : vector<2x32xf32>
    %c2_188 = arith.constant 2 : index
    %c0_189 = arith.constant 0 : index
    %c0_190 = arith.constant 0 : index
    %201 = vector.load %arg10[%c2_188, %c0_189, %c0_190] : memref<8x2x14xf32, #tpu.memory_space<vmem>>, vector<1x2x14xf32>
    %202 = vector.shape_cast %201 : vector<1x2x14xf32> to vector<2x14xf32>
    %cst_191 = arith.constant dense<0.000000e+00> : vector<2x32xf32>
    %203 = tpu.matmul %202, %185, %cst_191 {dimension_numbers = #tpu.dot_dimension_numbers<[1], [0], [0], [1], [0, 0, 1, 1], [], []>} : vector<2x14xf32>, vector<14x32xf32>, vector<2x32xf32> -> vector<2x32xf32>
    %c2_192 = arith.constant 2 : index
    %c0_193 = arith.constant 0 : index
    %c0_194 = arith.constant 0 : index
    %204 = vector.load %arg11[%c2_192, %c0_193, %c0_194] : memref<8x32x32xf32, #tpu.memory_space<vmem>>, vector<1x32x32xf32>
    %205 = vector.shape_cast %204 : vector<1x32x32xf32> to vector<32x32xf32>
    %cst_195 = arith.constant dense<0.000000e+00> : vector<2x32xf32>
    %206 = tpu.matmul %203, %205, %cst_195 {dimension_numbers = #tpu.dot_dimension_numbers<[1], [0], [0], [1], [0, 0, 1, 1], [], []>} : vector<2x32xf32>, vector<32x32xf32>, vector<2x32xf32> -> vector<2x32xf32>
    %207 = arith.addf %200, %206 : vector<2x32xf32>
    %c3_196 = arith.constant 3 : index
    %c0_197 = arith.constant 0 : index
    %c0_198 = arith.constant 0 : index
    %208 = vector.load %arg10[%c3_196, %c0_197, %c0_198] : memref<8x2x14xf32, #tpu.memory_space<vmem>>, vector<1x2x14xf32>
    %209 = vector.shape_cast %208 : vector<1x2x14xf32> to vector<2x14xf32>
    %cst_199 = arith.constant dense<0.000000e+00> : vector<2x32xf32>
    %210 = tpu.matmul %209, %185, %cst_199 {dimension_numbers = #tpu.dot_dimension_numbers<[1], [0], [0], [1], [0, 0, 1, 1], [], []>} : vector<2x14xf32>, vector<14x32xf32>, vector<2x32xf32> -> vector<2x32xf32>
    %c3_200 = arith.constant 3 : index
    %c0_201 = arith.constant 0 : index
    %c0_202 = arith.constant 0 : index
    %211 = vector.load %arg11[%c3_200, %c0_201, %c0_202] : memref<8x32x32xf32, #tpu.memory_space<vmem>>, vector<1x32x32xf32>
    %212 = vector.shape_cast %211 : vector<1x32x32xf32> to vector<32x32xf32>
    %cst_203 = arith.constant dense<0.000000e+00> : vector<2x32xf32>
    %213 = tpu.matmul %210, %212, %cst_203 {dimension_numbers = #tpu.dot_dimension_numbers<[1], [0], [0], [1], [0, 0, 1, 1], [], []>} : vector<2x32xf32>, vector<32x32xf32>, vector<2x32xf32> -> vector<2x32xf32>
    %214 = arith.addf %207, %213 : vector<2x32xf32>
    %c4_204 = arith.constant 4 : index
    %c0_205 = arith.constant 0 : index
    %c0_206 = arith.constant 0 : index
    %215 = vector.load %arg10[%c4_204, %c0_205, %c0_206] : memref<8x2x14xf32, #tpu.memory_space<vmem>>, vector<1x2x14xf32>
    %216 = vector.shape_cast %215 : vector<1x2x14xf32> to vector<2x14xf32>
    %cst_207 = arith.constant dense<0.000000e+00> : vector<2x32xf32>
    %217 = tpu.matmul %216, %185, %cst_207 {dimension_numbers = #tpu.dot_dimension_numbers<[1], [0], [0], [1], [0, 0, 1, 1], [], []>} : vector<2x14xf32>, vector<14x32xf32>, vector<2x32xf32> -> vector<2x32xf32>
    %c4_208 = arith.constant 4 : index
    %c0_209 = arith.constant 0 : index
    %c0_210 = arith.constant 0 : index
    %218 = vector.load %arg11[%c4_208, %c0_209, %c0_210] : memref<8x32x32xf32, #tpu.memory_space<vmem>>, vector<1x32x32xf32>
    %219 = vector.shape_cast %218 : vector<1x32x32xf32> to vector<32x32xf32>
    %cst_211 = arith.constant dense<0.000000e+00> : vector<2x32xf32>
    %220 = tpu.matmul %217, %219, %cst_211 {dimension_numbers = #tpu.dot_dimension_numbers<[1], [0], [0], [1], [0, 0, 1, 1], [], []>} : vector<2x32xf32>, vector<32x32xf32>, vector<2x32xf32> -> vector<2x32xf32>
    %221 = arith.addf %214, %220 : vector<2x32xf32>
    %c5_212 = arith.constant 5 : index
    %c0_213 = arith.constant 0 : index
    %c0_214 = arith.constant 0 : index
    %222 = vector.load %arg10[%c5_212, %c0_213, %c0_214] : memref<8x2x14xf32, #tpu.memory_space<vmem>>, vector<1x2x14xf32>
    %223 = vector.shape_cast %222 : vector<1x2x14xf32> to vector<2x14xf32>
    %cst_215 = arith.constant dense<0.000000e+00> : vector<2x32xf32>
    %224 = tpu.matmul %223, %185, %cst_215 {dimension_numbers = #tpu.dot_dimension_numbers<[1], [0], [0], [1], [0, 0, 1, 1], [], []>} : vector<2x14xf32>, vector<14x32xf32>, vector<2x32xf32> -> vector<2x32xf32>
    %c5_216 = arith.constant 5 : index
    %c0_217 = arith.constant 0 : index
    %c0_218 = arith.constant 0 : index
    %225 = vector.load %arg11[%c5_216, %c0_217, %c0_218] : memref<8x32x32xf32, #tpu.memory_space<vmem>>, vector<1x32x32xf32>
    %226 = vector.shape_cast %225 : vector<1x32x32xf32> to vector<32x32xf32>
    %cst_219 = arith.constant dense<0.000000e+00> : vector<2x32xf32>
    %227 = tpu.matmul %224, %226, %cst_219 {dimension_numbers = #tpu.dot_dimension_numbers<[1], [0], [0], [1], [0, 0, 1, 1], [], []>} : vector<2x32xf32>, vector<32x32xf32>, vector<2x32xf32> -> vector<2x32xf32>
    %228 = arith.addf %221, %227 : vector<2x32xf32>
    %c6_220 = arith.constant 6 : index
    %c0_221 = arith.constant 0 : index
    %c0_222 = arith.constant 0 : index
    %229 = vector.load %arg10[%c6_220, %c0_221, %c0_222] : memref<8x2x14xf32, #tpu.memory_space<vmem>>, vector<1x2x14xf32>
    %230 = vector.shape_cast %229 : vector<1x2x14xf32> to vector<2x14xf32>
    %cst_223 = arith.constant dense<0.000000e+00> : vector<2x32xf32>
    %231 = tpu.matmul %230, %185, %cst_223 {dimension_numbers = #tpu.dot_dimension_numbers<[1], [0], [0], [1], [0, 0, 1, 1], [], []>} : vector<2x14xf32>, vector<14x32xf32>, vector<2x32xf32> -> vector<2x32xf32>
    %c6_224 = arith.constant 6 : index
    %c0_225 = arith.constant 0 : index
    %c0_226 = arith.constant 0 : index
    %232 = vector.load %arg11[%c6_224, %c0_225, %c0_226] : memref<8x32x32xf32, #tpu.memory_space<vmem>>, vector<1x32x32xf32>
    %233 = vector.shape_cast %232 : vector<1x32x32xf32> to vector<32x32xf32>
    %cst_227 = arith.constant dense<0.000000e+00> : vector<2x32xf32>
    %234 = tpu.matmul %231, %233, %cst_227 {dimension_numbers = #tpu.dot_dimension_numbers<[1], [0], [0], [1], [0, 0, 1, 1], [], []>} : vector<2x32xf32>, vector<32x32xf32>, vector<2x32xf32> -> vector<2x32xf32>
    %235 = arith.addf %228, %234 : vector<2x32xf32>
    %c7_228 = arith.constant 7 : index
    %c0_229 = arith.constant 0 : index
    %c0_230 = arith.constant 0 : index
    %236 = vector.load %arg10[%c7_228, %c0_229, %c0_230] : memref<8x2x14xf32, #tpu.memory_space<vmem>>, vector<1x2x14xf32>
    %237 = vector.shape_cast %236 : vector<1x2x14xf32> to vector<2x14xf32>
    %cst_231 = arith.constant dense<0.000000e+00> : vector<2x32xf32>
    %238 = tpu.matmul %237, %185, %cst_231 {dimension_numbers = #tpu.dot_dimension_numbers<[1], [0], [0], [1], [0, 0, 1, 1], [], []>} : vector<2x14xf32>, vector<14x32xf32>, vector<2x32xf32> -> vector<2x32xf32>
    %c7_232 = arith.constant 7 : index
    %c0_233 = arith.constant 0 : index
    %c0_234 = arith.constant 0 : index
    %239 = vector.load %arg11[%c7_232, %c0_233, %c0_234] : memref<8x32x32xf32, #tpu.memory_space<vmem>>, vector<1x32x32xf32>
    %240 = vector.shape_cast %239 : vector<1x32x32xf32> to vector<32x32xf32>
    %cst_235 = arith.constant dense<0.000000e+00> : vector<2x32xf32>
    %241 = tpu.matmul %238, %240, %cst_235 {dimension_numbers = #tpu.dot_dimension_numbers<[1], [0], [0], [1], [0, 0, 1, 1], [], []>} : vector<2x32xf32>, vector<32x32xf32>, vector<2x32xf32> -> vector<2x32xf32>
    %242 = arith.addf %235, %241 : vector<2x32xf32>
    %c0_236 = arith.constant 0 : index
    %c0_237 = arith.constant 0 : index
    %243 = vector.load %arg12[%c0_236, %c0_237] : memref<1x32xf32, #tpu.memory_space<vmem>>, vector<1x32xf32>
    %244 = vector.broadcast %243 : vector<1x32xf32> to vector<2x32xf32>
    %245 = arith.addf %242, %244 : vector<2x32xf32>
    %cst_238 = arith.constant 0.000000e+00 : f32
    %246 = vector.broadcast %cst_238 : f32 to vector<2x32xf32>
    %247 = arith.maximumf %245, %246 : vector<2x32xf32>
    %cst_239 = arith.constant dense<0.000000e+00> : vector<32xf32>
    %248 = vector.multi_reduction <add>, %247, %cst_239 [0] : vector<2x32xf32> to vector<32xf32>
    %249 = vector.shape_cast %248 : vector<32xf32> to vector<1x32xf32>
    %cst_240 = arith.constant 2.000000e+00 : f32
    %250 = vector.broadcast %cst_240 : f32 to vector<1x32xf32>
    %251 = arith.divf %249, %250 : vector<1x32xf32>
    %c0_241 = arith.constant 0 : index
    %c0_242 = arith.constant 0 : index
    %252 = vector.load %arg13[%c0_241, %c0_242] : memref<32x32xf32, #tpu.memory_space<vmem>>, vector<32x32xf32>
    %cst_243 = arith.constant dense<0.000000e+00> : vector<1x32xf32>
    %253 = tpu.matmul %251, %252, %cst_243 {dimension_numbers = #tpu.dot_dimension_numbers<[1], [0], [0], [1], [0, 0, 1, 1], [], []>} : vector<1x32xf32>, vector<32x32xf32>, vector<1x32xf32> -> vector<1x32xf32>
    %c0_244 = arith.constant 0 : index
    %c0_245 = arith.constant 0 : index
    %254 = vector.load %arg14[%c0_244, %c0_245] : memref<1x32xf32, #tpu.memory_space<vmem>>, vector<1x32xf32>
    %255 = arith.addf %253, %254 : vector<1x32xf32>
    %cst_246 = arith.constant 0.000000e+00 : f32
    %256 = vector.broadcast %cst_246 : f32 to vector<1x32xf32>
    %257 = arith.maximumf %255, %256 : vector<1x32xf32>
    %c0_247 = arith.constant 0 : index
    %c0_248 = arith.constant 0 : index
    %258 = vector.load %arg15[%c0_247, %c0_248] : memref<32x32xf32, #tpu.memory_space<vmem>>, vector<32x32xf32>
    %cst_249 = arith.constant dense<0.000000e+00> : vector<1x32xf32>
    %259 = tpu.matmul %257, %258, %cst_249 {dimension_numbers = #tpu.dot_dimension_numbers<[1], [0], [0], [1], [0, 0, 1, 1], [], []>} : vector<1x32xf32>, vector<32x32xf32>, vector<1x32xf32> -> vector<1x32xf32>
    %c0_250 = arith.constant 0 : index
    %c0_251 = arith.constant 0 : index
    %260 = vector.load %arg16[%c0_250, %c0_251] : memref<1x32xf32, #tpu.memory_space<vmem>>, vector<1x32xf32>
    %261 = arith.addf %259, %260 : vector<1x32xf32>
    %cst_252 = arith.constant 0.000000e+00 : f32
    %262 = vector.broadcast %cst_252 : f32 to vector<1x32xf32>
    %263 = arith.maximumf %261, %262 : vector<1x32xf32>
    %c0_253 = arith.constant 0 : index
    %c0_254 = arith.constant 0 : index
    %264 = vector.load %arg17[%c0_253, %c0_254] : memref<32x6xf32, #tpu.memory_space<vmem>>, vector<32x6xf32>
    %cst_255 = arith.constant dense<0.000000e+00> : vector<1x6xf32>
    %265 = tpu.matmul %263, %264, %cst_255 {dimension_numbers = #tpu.dot_dimension_numbers<[1], [0], [0], [1], [0, 0, 1, 1], [], []>} : vector<1x32xf32>, vector<32x6xf32>, vector<1x6xf32> -> vector<1x6xf32>
    %c0_256 = arith.constant 0 : index
    %c0_257 = arith.constant 0 : index
    %266 = vector.load %arg18[%c0_256, %c0_257] : memref<1x6xf32, #tpu.memory_space<vmem>>, vector<1x6xf32>
    %267 = arith.addf %265, %266 : vector<1x6xf32>
    %c0_258 = arith.constant 0 : index
    %c0_259 = arith.constant 0 : index
    %c0_260 = arith.constant 0 : index
    %268 = vector.load %arg19[%c0_258, %c0_259, %c0_260] : memref<1x1x6xf32, #tpu.memory_space<vmem>>, vector<1x1x6xf32>
    %269 = vector.shape_cast %268 : vector<1x1x6xf32> to vector<1x6xf32>
    %270 = vector.shape_cast %267 : vector<1x6xf32> to vector<1x1x6xf32>
    tpu.vector_store %arg19[%c0_258, %c0_259, %c0_260], %270 {strides = array<i32>} : memref<1x1x6xf32, #tpu.memory_space<vmem>>, vector<1x1x6xf32>,
    return
  }
  func.func @transform_0(%arg0: i32) -> (i32, i32, i32) {
    %c0_i32 = arith.constant 0 : i32
    %c0_i32_0 = arith.constant 0 : i32
    %c0_i32_1 = arith.constant 0 : i32
    return %arg0, %c0_i32, %c0_i32_0 : i32, i32, i32
  }
  func.func @transform_1(%arg0: i32) -> (i32, i32) {
    %c0_i32 = arith.constant 0 : i32
    %c0_i32_0 = arith.constant 0 : i32
    %c0_i32_1 = arith.constant 0 : i32
    return %c0_i32, %c0_i32_0 : i32, i32
  }
  func.func @transform_2(%arg0: i32) -> (i32, i32) {
    %c0_i32 = arith.constant 0 : i32
    %c0_i32_0 = arith.constant 0 : i32
    %c0_i32_1 = arith.constant 0 : i32
    return %c0_i32, %c0_i32_0 : i32, i32
  }
  func.func @transform_3(%arg0: i32) -> (i32, i32, i32) {
    %c0_i32 = arith.constant 0 : i32
    %c0_i32_0 = arith.constant 0 : i32
    %c0_i32_1 = arith.constant 0 : i32
    %c0_i32_2 = arith.constant 0 : i32
    return %c0_i32, %c0_i32_0, %c0_i32_1 : i32, i32, i32
  }
  func.func @transform_4(%arg0: i32) -> (i32, i32, i32) {
    %c0_i32 = arith.constant 0 : i32
    %c0_i32_0 = arith.constant 0 : i32
    %c0_i32_1 = arith.constant 0 : i32
    %c0_i32_2 = arith.constant 0 : i32
    return %c0_i32, %c0_i32_0, %c0_i32_1 : i32, i32, i32
  }
  func.func @transform_5(%arg0: i32) -> (i32, i32) {
    %c0_i32 = arith.constant 0 : i32
    %c0_i32_0 = arith.constant 0 : i32
    %c0_i32_1 = arith.constant 0 : i32
    return %c0_i32, %c0_i32_0 : i32, i32
  }
  func.func @transform_6(%arg0: i32) -> (i32, i32, i32) {
    %c0_i32 = arith.constant 0 : i32
    %c0_i32_0 = arith.constant 0 : i32
    %c0_i32_1 = arith.constant 0 : i32
    %c0_i32_2 = arith.constant 0 : i32
    return %c0_i32, %c0_i32_0, %c0_i32_1 : i32, i32, i32
  }
  func.func @transform_7(%arg0: i32) -> (i32, i32, i32) {
    %c0_i32 = arith.constant 0 : i32
    %c0_i32_0 = arith.constant 0 : i32
    %c0_i32_1 = arith.constant 0 : i32
    %c0_i32_2 = arith.constant 0 : i32
    return %c0_i32, %c0_i32_0, %c0_i32_1 : i32, i32, i32
  }
  func.func @transform_8(%arg0: i32) -> (i32, i32) {
    %c0_i32 = arith.constant 0 : i32
    %c0_i32_0 = arith.constant 0 : i32
    %c0_i32_1 = arith.constant 0 : i32
    return %c0_i32, %c0_i32_0 : i32, i32
  }
  func.func @transform_9(%arg0: i32) -> (i32, i32, i32) {
    %c0_i32 = arith.constant 0 : i32
    %c0_i32_0 = arith.constant 0 : i32
    %c0_i32_1 = arith.constant 0 : i32
    %c0_i32_2 = arith.constant 0 : i32
    return %c0_i32, %c0_i32_0, %c0_i32_1 : i32, i32, i32
  }
  func.func @transform_10(%arg0: i32) -> (i32, i32, i32) {
    %c0_i32 = arith.constant 0 : i32
    %c0_i32_0 = arith.constant 0 : i32
    %c0_i32_1 = arith.constant 0 : i32
    %c0_i32_2 = arith.constant 0 : i32
    return %c0_i32, %c0_i32_0, %c0_i32_1 : i32, i32, i32
  }
  func.func @transform_11(%arg0: i32) -> (i32, i32) {
    %c0_i32 = arith.constant 0 : i32
    %c0_i32_0 = arith.constant 0 : i32
    %c0_i32_1 = arith.constant 0 : i32
    return %c0_i32, %c0_i32_0 : i32, i32
  }
  func.func @transform_12(%arg0: i32) -> (i32, i32) {
    %c0_i32 = arith.constant 0 : i32
    %c0_i32_0 = arith.constant 0 : i32
    %c0_i32_1 = arith.constant 0 : i32
    return %c0_i32, %c0_i32_0 : i32, i32
  }
  func.func @transform_13(%arg0: i32) -> (i32, i32) {
    %c0_i32 = arith.constant 0 : i32
    %c0_i32_0 = arith.constant 0 : i32
    %c0_i32_1 = arith.constant 0 : i32
    return %c0_i32, %c0_i32_0 : i32, i32
  }
  func.func @transform_14(%arg0: i32) -> (i32, i32) {
    %c0_i32 = arith.constant 0 : i32
    %c0_i32_0 = arith.constant 0 : i32
    %c0_i32_1 = arith.constant 0 : i32
    return %c0_i32, %c0_i32_0 : i32, i32
  }
  func.func @transform_15(%arg0: i32) -> (i32, i32) {
    %c0_i32 = arith.constant 0 : i32
    %c0_i32_0 = arith.constant 0 : i32
    %c0_i32_1 = arith.constant 0 : i32
    return %c0_i32, %c0_i32_0 : i32, i32
  }
  func.func @transform_16(%arg0: i32) -> (i32, i32) {
    %c0_i32 = arith.constant 0 : i32
    %c0_i32_0 = arith.constant 0 : i32
    %c0_i32_1 = arith.constant 0 : i32
    return %c0_i32, %c0_i32_0 : i32, i32
  }
  func.func @transform_17(%arg0: i32) -> (i32, i32) {
    %c0_i32 = arith.constant 0 : i32
    %c0_i32_0 = arith.constant 0 : i32
    %c0_i32_1 = arith.constant 0 : i32
    return %c0_i32, %c0_i32_0 : i32, i32
  }
  func.func @transform_18(%arg0: i32) -> (i32, i32, i32) {
    %c0_i32 = arith.constant 0 : i32
    %c0_i32_0 = arith.constant 0 : i32
    %c0_i32_1 = arith.constant 0 : i32
    return %arg0, %c0_i32, %c0_i32_0 : i32, i32, i32
  }
}

</mosaic_0001>

<llo_original>
// kernel: dil_model_forward.1
$region0: #{dil_model_forward.1}
  #allocation0 [shape = 'u32[]', space=smem, size = 0x4, offset = 0x4, fixed_abs, tag = 'smem constant byte address 0x4 - core index']
  #allocation1 [shape = 'u32[72,128]{1,0:T(1,128)}', space=vmem, size = 0x9000, scoped, tag = 'internal scratch']
  %s0 = inlined_call_operand.vmem [shape: f32[2,256,4], index: 0, kind: input, shape index: {}]
  %s1 = inlined_call_operand.vmem [shape: f32[8,32], index: 1, kind: input, shape index: {}]
  %s2 = inlined_call_operand.vmem [shape: f32[1,32], index: 2, kind: input, shape index: {}]
  %s3 = inlined_call_operand.vmem [shape: f32[8,60,253], index: 3, kind: input, shape index: {}]
  %s4 = inlined_call_operand.vmem [shape: f32[8,32,32], index: 4, kind: input, shape index: {}]
  %s5 = inlined_call_operand.vmem [shape: f32[1,32], index: 5, kind: input, shape index: {}]
  %s6 = inlined_call_operand.vmem [shape: f32[8,14,60], index: 6, kind: input, shape index: {}]
  %s7 = inlined_call_operand.vmem [shape: f32[8,32,32], index: 7, kind: input, shape index: {}]
  %s8 = inlined_call_operand.vmem [shape: f32[1,32], index: 8, kind: input, shape index: {}]
  %s9 = inlined_call_operand.vmem [shape: f32[8,2,14], index: 9, kind: input, shape index: {}]
  %s10 = inlined_call_operand.vmem [shape: f32[8,32,32], index: 10, kind: input, shape index: {}]
  %s11 = inlined_call_operand.vmem [shape: f32[1,32], index: 11, kind: input, shape index: {}]
  %s12 = inlined_call_operand.vmem [shape: f32[32,32], index: 12, kind: input, shape index: {}]
  %s13 = inlined_call_operand.vmem [shape: f32[1,32], index: 13, kind: input, shape index: {}]
  %s14 = inlined_call_operand.vmem [shape: f32[32,32], index: 14, kind: input, shape index: {}]
  %s15 = inlined_call_operand.vmem [shape: f32[1,32], index: 15, kind: input, shape index: {}]
  %s16 = inlined_call_operand.vmem [shape: f32[32,6], index: 16, kind: input, shape index: {}]
  %s17 = inlined_call_operand.vmem [shape: f32[1,6], index: 17, kind: input, shape index: {}]
  %s18 = inlined_call_operand.hbm [shape: f32[2,1,6], index: 18, kind: output, shape index: {}]
  %s19 = sld [smem:[#allocation0]]
  $region105: #{dil_model_forward.1} parent=0
    _
  %s21 = ssub.s32 1, %s19
  %s22 = scalar_select 0, %s21, %s19
  $region1: #{dil_model_forward.1} parent=0
    #allocation2 [shape = 'u8[1024]{0}', space=vmem, size = 0x400, scoped, tag = 'output window, operand 0']
    #allocation3 [shape = 's32[2]{0}', space=sflag, size = 0x8, scoped, tag = 'scoped memory for dil_model_forward.1']
    %23 = vsyncpa [#allocation3], 0
    %s24 = scalar_lea.sflag [#allocation3], 1
    %25 = vsyncpa %s24, 0
    loop: start=0, step=1, limit=4
    $region2: #{dil_model_forward.1} parent=1 // loop_pre_header
      _
    $region3: #{dil_model_forward.1} parent=1 // loop_header
      %s27 = sphi 0, %s31
      %p28 = scmp.ge.s32.totalorder %s27, 4
      %s37 = sphi 0, %s39
      %s40 = sphi 0, %s37
      %s41 = sphi 0, %s40
      %s57 = sphi 0, %s41
      %s61 = sphi 0, %s61
      %s63 = sphi 0, %s61
      %s64 = sphi 0, %s63
      %s78 = sphi 0, %s64
      %s82 = sphi 0, %s82
      %s84 = sphi 0, %s82
      %s85 = sphi 0, %s84
      %s99 = sphi 0, %s85
      %s103 = sphi 0, %s103
      %s105 = sphi 0, %s103
      %s106 = sphi 0, %s105
      %s120 = sphi 0, %s106
      %s124 = sphi 0, %s124
      %s126 = sphi 0, %s124
      %s127 = sphi 0, %s126
      %s141 = sphi 0, %s127
      %s145 = sphi 0, %s145
      %s147 = sphi 0, %s145
      %s148 = sphi 0, %s147
      %s162 = sphi 0, %s148
      %s166 = sphi 0, %s166
      %s168 = sphi 0, %s166
      %s169 = sphi 0, %s168
      %s183 = sphi 0, %s169
      %s187 = sphi 0, %s187
      %s189 = sphi 0, %s187
      %s190 = sphi 0, %s189
      %s204 = sphi 0, %s190
      %s208 = sphi 0, %s208
      %s210 = sphi 0, %s208
      %s211 = sphi 0, %s210
      %s225 = sphi 0, %s211
      %s229 = sphi 0, %s229
      %s231 = sphi 0, %s229
      %s232 = sphi 0, %s231
      %s246 = sphi 0, %s232
      %s250 = sphi 0, %s250
      %s252 = sphi 0, %s250
      %s253 = sphi 0, %s252
      %s267 = sphi 0, %s253
      %s271 = sphi 0, %s271
      %s273 = sphi 0, %s271
      %s274 = sphi 0, %s273
      %s288 = sphi 0, %s274
      %s292 = sphi 0, %s292
      %s294 = sphi 0, %s292
      %s295 = sphi 0, %s294
      %s309 = sphi 0, %s295
      %s313 = sphi 0, %s313
      %s315 = sphi 0, %s313
      %s316 = sphi 0, %s315
      %s330 = sphi 0, %s316
      %s334 = sphi 0, %s334
      %s336 = sphi 0, %s334
      %s337 = sphi 0, %s336
      %s351 = sphi 0, %s337
      %s355 = sphi 0, %s355
      %s357 = sphi 0, %s355
      %s358 = sphi 0, %s357
      %s372 = sphi 0, %s358
      %s376 = sphi 0, %s376
      %s378 = sphi 0, %s376
      %s379 = sphi 0, %s378
      %s393 = sphi 0, %s379
      %s397 = sphi 0, %s397
      %s399 = sphi 0, %s397
      %s400 = sphi 0, %s399
      %s414 = sphi 0, %s400
      %s420 = sphi 0, %s422
      %s423 = sphi 0, %s420
      %s424 = sphi 0, %s423
      %s440 = sphi 0, %s424
    $region4: #{dil_model_forward.1} parent=1 // loop_header_branch
      %30 = sbr.rel (%p28) target = $region8
    $region5: #{dil_model_forward.1} parent=1 // loop_body
      %s32 = ssub.s32 %s27, 1
      %s33 = ssub.s32 %s27, 2
      %s34 = sadd.s32 %s27, 1
      %s35 = ssub.s32 %s27, %s34
      %p36 = scmp.eq.s32.totalorder %s35, 0
      %s38 = sadd.s32 %s37, 1
      %s39 = scalar_select %p36, %s37, %s38
      %p42 = pneg %p36
      %p43 = scmp.eq.s32.totalorder %s27, 1
      %p44 = por %p42, %p43
      %p45 = scmp.ne.s32.totalorder %s37, %s40
      %p46 = scmp.eq.s32.totalorder %s27, 0
      %p47 = por %p45, %p46
      %p48 = scmp.ne.s32.totalorder %s37, %s40
      %p49 = scmp.eq.s32.totalorder %s32, 1
      %p50 = por %p48, %p49
      %p51 = scmp.ne.s32.totalorder %s40, %s41
      %p52 = scmp.eq.s32.totalorder %s32, 0
      %p53 = por %p51, %p52
      %p54 = scmp.ne.s32.totalorder %s40, %s41
      %p55 = scmp.eq.s32.totalorder %s33, 1
      %p56 = por %p54, %p55
      %p58 = scmp.ne.s32.totalorder %s41, %s57
      %p59 = scmp.eq.s32.totalorder %s33, 0
      %p60 = por %p58, %p59
      %s62 = sadd.s32 %s61, 1
      %p65 = scmp.eq.s32.totalorder %s27, 1
      %p66 = scmp.ne.s32.totalorder %s61, %s63
      %p67 = scmp.eq.s32.totalorder %s27, 0
      %p68 = por %p66, %p67
      %p69 = scmp.ne.s32.totalorder %s61, %s63
      %p70 = scmp.eq.s32.totalorder %s32, 1
      %p71 = por %p69, %p70
      %p72 = scmp.ne.s32.totalorder %s63, %s64
      %p73 = scmp.eq.s32.totalorder %s32, 0
      %p74 = por %p72, %p73
      %p75 = scmp.ne.s32.totalorder %s63, %s64
      %p76 = scmp.eq.s32.totalorder %s33, 1
      %p77 = por %p75, %p76
      %p79 = scmp.ne.s32.totalorder %s64, %s78
      %p80 = scmp.eq.s32.totalorder %s33, 0
      %p81 = por %p79, %p80
      %s83 = sadd.s32 %s82, 1
      %p86 = scmp.eq.s32.totalorder %s27, 1
      %p87 = scmp.ne.s32.totalorder %s82, %s84
      %p88 = scmp.eq.s32.totalorder %s27, 0
      %p89 = por %p87, %p88
      %p90 = scmp.ne.s32.totalorder %s82, %s84
      %p91 = scmp.eq.s32.totalorder %s32, 1
      %p92 = por %p90, %p91
      %p93 = scmp.ne.s32.totalorder %s84, %s85
      %p94 = scmp.eq.s32.totalorder %s32, 0
      %p95 = por %p93, %p94
      %p96 = scmp.ne.s32.totalorder %s84, %s85
      %p97 = scmp.eq.s32.totalorder %s33, 1
      %p98 = por %p96, %p97
      %p100 = scmp.ne.s32.totalorder %s85, %s99
      %p101 = scmp.eq.s32.totalorder %s33, 0
      %p102 = por %p100, %p101
      %s104 = sadd.s32 %s103, 1
      %p107 = scmp.eq.s32.totalorder %s27, 1
      %p108 = scmp.ne.s32.totalorder %s103, %s105
      %p109 = scmp.eq.s32.totalorder %s27, 0
      %p110 = por %p108, %p109
      %p111 = scmp.ne.s32.totalorder %s103, %s105
      %p112 = scmp.eq.s32.totalorder %s32, 1
      %p113 = por %p111, %p112
      %p114 = scmp.ne.s32.totalorder %s105, %s106
      %p115 = scmp.eq.s32.totalorder %s32, 0
      %p116 = por %p114, %p115
      %p117 = scmp.ne.s32.totalorder %s105, %s106
      %p118 = scmp.eq.s32.totalorder %s33, 1
      %p119 = por %p117, %p118
      %p121 = scmp.ne.s32.totalorder %s106, %s120
      %p122 = scmp.eq.s32.totalorder %s33, 0
      %p123 = por %p121, %p122
      %s125 = sadd.s32 %s124, 1
      %p128 = scmp.eq.s32.totalorder %s27, 1
      %p129 = scmp.ne.s32.totalorder %s124, %s126
      %p130 = scmp.eq.s32.totalorder %s27, 0
      %p131 = por %p129, %p130
      %p132 = scmp.ne.s32.totalorder %s124, %s126
      %p133 = scmp.eq.s32.totalorder %s32, 1
      %p134 = por %p132, %p133
      %p135 = scmp.ne.s32.totalorder %s126, %s127
      %p136 = scmp.eq.s32.totalorder %s32, 0
      %p137 = por %p135, %p136
      %p138 = scmp.ne.s32.totalorder %s126, %s127
      %p139 = scmp.eq.s32.totalorder %s33, 1
      %p140 = por %p138, %p139
      %p142 = scmp.ne.s32.totalorder %s127, %s141
      %p143 = scmp.eq.s32.totalorder %s33, 0
      %p144 = por %p142, %p143
      %s146 = sadd.s32 %s145, 1
      %p149 = scmp.eq.s32.totalorder %s27, 1
      %p150 = scmp.ne.s32.totalorder %s145, %s147
      %p151 = scmp.eq.s32.totalorder %s27, 0
      %p152 = por %p150, %p151
      %p153 = scmp.ne.s32.totalorder %s145, %s147
      %p154 = scmp.eq.s32.totalorder %s32, 1
      %p155 = por %p153, %p154
      %p156 = scmp.ne.s32.totalorder %s147, %s148
      %p157 = scmp.eq.s32.totalorder %s32, 0
      %p158 = por %p156, %p157
      %p159 = scmp.ne.s32.totalorder %s147, %s148
      %p160 = scmp.eq.s32.totalorder %s33, 1
      %p161 = por %p159, %p160
      %p163 = scmp.ne.s32.totalorder %s148, %s162
      %p164 = scmp.eq.s32.totalorder %s33, 0
      %p165 = por %p163, %p164
      %s167 = sadd.s32 %s166, 1
      %p170 = scmp.eq.s32.totalorder %s27, 1
      %p171 = scmp.ne.s32.totalorder %s166, %s168
      %p172 = scmp.eq.s32.totalorder %s27, 0
      %p173 = por %p171, %p172
      %p174 = scmp.ne.s32.totalorder %s166, %s168
      %p175 = scmp.eq.s32.totalorder %s32, 1
      %p176 = por %p174, %p175
      %p177 = scmp.ne.s32.totalorder %s168, %s169
      %p178 = scmp.eq.s32.totalorder %s32, 0
      %p179 = por %p177, %p178
      %p180 = scmp.ne.s32.totalorder %s168, %s169
      %p181 = scmp.eq.s32.totalorder %s33, 1
      %p182 = por %p180, %p181
      %p184 = scmp.ne.s32.totalorder %s169, %s183
      %p185 = scmp.eq.s32.totalorder %s33, 0
      %p186 = por %p184, %p185
      %s188 = sadd.s32 %s187, 1
      %p191 = scmp.eq.s32.totalorder %s27, 1
      %p192 = scmp.ne.s32.totalorder %s187, %s189
      %p193 = scmp.eq.s32.totalorder %s27, 0
      %p194 = por %p192, %p193
      %p195 = scmp.ne.s32.totalorder %s187, %s189
      %p196 = scmp.eq.s32.totalorder %s32, 1
      %p197 = por %p195, %p196
      %p198 = scmp.ne.s32.totalorder %s189, %s190
      %p199 = scmp.eq.s32.totalorder %s32, 0
      %p200 = por %p198, %p199
      %p201 = scmp.ne.s32.totalorder %s189, %s190
      %p202 = scmp.eq.s32.totalorder %s33, 1
      %p203 = por %p201, %p202
      %p205 = scmp.ne.s32.totalorder %s190, %s204
      %p206 = scmp.eq.s32.totalorder %s33, 0
      %p207 = por %p205, %p206
      %s209 = sadd.s32 %s208, 1
      %p212 = scmp.eq.s32.totalorder %s27, 1
      %p213 = scmp.ne.s32.totalorder %s208, %s210
      %p214 = scmp.eq.s32.totalorder %s27, 0
      %p215 = por %p213, %p214
      %p216 = scmp.ne.s32.totalorder %s208, %s210
      %p217 = scmp.eq.s32.totalorder %s32, 1
      %p218 = por %p216, %p217
      %p219 = scmp.ne.s32.totalorder %s210, %s211
      %p220 = scmp.eq.s32.totalorder %s32, 0
      %p221 = por %p219, %p220
      %p222 = scmp.ne.s32.totalorder %s210, %s211
      %p223 = scmp.eq.s32.totalorder %s33, 1
      %p224 = por %p222, %p223
      %p226 = scmp.ne.s32.totalorder %s211, %s225
      %p227 = scmp.eq.s32.totalorder %s33, 0
      %p228 = por %p226, %p227
      %s230 = sadd.s32 %s229, 1
      %p233 = scmp.eq.s32.totalorder %s27, 1
      %p234 = scmp.ne.s32.totalorder %s229, %s231
      %p235 = scmp.eq.s32.totalorder %s27, 0
      %p236 = por %p234, %p235
      %p237 = scmp.ne.s32.totalorder %s229, %s231
      %p238 = scmp.eq.s32.totalorder %s32, 1
      %p239 = por %p237, %p238
      %p240 = scmp.ne.s32.totalorder %s231, %s232
      %p241 = scmp.eq.s32.totalorder %s32, 0
      %p242 = por %p240, %p241
      %p243 = scmp.ne.s32.totalorder %s231, %s232
      %p244 = scmp.eq.s32.totalorder %s33, 1
      %p245 = por %p243, %p244
      %p247 = scmp.ne.s32.totalorder %s232, %s246
      %p248 = scmp.eq.s32.totalorder %s33, 0
      %p249 = por %p247, %p248
      %s251 = sadd.s32 %s250, 1
      %p254 = scmp.eq.s32.totalorder %s27, 1
      %p255 = scmp.ne.s32.totalorder %s250, %s252
      %p256 = scmp.eq.s32.totalorder %s27, 0
      %p257 = por %p255, %p256
      %p258 = scmp.ne.s32.totalorder %s250, %s252
      %p259 = scmp.eq.s32.totalorder %s32, 1
      %p260 = por %p258, %p259
      %p261 = scmp.ne.s32.totalorder %s252, %s253
      %p262 = scmp.eq.s32.totalorder %s32, 0
      %p263 = por %p261, %p262
      %p264 = scmp.ne.s32.totalorder %s252, %s253
      %p265 = scmp.eq.s32.totalorder %s33, 1
      %p266 = por %p264, %p265
      %p268 = scmp.ne.s32.totalorder %s253, %s267
      %p269 = scmp.eq.s32.totalorder %s33, 0
      %p270 = por %p268, %p269
      %s272 = sadd.s32 %s271, 1
      %p275 = scmp.eq.s32.totalorder %s27, 1
      %p276 = scmp.ne.s32.totalorder %s271, %s273
      %p277 = scmp.eq.s32.totalorder %s27, 0
      %p278 = por %p276, %p277
      %p279 = scmp.ne.s32.totalorder %s271, %s273
      %p280 = scmp.eq.s32.totalorder %s32, 1
      %p281 = por %p279, %p280
      %p282 = scmp.ne.s32.totalorder %s273, %s274
      %p283 = scmp.eq.s32.totalorder %s32, 0
      %p284 = por %p282, %p283
      %p285 = scmp.ne.s32.totalorder %s273, %s274
      %p286 = scmp.eq.s32.totalorder %s33, 1
      %p287 = por %p285, %p286
      %p289 = scmp.ne.s32.totalorder %s274, %s288
      %p290 = scmp.eq.s32.totalorder %s33, 0
      %p291 = por %p289, %p290
      %s293 = sadd.s32 %s292, 1
      %p296 = scmp.eq.s32.totalorder %s27, 1
      %p297 = scmp.ne.s32.totalorder %s292, %s294
      %p298 = scmp.eq.s32.totalorder %s27, 0
      %p299 = por %p297, %p298
      %p300 = scmp.ne.s32.totalorder %s292, %s294
      %p301 = scmp.eq.s32.totalorder %s32, 1
      %p302 = por %p300, %p301
      %p303 = scmp.ne.s32.totalorder %s294, %s295
      %p304 = scmp.eq.s32.totalorder %s32, 0
      %p305 = por %p303, %p304
      %p306 = scmp.ne.s32.totalorder %s294, %s295
      %p307 = scmp.eq.s32.totalorder %s33, 1
      %p308 = por %p306, %p307
      %p310 = scmp.ne.s32.totalorder %s295, %s309
      %p311 = scmp.eq.s32.totalorder %s33, 0
      %p312 = por %p310, %p311
      %s314 = sadd.s32 %s313, 1
      %p317 = scmp.eq.s32.totalorder %s27, 1
      %p318 = scmp.ne.s32.totalorder %s313, %s315
      %p319 = scmp.eq.s32.totalorder %s27, 0
      %p320 = por %p318, %p319
      %p321 = scmp.ne.s32.totalorder %s313, %s315
      %p322 = scmp.eq.s32.totalorder %s32, 1
      %p323 = por %p321, %p322
      %p324 = scmp.ne.s32.totalorder %s315, %s316
      %p325 = scmp.eq.s32.totalorder %s32, 0
      %p326 = por %p324, %p325
      %p327 = scmp.ne.s32.totalorder %s315, %s316
      %p328 = scmp.eq.s32.totalorder %s33, 1
      %p329 = por %p327, %p328
      %p331 = scmp.ne.s32.totalorder %s316, %s330
      %p332 = scmp.eq.s32.totalorder %s33, 0
      %p333 = por %p331, %p332
      %s335 = sadd.s32 %s334, 1
      %p338 = scmp.eq.s32.totalorder %s27, 1
      %p339 = scmp.ne.s32.totalorder %s334, %s336
      %p340 = scmp.eq.s32.totalorder %s27, 0
      %p341 = por %p339, %p340
      %p342 = scmp.ne.s32.totalorder %s334, %s336
      %p343 = scmp.eq.s32.totalorder %s32, 1
      %p344 = por %p342, %p343
      %p345 = scmp.ne.s32.totalorder %s336, %s337
      %p346 = scmp.eq.s32.totalorder %s32, 0
      %p347 = por %p345, %p346
      %p348 = scmp.ne.s32.totalorder %s336, %s337
      %p349 = scmp.eq.s32.totalorder %s33, 1
      %p350 = por %p348, %p349
      %p352 = scmp.ne.s32.totalorder %s337, %s351
      %p353 = scmp.eq.s32.totalorder %s33, 0
      %p354 = por %p352, %p353
      %s356 = sadd.s32 %s355, 1
      %p359 = scmp.eq.s32.totalorder %s27, 1
      %p360 = scmp.ne.s32.totalorder %s355, %s357
      %p361 = scmp.eq.s32.totalorder %s27, 0
      %p362 = por %p360, %p361
      %p363 = scmp.ne.s32.totalorder %s355, %s357
      %p364 = scmp.eq.s32.totalorder %s32, 1
      %p365 = por %p363, %p364
      %p366 = scmp.ne.s32.totalorder %s357, %s358
      %p367 = scmp.eq.s32.totalorder %s32, 0
      %p368 = por %p366, %p367
      %p369 = scmp.ne.s32.totalorder %s357, %s358
      %p370 = scmp.eq.s32.totalorder %s33, 1
      %p371 = por %p369, %p370
      %p373 = scmp.ne.s32.totalorder %s358, %s372
      %p374 = scmp.eq.s32.totalorder %s33, 0
      %p375 = por %p373, %p374
      %s377 = sadd.s32 %s376, 1
      %p380 = scmp.eq.s32.totalorder %s27, 1
      %p381 = scmp.ne.s32.totalorder %s376, %s378
      %p382 = scmp.eq.s32.totalorder %s27, 0
      %p383 = por %p381, %p382
      %p384 = scmp.ne.s32.totalorder %s376, %s378
      %p385 = scmp.eq.s32.totalorder %s32, 1
      %p386 = por %p384, %p385
      %p387 = scmp.ne.s32.totalorder %s378, %s379
      %p388 = scmp.eq.s32.totalorder %s32, 0
      %p389 = por %p387, %p388
      %p390 = scmp.ne.s32.totalorder %s378, %s379
      %p391 = scmp.eq.s32.totalorder %s33, 1
      %p392 = por %p390, %p391
      %p394 = scmp.ne.s32.totalorder %s379, %s393
      %p395 = scmp.eq.s32.totalorder %s33, 0
      %p396 = por %p394, %p395
      %s398 = sadd.s32 %s397, 1
      %p401 = scmp.eq.s32.totalorder %s27, 1
      %p402 = scmp.ne.s32.totalorder %s397, %s399
      %p403 = scmp.eq.s32.totalorder %s27, 0
      %p404 = por %p402, %p403
      %p405 = scmp.ne.s32.totalorder %s397, %s399
      %p406 = scmp.eq.s32.totalorder %s32, 1
      %p407 = por %p405, %p406
      %p408 = scmp.ne.s32.totalorder %s399, %s400
      %p409 = scmp.eq.s32.totalorder %s32, 0
      %p410 = por %p408, %p409
      %p411 = scmp.ne.s32.totalorder %s399, %s400
      %p412 = scmp.eq.s32.totalorder %s33, 1
      %p413 = por %p411, %p412
      %p415 = scmp.ne.s32.totalorder %s400, %s414
      %p416 = scmp.eq.s32.totalorder %s33, 0
      %p417 = por %p415, %p416
      %s418 = ssub.s32 %s27, %s34
      %p419 = scmp.eq.s32.totalorder %s418, 0
      %s421 = sadd.s32 %s420, 1
      %s422 = scalar_select %p419, %s420, %s421
      %p425 = pneg %p419
      %p426 = scmp.eq.s32.totalorder %s27, 1
      %p427 = por %p425, %p426
      %p428 = scmp.ne.s32.totalorder %s420, %s423
      %p429 = scmp.eq.s32.totalorder %s27, 0
      %p430 = por %p428, %p429
      %p431 = scmp.ne.s32.totalorder %s420, %s423
      %p432 = scmp.eq.s32.totalorder %s32, 1
      %p433 = por %p431, %p432
      %p434 = scmp.ne.s32.totalorder %s423, %s424
      %p435 = scmp.eq.s32.totalorder %s32, 0
      %p436 = por %p434, %p435
      %p437 = scmp.ne.s32.totalorder %s423, %s424
      %p438 = scmp.eq.s32.totalorder %s33, 1
      %p439 = por %p437, %p438
      %p441 = scmp.ne.s32.totalorder %s424, %s440
      %p442 = scmp.eq.s32.totalorder %s33, 0
      %p443 = por %p441, %p442
      %p444 = scmp.le.s32.totalorder 1, %s27
      %p445 = scmp.lt.s32.totalorder %s27, 3
      %p446 = pnand %p444, %p445
      %p447 = pneg %p446
      // Predicated region
      $region9: #{dil_model_forward.1} parent=5 // pred_check
        _
      $region10: #{dil_model_forward.1} parent=5 // pred_check_branch
        %449 = sbr.rel (%p446) target = $region12
      $region11: #{dil_model_forward.1} parent=5 // pred_region
        %s450 = ssub.s32 %s27, 1
        // Predicated region
        $region13: #{dil_model_forward.1} parent=11 // pred_check
          %p451 = pneg %p74
        $region14: #{dil_model_forward.1} parent=11 // pred_check_branch
          %453 = sbr.rel (%p451) target = $region16
        $region15: #{dil_model_forward.1} parent=11 // pred_region
          _
        $region16: #{dil_model_forward.1} parent=11 // pred_fallthru
          _
        // Predicated region
        $region17: #{dil_model_forward.1} parent=11 // pred_check
          %p454 = pneg %p95
        $region18: #{dil_model_forward.1} parent=11 // pred_check_branch
          %456 = sbr.rel (%p454) target = $region20
        $region19: #{dil_model_forward.1} parent=11 // pred_region
          _
        $region20: #{dil_model_forward.1} parent=11 // pred_fallthru
          _
        // Predicated region
        $region21: #{dil_model_forward.1} parent=11 // pred_check
          %p457 = pneg %p116
        $region22: #{dil_model_forward.1} parent=11 // pred_check_branch
          %459 = sbr.rel (%p457) target = $region24
        $region23: #{dil_model_forward.1} parent=11 // pred_region
          _
        $region24: #{dil_model_forward.1} parent=11 // pred_fallthru
          _
        // Predicated region
        $region25: #{dil_model_forward.1} parent=11 // pred_check
          %p460 = pneg %p137
        $region26: #{dil_model_forward.1} parent=11 // pred_check_branch
          %462 = sbr.rel (%p460) target = $region28
        $region27: #{dil_model_forward.1} parent=11 // pred_region
          _
        $region28: #{dil_model_forward.1} parent=11 // pred_fallthru
          _
        // Predicated region
        $region29: #{dil_model_forward.1} parent=11 // pred_check
          %p463 = pneg %p158
        $region30: #{dil_model_forward.1} parent=11 // pred_check_branch
          %465 = sbr.rel (%p463) target = $region32
        $region31: #{dil_model_forward.1} parent=11 // pred_region
          _
        $region32: #{dil_model_forward.1} parent=11 // pred_fallthru
          _
        // Predicated region
        $region33: #{dil_model_forward.1} parent=11 // pred_check
          %p466 = pneg %p179
        $region34: #{dil_model_forward.1} parent=11 // pred_check_branch
          %468 = sbr.rel (%p466) target = $region36
        $region35: #{dil_model_forward.1} parent=11 // pred_region
          _
        $region36: #{dil_model_forward.1} parent=11 // pred_fallthru
          _
        // Predicated region
        $region37: #{dil_model_forward.1} parent=11 // pred_check
          %p469 = pneg %p200
        $region38: #{dil_model_forward.1} parent=11 // pred_check_branch
          %471 = sbr.rel (%p469) target = $region40
        $region39: #{dil_model_forward.1} parent=11 // pred_region
          _
        $region40: #{dil_model_forward.1} parent=11 // pred_fallthru
          _
        // Predicated region
        $region41: #{dil_model_forward.1} parent=11 // pred_check
          %p472 = pneg %p221
        $region42: #{dil_model_forward.1} parent=11 // pred_check_branch
          %474 = sbr.rel (%p472) target = $region44
        $region43: #{dil_model_forward.1} parent=11 // pred_region
          _
        $region44: #{dil_model_forward.1} parent=11 // pred_fallthru
          _
        // Predicated region
        $region45: #{dil_model_forward.1} parent=11 // pred_check
          %p475 = pneg %p242
        $region46: #{dil_model_forward.1} parent=11 // pred_check_branch
          %477 = sbr.rel (%p475) target = $region48
        $region47: #{dil_model_forward.1} parent=11 // pred_region
          _
        $region48: #{dil_model_forward.1} parent=11 // pred_fallthru
          _
        // Predicated region
        $region49: #{dil_model_forward.1} parent=11 // pred_check
          %p478 = pneg %p263
        $region50: #{dil_model_forward.1} parent=11 // pred_check_branch
          %480 = sbr.rel (%p478) target = $region52
        $region51: #{dil_model_forward.1} parent=11 // pred_region
          _
        $region52: #{dil_model_forward.1} parent=11 // pred_fallthru
          _
        // Predicated region
        $region53: #{dil_model_forward.1} parent=11 // pred_check
          %p481 = pneg %p284
        $region54: #{dil_model_forward.1} parent=11 // pred_check_branch
          %483 = sbr.rel (%p481) target = $region56
        $region55: #{dil_model_forward.1} parent=11 // pred_region
          _
        $region56: #{dil_model_forward.1} parent=11 // pred_fallthru
          _
        // Predicated region
        $region57: #{dil_model_forward.1} parent=11 // pred_check
          %p484 = pneg %p305
        $region58: #{dil_model_forward.1} parent=11 // pred_check_branch
          %486 = sbr.rel (%p484) target = $region60
        $region59: #{dil_model_forward.1} parent=11 // pred_region
          _
        $region60: #{dil_model_forward.1} parent=11 // pred_fallthru
          _
        // Predicated region
        $region61: #{dil_model_forward.1} parent=11 // pred_check
          %p487 = pneg %p326
        $region62: #{dil_model_forward.1} parent=11 // pred_check_branch
          %489 = sbr.rel (%p487) target = $region64
        $region63: #{dil_model_forward.1} parent=11 // pred_region
          _
        $region64: #{dil_model_forward.1} parent=11 // pred_fallthru
          _
        // Predicated region
        $region65: #{dil_model_forward.1} parent=11 // pred_check
          %p490 = pneg %p347
        $region66: #{dil_model_forward.1} parent=11 // pred_check_branch
          %492 = sbr.rel (%p490) target = $region68
        $region67: #{dil_model_forward.1} parent=11 // pred_region
          _
        $region68: #{dil_model_forward.1} parent=11 // pred_fallthru
          _
        // Predicated region
        $region69: #{dil_model_forward.1} parent=11 // pred_check
          %p493 = pneg %p368
        $region70: #{dil_model_forward.1} parent=11 // pred_check_branch
          %495 = sbr.rel (%p493) target = $region72
        $region71: #{dil_model_forward.1} parent=11 // pred_region
          _
        $region72: #{dil_model_forward.1} parent=11 // pred_fallthru
          _
        // Predicated region
        $region73: #{dil_model_forward.1} parent=11 // pred_check
          %p496 = pneg %p389
        $region74: #{dil_model_forward.1} parent=11 // pred_check_branch
          %498 = sbr.rel (%p496) target = $region76
        $region75: #{dil_model_forward.1} parent=11 // pred_region
          _
        $region76: #{dil_model_forward.1} parent=11 // pred_fallthru
          _
        // Predicated region
        $region77: #{dil_model_forward.1} parent=11 // pred_check
          %p499 = pneg %p410
        $region78: #{dil_model_forward.1} parent=11 // pred_check_branch
          %501 = sbr.rel (%p499) target = $region80
        $region79: #{dil_model_forward.1} parent=11 // pred_region
          _
        $region80: #{dil_model_forward.1} parent=11 // pred_fallthru
          _
      $region12: #{dil_model_forward.1} parent=5 // pred_fallthru
        _
      %p502 = scmp.lt.s32.totalorder %s27, 2
      // Predicated region
      $region81: #{dil_model_forward.1} parent=5 // pred_check
        %p503 = pneg %p502
      $region82: #{dil_model_forward.1} parent=5 // pred_check_branch
        %505 = sbr.rel (%p503) target = $region84
      $region83: #{dil_model_forward.1} parent=5 // pred_region
        // Predicated region
        $region85: #{dil_model_forward.1} parent=83 // pred_check
          %p506 = pneg %p47
        $region86: #{dil_model_forward.1} parent=83 // pred_check_branch
          %508 = sbr.rel (%p506) target = $region88
        $region87: #{dil_model_forward.1} parent=83 // pred_region
          %p509 = scmp.lt.s32.totalorder %s27, 1
          %s510 = scalar_select %p509, %s27, 1
          %s511 = smul.addr %s510, 32
          %s512 = smul.addr %s511, 8
          %s513 = scalar_lea.vmem %s0, %s512
        $region88: #{dil_model_forward.1} parent=83 // pred_fallthru
          _
      $region84: #{dil_model_forward.1} parent=5 // pred_fallthru
        _
      %p514 = scmp.le.s32.totalorder 1, %s27
      %p515 = scmp.lt.s32.totalorder %s27, 3
      %p516 = pnand %p514, %p515
      %p517 = pneg %p516
      // Predicated region
      $region89: #{dil_model_forward.1} parent=5 // pred_check
        _
      $region90: #{dil_model_forward.1} parent=5 // pred_check_branch
        %519 = sbr.rel (%p516) target = $region92
      $region91: #{dil_model_forward.1} parent=5 // pred_region
        %s520 = ssub.s32 %s27, 1
        %p521 = scmp.lt.s32.totalorder %s32, 1
        %s522 = scalar_select %p521, %s32, 1
        %s523 = smul.addr %s522, 32
        %s524 = smul.addr %s523, 8
        %s525 = scalar_lea.vmem %s0, %s524
        %p526 = pneg %p53
        %p527 = pneg %p50
        %p528 = pneg %p74
        %p529 = pneg %p71
        %p530 = pneg %p95
        %p531 = pneg %p92
        %p532 = pneg %p116
        %p533 = pneg %p113
        %p534 = pneg %p137
        %p535 = pneg %p134
        %p536 = pneg %p158
        %p537 = pneg %p155
        %p538 = pneg %p179
        %p539 = pneg %p176
        %p540 = pneg %p200
        %p541 = pneg %p197
        %p542 = pneg %p221
        %p543 = pneg %p218
        %p544 = pneg %p242
        %p545 = pneg %p239
        %p546 = pneg %p263
        %p547 = pneg %p260
        %p548 = pneg %p284
        %p549 = pneg %p281
        %p550 = pneg %p305
        %p551 = pneg %p302
        %p552 = pneg %p326
        %p553 = pneg %p323
        %p554 = pneg %p347
        %p555 = pneg %p344
        %p556 = pneg %p368
        %p557 = pneg %p365
        %p558 = pneg %p389
        %p559 = pneg %p386
        %p560 = pneg %p410
        %p561 = pneg %p407
        %p562 = pneg %p436
        %p563 = pneg %p433
        %s564 = sand.u32 %s423, 1
        %s565 = scalar_lea.sflag [#allocation3], %s564
        %s566 = sand.u32 %s423, 1
        %s567 = scalar_lea.vmem [#allocation2], %s566
        %p568 = scmp.lt.s32.totalorder %s32, 1
        %s569 = scalar_select %p568, %s32, 1
        %s570 = smul.addr %s569, 32
        %s571 = smul.addr %s570, 8
        %s572 = scalar_lea.vmem %s0, %s571
        %v573 = vld [vmem:[%s572] sm:$0xff]
        %v574 = vld [vmem:[%s572 + $0x8] sm:$0xff]
        %v575 = vld [vmem:[%s572 + $0x10] sm:$0xff]
        %v576 = vld [vmem:[%s572 + $0x18] sm:$0xff]
        %v577 = vld [vmem:[%s572 + $0x20] sm:$0xff]
        %v578 = vld [vmem:[%s572 + $0x28] sm:$0xff]
        %v579 = vld [vmem:[%s572 + $0x30] sm:$0xff]
        %v580 = vld [vmem:[%s572 + $0x38] sm:$0xff]
        %v581 = vld [vmem:[%s572 + $0x40] sm:$0xff]
        %v582 = vld [vmem:[%s572 + $0x48] sm:$0xff]
        %v583 = vld [vmem:[%s572 + $0x50] sm:$0xff]
        %v584 = vld [vmem:[%s572 + $0x58] sm:$0xff]
        %v585 = vld [vmem:[%s572 + $0x60] sm:$0xff]
        %v586 = vld [vmem:[%s572 + $0x68] sm:$0xff]
        %v587 = vld [vmem:[%s572 + $0x70] sm:$0xff]
        %v588 = vld [vmem:[%s572 + $0x78] sm:$0xff]
        %v589 = vld [vmem:[%s572 + $0x80] sm:$0xff]
        %v590 = vld [vmem:[%s572 + $0x88] sm:$0xff]
        %v591 = vld [vmem:[%s572 + $0x90] sm:$0xff]
        %v592 = vld [vmem:[%s572 + $0x98] sm:$0xff]
        %v593 = vld [vmem:[%s572 + $0xa0] sm:$0xff]
        %v594 = vld [vmem:[%s572 + $0xa8] sm:$0xff]
        %v595 = vld [vmem:[%s572 + $0xb0] sm:$0xff]
        %v596 = vld [vmem:[%s572 + $0xb8] sm:$0xff]
        %v597 = vld [vmem:[%s572 + $0xc0] sm:$0xff]
        %v598 = vld [vmem:[%s572 + $0xc8] sm:$0xff]
        %v599 = vld [vmem:[%s572 + $0xd0] sm:$0xff]
        %v600 = vld [vmem:[%s572 + $0xd8] sm:$0xff]
        %v601 = vld [vmem:[%s572 + $0xe0] sm:$0xff]
        %v602 = vld [vmem:[%s572 + $0xe8] sm:$0xff]
        %v603 = vld [vmem:[%s572 + $0xf0] sm:$0xff]
        %v604 = vld [vmem:[%s572 + $0xf8] sm:$0x1f]
        %v605 = vld [vmem:[%s1] sm:$0x1]
        %607 = vset.pattern.permute.xlu0 0
        %608 = vperm.xlu0 %607, %v573
        %v609 = vpop.permute.xlu0 %608
        %612 = vset.pattern.permute.xlu0 0
        %613 = vperm.xlu0 %612, %v574
        %v614 = vpop.permute.xlu0 %613
        %617 = vset.pattern.permute.xlu0 0
        %618 = vperm.xlu0 %617, %v575
        %v619 = vpop.permute.xlu0 %618
        %622 = vset.pattern.permute.xlu0 0
        %623 = vperm.xlu0 %622, %v576
        %v624 = vpop.permute.xlu0 %623
        %627 = vset.pattern.permute.xlu0 0
        %628 = vperm.xlu0 %627, %v577
        %v629 = vpop.permute.xlu0 %628
        %632 = vset.pattern.permute.xlu0 0
        %633 = vperm.xlu0 %632, %v578
        %v634 = vpop.permute.xlu0 %633
        %637 = vset.pattern.permute.xlu0 0
        %638 = vperm.xlu0 %637, %v579
        %v639 = vpop.permute.xlu0 %638
        %642 = vset.pattern.permute.xlu0 0
        %643 = vperm.xlu0 %642, %v580
        %v644 = vpop.permute.xlu0 %643
        %647 = vset.pattern.permute.xlu0 0
        %648 = vperm.xlu0 %647, %v581
        %v649 = vpop.permute.xlu0 %648
        %652 = vset.pattern.permute.xlu0 0
        %653 = vperm.xlu0 %652, %v582
        %v654 = vpop.permute.xlu0 %653
        %657 = vset.pattern.permute.xlu0 0
        %658 = vperm.xlu0 %657, %v583
        %v659 = vpop.permute.xlu0 %658
        %662 = vset.pattern.permute.xlu0 0
        %663 = vperm.xlu0 %662, %v584
        %v664 = vpop.permute.xlu0 %663
        %667 = vset.pattern.permute.xlu0 0
        %668 = vperm.xlu0 %667, %v585
        %v669 = vpop.permute.xlu0 %668
        %672 = vset.pattern.permute.xlu0 0
        %673 = vperm.xlu0 %672, %v586
        %v674 = vpop.permute.xlu0 %673
        %677 = vset.pattern.permute.xlu0 0
        %678 = vperm.xlu0 %677, %v587
        %v679 = vpop.permute.xlu0 %678
        %682 = vset.pattern.permute.xlu0 0
        %683 = vperm.xlu0 %682, %v588
        %v684 = vpop.permute.xlu0 %683
        %687 = vset.pattern.permute.xlu0 0
        %688 = vperm.xlu0 %687, %v589
        %v689 = vpop.permute.xlu0 %688
        %692 = vset.pattern.permute.xlu0 0
        %693 = vperm.xlu0 %692, %v590
        %v694 = vpop.permute.xlu0 %693
        %697 = vset.pattern.permute.xlu0 0
        %698 = vperm.xlu0 %697, %v591
        %v699 = vpop.permute.xlu0 %698
        %702 = vset.pattern.permute.xlu0 0
        %703 = vperm.xlu0 %702, %v592
        %v704 = vpop.permute.xlu0 %703
        %707 = vset.pattern.permute.xlu0 0
        %708 = vperm.xlu0 %707, %v593
        %v709 = vpop.permute.xlu0 %708
        %712 = vset.pattern.permute.xlu0 0
        %713 = vperm.xlu0 %712, %v594
        %v714 = vpop.permute.xlu0 %713
        %717 = vset.pattern.permute.xlu0 0
        %718 = vperm.xlu0 %717, %v595
        %v719 = vpop.permute.xlu0 %718
        %722 = vset.pattern.permute.xlu0 0
        %723 = vperm.xlu0 %722, %v596
        %v724 = vpop.permute.xlu0 %723
        %727 = vset.pattern.permute.xlu0 0
        %728 = vperm.xlu0 %727, %v597
        %v729 = vpop.permute.xlu0 %728
        %732 = vset.pattern.permute.xlu0 0
        %733 = vperm.xlu0 %732, %v598
        %v734 = vpop.permute.xlu0 %733
        %737 = vset.pattern.permute.xlu0 0
        %738 = vperm.xlu0 %737, %v599
        %v739 = vpop.permute.xlu0 %738
        %742 = vset.pattern.permute.xlu0 0
        %743 = vperm.xlu0 %742, %v600
        %v744 = vpop.permute.xlu0 %743
        %747 = vset.pattern.permute.xlu0 0
        %748 = vperm.xlu0 %747, %v601
        %v749 = vpop.permute.xlu0 %748
        %752 = vset.pattern.permute.xlu0 0
        %753 = vperm.xlu0 %752, %v602
        %v754 = vpop.permute.xlu0 %753
        %757 = vset.pattern.permute.xlu0 0
        %758 = vperm.xlu0 %757, %v603
        %v759 = vpop.permute.xlu0 %758
        %762 = vset.pattern.permute.xlu0 0
        %763 = vperm.xlu0 %762, %v604
        %v764 = vpop.permute.xlu0 %763
        %v766 = vperm.slane %v605, 0
        %v767 = vmul.f32 %v609, %v766
        %v768 = vmul.f32 %v614, %v766
        %v769 = vmul.f32 %v619, %v766
        %v770 = vmul.f32 %v624, %v766
        %v771 = vmul.f32 %v629, %v766
        %v772 = vmul.f32 %v634, %v766
        %v773 = vmul.f32 %v639, %v766
        %v774 = vmul.f32 %v644, %v766
        %v775 = vmul.f32 %v649, %v766
        %v776 = vmul.f32 %v654, %v766
        %v777 = vmul.f32 %v659, %v766
        %v778 = vmul.f32 %v664, %v766
        %v779 = vmul.f32 %v669, %v766
        %v780 = vmul.f32 %v674, %v766
        %v781 = vmul.f32 %v679, %v766
        %v782 = vmul.f32 %v684, %v766
        %v783 = vmul.f32 %v689, %v766
        %v784 = vmul.f32 %v694, %v766
        %v785 = vmul.f32 %v699, %v766
        %v786 = vmul.f32 %v704, %v766
        %v787 = vmul.f32 %v709, %v766
        %v788 = vmul.f32 %v714, %v766
        %v789 = vmul.f32 %v719, %v766
        %v790 = vmul.f32 %v724, %v766
        %v791 = vmul.f32 %v729, %v766
        %v792 = vmul.f32 %v734, %v766
        %v793 = vmul.f32 %v739, %v766
        %v794 = vmul.f32 %v744, %v766
        %v795 = vmul.f32 %v749, %v766
        %v796 = vmul.f32 %v754, %v766
        %v797 = vmul.f32 %v759, %v766
        %v798 = vmul.f32 %v764, %v766
        %v799 = vadd.f32 %v767, 0.0
        %v800 = vadd.f32 %v768, 0.0
        %v801 = vadd.f32 %v769, 0.0
        %v802 = vadd.f32 %v770, 0.0
        %v803 = vadd.f32 %v771, 0.0
        %v804 = vadd.f32 %v772, 0.0
        %v805 = vadd.f32 %v773, 0.0
        %v806 = vadd.f32 %v774, 0.0
        %v807 = vadd.f32 %v775, 0.0
        %v808 = vadd.f32 %v776, 0.0
        %v809 = vadd.f32 %v777, 0.0
        %v810 = vadd.f32 %v778, 0.0
        %v811 = vadd.f32 %v779, 0.0
        %v812 = vadd.f32 %v780, 0.0
        %v813 = vadd.f32 %v781, 0.0
        %v814 = vadd.f32 %v782, 0.0
        %v815 = vadd.f32 %v783, 0.0
        %v816 = vadd.f32 %v784, 0.0
        %v817 = vadd.f32 %v785, 0.0
        %v818 = vadd.f32 %v786, 0.0
        %v819 = vadd.f32 %v787, 0.0
        %v820 = vadd.f32 %v788, 0.0
        %v821 = vadd.f32 %v789, 0.0
        %v822 = vadd.f32 %v790, 0.0
        %v823 = vadd.f32 %v791, 0.0
        %v824 = vadd.f32 %v792, 0.0
        %v825 = vadd.f32 %v793, 0.0
        %v826 = vadd.f32 %v794, 0.0
        %v827 = vadd.f32 %v795, 0.0
        %v828 = vadd.f32 %v796, 0.0
        %v829 = vadd.f32 %v797, 0.0
        %v830 = vadd.f32 %v798, 0.0
        %v831 = vld [vmem:[%s1 + $0x1] sm:$0x1]
        %832 = vset.pattern.permute.xlu0 2
        %833 = vperm.xlu0 %832, %v573
        %v834 = vpop.permute.xlu0 %833
        %836 = vset.pattern.permute.xlu0 2
        %837 = vperm.xlu0 %836, %v574
        %v838 = vpop.permute.xlu0 %837
        %840 = vset.pattern.permute.xlu0 2
        %841 = vperm.xlu0 %840, %v575
        %v842 = vpop.permute.xlu0 %841
        %844 = vset.pattern.permute.xlu0 2
        %845 = vperm.xlu0 %844, %v576
        %v846 = vpop.permute.xlu0 %845
        %848 = vset.pattern.permute.xlu0 2
        %849 = vperm.xlu0 %848, %v577
        %v850 = vpop.permute.xlu0 %849
        %852 = vset.pattern.permute.xlu0 2
        %853 = vperm.xlu0 %852, %v578
        %v854 = vpop.permute.xlu0 %853
        %856 = vset.pattern.permute.xlu0 2
        %857 = vperm.xlu0 %856, %v579
        %v858 = vpop.permute.xlu0 %857
        %860 = vset.pattern.permute.xlu0 2
        %861 = vperm.xlu0 %860, %v580
        %v862 = vpop.permute.xlu0 %861
        %864 = vset.pattern.permute.xlu0 2
        %865 = vperm.xlu0 %864, %v581
        %v866 = vpop.permute.xlu0 %865
        %868 = vset.pattern.permute.xlu0 2
        %869 = vperm.xlu0 %868, %v582
        %v870 = vpop.permute.xlu0 %869
        %872 = vset.pattern.permute.xlu0 2
        %873 = vperm.xlu0 %872, %v583
        %v874 = vpop.permute.xlu0 %873
        %876 = vset.pattern.permute.xlu0 2
        %877 = vperm.xlu0 %876, %v584
        %v878 = vpop.permute.xlu0 %877
        %880 = vset.pattern.permute.xlu0 2
        %881 = vperm.xlu0 %880, %v585
        %v882 = vpop.permute.xlu0 %881
        %884 = vset.pattern.permute.xlu0 2
        %885 = vperm.xlu0 %884, %v586
        %v886 = vpop.permute.xlu0 %885
        %888 = vset.pattern.permute.xlu0 2
        %889 = vperm.xlu0 %888, %v587
        %v890 = vpop.permute.xlu0 %889
        %892 = vset.pattern.permute.xlu0 2
        %893 = vperm.xlu0 %892, %v588
        %v894 = vpop.permute.xlu0 %893
        %896 = vset.pattern.permute.xlu0 2
        %897 = vperm.xlu0 %896, %v589
        %v898 = vpop.permute.xlu0 %897
        %900 = vset.pattern.permute.xlu0 2
        %901 = vperm.xlu0 %900, %v590
        %v902 = vpop.permute.xlu0 %901
        %904 = vset.pattern.permute.xlu0 2
        %905 = vperm.xlu0 %904, %v591
        %v906 = vpop.permute.xlu0 %905
        %908 = vset.pattern.permute.xlu0 2
        %909 = vperm.xlu0 %908, %v592
        %v910 = vpop.permute.xlu0 %909
        %912 = vset.pattern.permute.xlu0 2
        %913 = vperm.xlu0 %912, %v593
        %v914 = vpop.permute.xlu0 %913
        %916 = vset.pattern.permute.xlu0 2
        %917 = vperm.xlu0 %916, %v594
        %v918 = vpop.permute.xlu0 %917
        %920 = vset.pattern.permute.xlu0 2
        %921 = vperm.xlu0 %920, %v595
        %v922 = vpop.permute.xlu0 %921
        %924 = vset.pattern.permute.xlu0 2
        %925 = vperm.xlu0 %924, %v596
        %v926 = vpop.permute.xlu0 %925
        %928 = vset.pattern.permute.xlu0 2
        %929 = vperm.xlu0 %928, %v597
        %v930 = vpop.permute.xlu0 %929
        %932 = vset.pattern.permute.xlu0 2
        %933 = vperm.xlu0 %932, %v598
        %v934 = vpop.permute.xlu0 %933
        %936 = vset.pattern.permute.xlu0 2
        %937 = vperm.xlu0 %936, %v599
        %v938 = vpop.permute.xlu0 %937
        %940 = vset.pattern.permute.xlu0 2
        %941 = vperm.xlu0 %940, %v600
        %v942 = vpop.permute.xlu0 %941
        %944 = vset.pattern.permute.xlu0 2
        %945 = vperm.xlu0 %944, %v601
        %v946 = vpop.permute.xlu0 %945
        %948 = vset.pattern.permute.xlu0 2
        %949 = vperm.xlu0 %948, %v602
        %v950 = vpop.permute.xlu0 %949
        %952 = vset.pattern.permute.xlu0 2
        %953 = vperm.xlu0 %952, %v603
        %v954 = vpop.permute.xlu0 %953
        %956 = vset.pattern.permute.xlu0 2
        %957 = vperm.xlu0 %956, %v604
        %v958 = vpop.permute.xlu0 %957
        %v960 = vperm.slane %v831, 0
        %v961 = vmul.f32 %v834, %v960
        %v962 = vmul.f32 %v838, %v960
        %v963 = vmul.f32 %v842, %v960
        %v964 = vmul.f32 %v846, %v960
        %v965 = vmul.f32 %v850, %v960
        %v966 = vmul.f32 %v854, %v960
        %v967 = vmul.f32 %v858, %v960
        %v968 = vmul.f32 %v862, %v960
        %v969 = vmul.f32 %v866, %v960
        %v970 = vmul.f32 %v870, %v960
        %v971 = vmul.f32 %v874, %v960
        %v972 = vmul.f32 %v878, %v960
        %v973 = vmul.f32 %v882, %v960
        %v974 = vmul.f32 %v886, %v960
        %v975 = vmul.f32 %v890, %v960
        %v976 = vmul.f32 %v894, %v960
        %v977 = vmul.f32 %v898, %v960
        %v978 = vmul.f32 %v902, %v960
        %v979 = vmul.f32 %v906, %v960
        %v980 = vmul.f32 %v910, %v960
        %v981 = vmul.f32 %v914, %v960
        %v982 = vmul.f32 %v918, %v960
        %v983 = vmul.f32 %v922, %v960
        %v984 = vmul.f32 %v926, %v960
        %v985 = vmul.f32 %v930, %v960
        %v986 = vmul.f32 %v934, %v960
        %v987 = vmul.f32 %v938, %v960
        %v988 = vmul.f32 %v942, %v960
        %v989 = vmul.f32 %v946, %v960
        %v990 = vmul.f32 %v950, %v960
        %v991 = vmul.f32 %v954, %v960
        %v992 = vmul.f32 %v958, %v960
        %v993 = vadd.f32 %v799, %v961
        %v994 = vadd.f32 %v800, %v962
        %v995 = vadd.f32 %v801, %v963
        %v996 = vadd.f32 %v802, %v964
        %v997 = vadd.f32 %v803, %v965
        %v998 = vadd.f32 %v804, %v966
        %v999 = vadd.f32 %v805, %v967
        %v1000 = vadd.f32 %v806, %v968
        %v1001 = vadd.f32 %v807, %v969
        %v1002 = vadd.f32 %v808, %v970
        %v1003 = vadd.f32 %v809, %v971
        %v1004 = vadd.f32 %v810, %v972
        %v1005 = vadd.f32 %v811, %v973
        %v1006 = vadd.f32 %v812, %v974
        %v1007 = vadd.f32 %v813, %v975
        %v1008 = vadd.f32 %v814, %v976
        %v1009 = vadd.f32 %v815, %v977
        %v1010 = vadd.f32 %v816, %v978
        %v1011 = vadd.f32 %v817, %v979
        %v1012 = vadd.f32 %v818, %v980
        %v1013 = vadd.f32 %v819, %v981
        %v1014 = vadd.f32 %v820, %v982
        %v1015 = vadd.f32 %v821, %v983
        %v1016 = vadd.f32 %v822, %v984
        %v1017 = vadd.f32 %v823, %v985
        %v1018 = vadd.f32 %v824, %v986
        %v1019 = vadd.f32 %v825, %v987
        %v1020 = vadd.f32 %v826, %v988
        %v1021 = vadd.f32 %v827, %v989
        %v1022 = vadd.f32 %v828, %v990
        %v1023 = vadd.f32 %v829, %v991
        %v1024 = vadd.f32 %v830, %v992
        %v1025 = vld [vmem:[%s572 + $0x1] sm:$0xff]
        %v1026 = vld [vmem:[%s572 + $0x9] sm:$0xff]
        %v1027 = vld [vmem:[%s572 + $0x11] sm:$0xff]
        %v1028 = vld [vmem:[%s572 + $0x19] sm:$0xff]
        %v1029 = vld [vmem:[%s572 + $0x21] sm:$0xff]
        %v1030 = vld [vmem:[%s572 + $0x29] sm:$0xff]
        %v1031 = vld [vmem:[%s572 + $0x31] sm:$0xff]
        %v1032 = vld [vmem:[%s572 + $0x39] sm:$0xff]
        %v1033 = vld [vmem:[%s572 + $0x41] sm:$0xff]
        %v1034 = vld [vmem:[%s572 + $0x49] sm:$0xff]
        %v1035 = vld [vmem:[%s572 + $0x51] sm:$0xff]
        %v1036 = vld [vmem:[%s572 + $0x59] sm:$0xff]
        %v1037 = vld [vmem:[%s572 + $0x61] sm:$0xff]
        %v1038 = vld [vmem:[%s572 + $0x69] sm:$0xff]
        %v1039 = vld [vmem:[%s572 + $0x71] sm:$0xff]
        %v1040 = vld [vmem:[%s572 + $0x79] sm:$0xff]
        %v1041 = vld [vmem:[%s572 + $0x81] sm:$0xff]
        %v1042 = vld [vmem:[%s572 + $0x89] sm:$0xff]
        %v1043 = vld [vmem:[%s572 + $0x91] sm:$0xff]
        %v1044 = vld [vmem:[%s572 + $0x99] sm:$0xff]
        %v1045 = vld [vmem:[%s572 + $0xa1] sm:$0xff]
        %v1046 = vld [vmem:[%s572 + $0xa9] sm:$0xff]
        %v1047 = vld [vmem:[%s572 + $0xb1] sm:$0xff]
        %v1048 = vld [vmem:[%s572 + $0xb9] sm:$0xff]
        %v1049 = vld [vmem:[%s572 + $0xc1] sm:$0xff]
        %v1050 = vld [vmem:[%s572 + $0xc9] sm:$0xff]
        %v1051 = vld [vmem:[%s572 + $0xd1] sm:$0xff]
        %v1052 = vld [vmem:[%s572 + $0xd9] sm:$0xff]
        %v1053 = vld [vmem:[%s572 + $0xe1] sm:$0xff]
        %v1054 = vld [vmem:[%s572 + $0xe9] sm:$0xff]
        %v1055 = vld [vmem:[%s572 + $0xf1] sm:$0xff]
        %v1056 = vld [vmem:[%s572 + $0xf9] sm:$0x1f]
        %v1057 = vld [vmem:[%s1 + $0x2] sm:$0x1]
        %1059 = vset.pattern.permute.xlu0 0
        %1060 = vperm.xlu0 %1059, %v1025
        %v1061 = vpop.permute.xlu0 %1060
        %1064 = vset.pattern.permute.xlu0 0
        %1065 = vperm.xlu0 %1064, %v1026
        %v1066 = vpop.permute.xlu0 %1065
        %1069 = vset.pattern.permute.xlu0 0
        %1070 = vperm.xlu0 %1069, %v1027
        %v1071 = vpop.permute.xlu0 %1070
        %1074 = vset.pattern.permute.xlu0 0
        %1075 = vperm.xlu0 %1074, %v1028
        %v1076 = vpop.permute.xlu0 %1075
        %1079 = vset.pattern.permute.xlu0 0
        %1080 = vperm.xlu0 %1079, %v1029
        %v1081 = vpop.permute.xlu0 %1080
        %1084 = vset.pattern.permute.xlu0 0
        %1085 = vperm.xlu0 %1084, %v1030
        %v1086 = vpop.permute.xlu0 %1085
        %1089 = vset.pattern.permute.xlu0 0
        %1090 = vperm.xlu0 %1089, %v1031
        %v1091 = vpop.permute.xlu0 %1090
        %1094 = vset.pattern.permute.xlu0 0
        %1095 = vperm.xlu0 %1094, %v1032
        %v1096 = vpop.permute.xlu0 %1095
        %1099 = vset.pattern.permute.xlu0 0
        %1100 = vperm.xlu0 %1099, %v1033
        %v1101 = vpop.permute.xlu0 %1100
        %1104 = vset.pattern.permute.xlu0 0
        %1105 = vperm.xlu0 %1104, %v1034
        %v1106 = vpop.permute.xlu0 %1105
        %1109 = vset.pattern.permute.xlu0 0
        %1110 = vperm.xlu0 %1109, %v1035
        %v1111 = vpop.permute.xlu0 %1110
        %1114 = vset.pattern.permute.xlu0 0
        %1115 = vperm.xlu0 %1114, %v1036
        %v1116 = vpop.permute.xlu0 %1115
        %1119 = vset.pattern.permute.xlu0 0
        %1120 = vperm.xlu0 %1119, %v1037
        %v1121 = vpop.permute.xlu0 %1120
        %1124 = vset.pattern.permute.xlu0 0
        %1125 = vperm.xlu0 %1124, %v1038
        %v1126 = vpop.permute.xlu0 %1125
        %1129 = vset.pattern.permute.xlu0 0
        %1130 = vperm.xlu0 %1129, %v1039
        %v1131 = vpop.permute.xlu0 %1130
        %1134 = vset.pattern.permute.xlu0 0
        %1135 = vperm.xlu0 %1134, %v1040
        %v1136 = vpop.permute.xlu0 %1135
        %1139 = vset.pattern.permute.xlu0 0
        %1140 = vperm.xlu0 %1139, %v1041
        %v1141 = vpop.permute.xlu0 %1140
        %1144 = vset.pattern.permute.xlu0 0
        %1145 = vperm.xlu0 %1144, %v1042
        %v1146 = vpop.permute.xlu0 %1145
        %1149 = vset.pattern.permute.xlu0 0
        %1150 = vperm.xlu0 %1149, %v1043
        %v1151 = vpop.permute.xlu0 %1150
        %1154 = vset.pattern.permute.xlu0 0
        %1155 = vperm.xlu0 %1154, %v1044
        %v1156 = vpop.permute.xlu0 %1155
        %1159 = vset.pattern.permute.xlu0 0
        %1160 = vperm.xlu0 %1159, %v1045
        %v1161 = vpop.permute.xlu0 %1160
        %1164 = vset.pattern.permute.xlu0 0
        %1165 = vperm.xlu0 %1164, %v1046
        %v1166 = vpop.permute.xlu0 %1165
        %1169 = vset.pattern.permute.xlu0 0
        %1170 = vperm.xlu0 %1169, %v1047
        %v1171 = vpop.permute.xlu0 %1170
        %1174 = vset.pattern.permute.xlu0 0
        %1175 = vperm.xlu0 %1174, %v1048
        %v1176 = vpop.permute.xlu0 %1175
        %1179 = vset.pattern.permute.xlu0 0
        %1180 = vperm.xlu0 %1179, %v1049
        %v1181 = vpop.permute.xlu0 %1180
        %1184 = vset.pattern.permute.xlu0 0
        %1185 = vperm.xlu0 %1184, %v1050
        %v1186 = vpop.permute.xlu0 %1185
        %1189 = vset.pattern.permute.xlu0 0
        %1190 = vperm.xlu0 %1189, %v1051
        %v1191 = vpop.permute.xlu0 %1190
        %1194 = vset.pattern.permute.xlu0 0
        %1195 = vperm.xlu0 %1194, %v1052
        %v1196 = vpop.permute.xlu0 %1195
        %1199 = vset.pattern.permute.xlu0 0
        %1200 = vperm.xlu0 %1199, %v1053
        %v1201 = vpop.permute.xlu0 %1200
        %1204 = vset.pattern.permute.xlu0 0
        %1205 = vperm.xlu0 %1204, %v1054
        %v1206 = vpop.permute.xlu0 %1205
        %1209 = vset.pattern.permute.xlu0 0
        %1210 = vperm.xlu0 %1209, %v1055
        %v1211 = vpop.permute.xlu0 %1210
        %1214 = vset.pattern.permute.xlu0 0
        %1215 = vperm.xlu0 %1214, %v1056
        %v1216 = vpop.permute.xlu0 %1215
        %v1218 = vperm.slane %v1057, 0
        %v1219 = vmul.f32 %v1061, %v1218
        %v1220 = vmul.f32 %v1066, %v1218
        %v1221 = vmul.f32 %v1071, %v1218
        %v1222 = vmul.f32 %v1076, %v1218
        %v1223 = vmul.f32 %v1081, %v1218
        %v1224 = vmul.f32 %v1086, %v1218
        %v1225 = vmul.f32 %v1091, %v1218
        %v1226 = vmul.f32 %v1096, %v1218
        %v1227 = vmul.f32 %v1101, %v1218
        %v1228 = vmul.f32 %v1106, %v1218
        %v1229 = vmul.f32 %v1111, %v1218
        %v1230 = vmul.f32 %v1116, %v1218
        %v1231 = vmul.f32 %v1121, %v1218
        %v1232 = vmul.f32 %v1126, %v1218
        %v1233 = vmul.f32 %v1131, %v1218
        %v1234 = vmul.f32 %v1136, %v1218
        %v1235 = vmul.f32 %v1141, %v1218
        %v1236 = vmul.f32 %v1146, %v1218
        %v1237 = vmul.f32 %v1151, %v1218
        %v1238 = vmul.f32 %v1156, %v1218
        %v1239 = vmul.f32 %v1161, %v1218
        %v1240 = vmul.f32 %v1166, %v1218
        %v1241 = vmul.f32 %v1171, %v1218
        %v1242 = vmul.f32 %v1176, %v1218
        %v1243 = vmul.f32 %v1181, %v1218
        %v1244 = vmul.f32 %v1186, %v1218
        %v1245 = vmul.f32 %v1191, %v1218
        %v1246 = vmul.f32 %v1196, %v1218
        %v1247 = vmul.f32 %v1201, %v1218
        %v1248 = vmul.f32 %v1206, %v1218
        %v1249 = vmul.f32 %v1211, %v1218
        %v1250 = vmul.f32 %v1216, %v1218
        %v1251 = vadd.f32 %v993, %v1219
        %v1252 = vadd.f32 %v994, %v1220
        %v1253 = vadd.f32 %v995, %v1221
        %v1254 = vadd.f32 %v996, %v1222
        %v1255 = vadd.f32 %v997, %v1223
        %v1256 = vadd.f32 %v998, %v1224
        %v1257 = vadd.f32 %v999, %v1225
        %v1258 = vadd.f32 %v1000, %v1226
        %v1259 = vadd.f32 %v1001, %v1227
        %v1260 = vadd.f32 %v1002, %v1228
        %v1261 = vadd.f32 %v1003, %v1229
        %v1262 = vadd.f32 %v1004, %v1230
        %v1263 = vadd.f32 %v1005, %v1231
        %v1264 = vadd.f32 %v1006, %v1232
        %v1265 = vadd.f32 %v1007, %v1233
        %v1266 = vadd.f32 %v1008, %v1234
        %v1267 = vadd.f32 %v1009, %v1235
        %v1268 = vadd.f32 %v1010, %v1236
        %v1269 = vadd.f32 %v1011, %v1237
        %v1270 = vadd.f32 %v1012, %v1238
        %v1271 = vadd.f32 %v1013, %v1239
        %v1272 = vadd.f32 %v1014, %v1240
        %v1273 = vadd.f32 %v1015, %v1241
        %v1274 = vadd.f32 %v1016, %v1242
        %v1275 = vadd.f32 %v1017, %v1243
        %v1276 = vadd.f32 %v1018, %v1244
        %v1277 = vadd.f32 %v1019, %v1245
        %v1278 = vadd.f32 %v1020, %v1246
        %v1279 = vadd.f32 %v1021, %v1247
        %v1280 = vadd.f32 %v1022, %v1248
        %v1281 = vadd.f32 %v1023, %v1249
        %v1282 = vadd.f32 %v1024, %v1250
        %v1283 = vld [vmem:[%s1 + $0x3] sm:$0x1]
        %1284 = vset.pattern.permute.xlu0 2
        %1285 = vperm.xlu0 %1284, %v1025
        %v1286 = vpop.permute.xlu0 %1285
        %1288 = vset.pattern.permute.xlu0 2
        %1289 = vperm.xlu0 %1288, %v1026
        %v1290 = vpop.permute.xlu0 %1289
        %1292 = vset.pattern.permute.xlu0 2
        %1293 = vperm.xlu0 %1292, %v1027
        %v1294 = vpop.permute.xlu0 %1293
        %1296 = vset.pattern.permute.xlu0 2
        %1297 = vperm.xlu0 %1296, %v1028
        %v1298 = vpop.permute.xlu0 %1297
        %1300 = vset.pattern.permute.xlu0 2
        %1301 = vperm.xlu0 %1300, %v1029
        %v1302 = vpop.permute.xlu0 %1301
        %1304 = vset.pattern.permute.xlu0 2
        %1305 = vperm.xlu0 %1304, %v1030
        %v1306 = vpop.permute.xlu0 %1305
        %1308 = vset.pattern.permute.xlu0 2
        %1309 = vperm.xlu0 %1308, %v1031
        %v1310 = vpop.permute.xlu0 %1309
        %1312 = vset.pattern.permute.xlu0 2
        %1313 = vperm.xlu0 %1312, %v1032
        %v1314 = vpop.permute.xlu0 %1313
        %1316 = vset.pattern.permute.xlu0 2
        %1317 = vperm.xlu0 %1316, %v1033
        %v1318 = vpop.permute.xlu0 %1317
        %1320 = vset.pattern.permute.xlu0 2
        %1321 = vperm.xlu0 %1320, %v1034
        %v1322 = vpop.permute.xlu0 %1321
        %1324 = vset.pattern.permute.xlu0 2
        %1325 = vperm.xlu0 %1324, %v1035
        %v1326 = vpop.permute.xlu0 %1325
        %1328 = vset.pattern.permute.xlu0 2
        %1329 = vperm.xlu0 %1328, %v1036
        %v1330 = vpop.permute.xlu0 %1329
        %1332 = vset.pattern.permute.xlu0 2
        %1333 = vperm.xlu0 %1332, %v1037
        %v1334 = vpop.permute.xlu0 %1333
        %1336 = vset.pattern.permute.xlu0 2
        %1337 = vperm.xlu0 %1336, %v1038
        %v1338 = vpop.permute.xlu0 %1337
        %1340 = vset.pattern.permute.xlu0 2
        %1341 = vperm.xlu0 %1340, %v1039
        %v1342 = vpop.permute.xlu0 %1341
        %1344 = vset.pattern.permute.xlu0 2
        %1345 = vperm.xlu0 %1344, %v1040
        %v1346 = vpop.permute.xlu0 %1345
        %1348 = vset.pattern.permute.xlu0 2
        %1349 = vperm.xlu0 %1348, %v1041
        %v1350 = vpop.permute.xlu0 %1349
        %1352 = vset.pattern.permute.xlu0 2
        %1353 = vperm.xlu0 %1352, %v1042
        %v1354 = vpop.permute.xlu0 %1353
        %1356 = vset.pattern.permute.xlu0 2
        %1357 = vperm.xlu0 %1356, %v1043
        %v1358 = vpop.permute.xlu0 %1357
        %1360 = vset.pattern.permute.xlu0 2
        %1361 = vperm.xlu0 %1360, %v1044
        %v1362 = vpop.permute.xlu0 %1361
        %1364 = vset.pattern.permute.xlu0 2
        %1365 = vperm.xlu0 %1364, %v1045
        %v1366 = vpop.permute.xlu0 %1365
        %1368 = vset.pattern.permute.xlu0 2
        %1369 = vperm.xlu0 %1368, %v1046
        %v1370 = vpop.permute.xlu0 %1369
        %1372 = vset.pattern.permute.xlu0 2
        %1373 = vperm.xlu0 %1372, %v1047
        %v1374 = vpop.permute.xlu0 %1373
        %1376 = vset.pattern.permute.xlu0 2
        %1377 = vperm.xlu0 %1376, %v1048
        %v1378 = vpop.permute.xlu0 %1377
        %1380 = vset.pattern.permute.xlu0 2
        %1381 = vperm.xlu0 %1380, %v1049
        %v1382 = vpop.permute.xlu0 %1381
        %1384 = vset.pattern.permute.xlu0 2
        %1385 = vperm.xlu0 %1384, %v1050
        %v1386 = vpop.permute.xlu0 %1385
        %1388 = vset.pattern.permute.xlu0 2
        %1389 = vperm.xlu0 %1388, %v1051
        %v1390 = vpop.permute.xlu0 %1389
        %1392 = vset.pattern.permute.xlu0 2
        %1393 = vperm.xlu0 %1392, %v1052
        %v1394 = vpop.permute.xlu0 %1393
        %1396 = vset.pattern.permute.xlu0 2
        %1397 = vperm.xlu0 %1396, %v1053
        %v1398 = vpop.permute.xlu0 %1397
        %1400 = vset.pattern.permute.xlu0 2
        %1401 = vperm.xlu0 %1400, %v1054
        %v1402 = vpop.permute.xlu0 %1401
        %1404 = vset.pattern.permute.xlu0 2
        %1405 = vperm.xlu0 %1404, %v1055
        %v1406 = vpop.permute.xlu0 %1405
        %1408 = vset.pattern.permute.xlu0 2
        %1409 = vperm.xlu0 %1408, %v1056
        %v1410 = vpop.permute.xlu0 %1409
        %v1412 = vperm.slane %v1283, 0
        %v1413 = vmul.f32 %v1286, %v1412
        %v1414 = vmul.f32 %v1290, %v1412
        %v1415 = vmul.f32 %v1294, %v1412
        %v1416 = vmul.f32 %v1298, %v1412
        %v1417 = vmul.f32 %v1302, %v1412
        %v1418 = vmul.f32 %v1306, %v1412
        %v1419 = vmul.f32 %v1310, %v1412
        %v1420 = vmul.f32 %v1314, %v1412
        %v1421 = vmul.f32 %v1318, %v1412
        %v1422 = vmul.f32 %v1322, %v1412
        %v1423 = vmul.f32 %v1326, %v1412
        %v1424 = vmul.f32 %v1330, %v1412
        %v1425 = vmul.f32 %v1334, %v1412
        %v1426 = vmul.f32 %v1338, %v1412
        %v1427 = vmul.f32 %v1342, %v1412
        %v1428 = vmul.f32 %v1346, %v1412
        %v1429 = vmul.f32 %v1350, %v1412
        %v1430 = vmul.f32 %v1354, %v1412
        %v1431 = vmul.f32 %v1358, %v1412
        %v1432 = vmul.f32 %v1362, %v1412
        %v1433 = vmul.f32 %v1366, %v1412
        %v1434 = vmul.f32 %v1370, %v1412
        %v1435 = vmul.f32 %v1374, %v1412
        %v1436 = vmul.f32 %v1378, %v1412
        %v1437 = vmul.f32 %v1382, %v1412
        %v1438 = vmul.f32 %v1386, %v1412
        %v1439 = vmul.f32 %v1390, %v1412
        %v1440 = vmul.f32 %v1394, %v1412
        %v1441 = vmul.f32 %v1398, %v1412
        %v1442 = vmul.f32 %v1402, %v1412
        %v1443 = vmul.f32 %v1406, %v1412
        %v1444 = vmul.f32 %v1410, %v1412
        %v1445 = vadd.f32 %v1251, %v1413
        %v1446 = vadd.f32 %v1252, %v1414
        %v1447 = vadd.f32 %v1253, %v1415
        %v1448 = vadd.f32 %v1254, %v1416
        %v1449 = vadd.f32 %v1255, %v1417
        %v1450 = vadd.f32 %v1256, %v1418
        %v1451 = vadd.f32 %v1257, %v1419
        %v1452 = vadd.f32 %v1258, %v1420
        %v1453 = vadd.f32 %v1259, %v1421
        %v1454 = vadd.f32 %v1260, %v1422
        %v1455 = vadd.f32 %v1261, %v1423
        %v1456 = vadd.f32 %v1262, %v1424
        %v1457 = vadd.f32 %v1263, %v1425
        %v1458 = vadd.f32 %v1264, %v1426
        %v1459 = vadd.f32 %v1265, %v1427
        %v1460 = vadd.f32 %v1266, %v1428
        %v1461 = vadd.f32 %v1267, %v1429
        %v1462 = vadd.f32 %v1268, %v1430
        %v1463 = vadd.f32 %v1269, %v1431
        %v1464 = vadd.f32 %v1270, %v1432
        %v1465 = vadd.f32 %v1271, %v1433
        %v1466 = vadd.f32 %v1272, %v1434
        %v1467 = vadd.f32 %v1273, %v1435
        %v1468 = vadd.f32 %v1274, %v1436
        %v1469 = vadd.f32 %v1275, %v1437
        %v1470 = vadd.f32 %v1276, %v1438
        %v1471 = vadd.f32 %v1277, %v1439
        %v1472 = vadd.f32 %v1278, %v1440
        %v1473 = vadd.f32 %v1279, %v1441
        %v1474 = vadd.f32 %v1280, %v1442
        %v1475 = vadd.f32 %v1281, %v1443
        %v1476 = vadd.f32 %v1282, %v1444
        %v1477 = vld [vmem:[%s572 + $0x2] sm:$0xff]
        %v1478 = vld [vmem:[%s572 + $0xa] sm:$0xff]
        %v1479 = vld [vmem:[%s572 + $0x12] sm:$0xff]
        %v1480 = vld [vmem:[%s572 + $0x1a] sm:$0xff]
        %v1481 = vld [vmem:[%s572 + $0x22] sm:$0xff]
        %v1482 = vld [vmem:[%s572 + $0x2a] sm:$0xff]
        %v1483 = vld [vmem:[%s572 + $0x32] sm:$0xff]
        %v1484 = vld [vmem:[%s572 + $0x3a] sm:$0xff]
        %v1485 = vld [vmem:[%s572 + $0x42] sm:$0xff]
        %v1486 = vld [vmem:[%s572 + $0x4a] sm:$0xff]
        %v1487 = vld [vmem:[%s572 + $0x52] sm:$0xff]
        %v1488 = vld [vmem:[%s572 + $0x5a] sm:$0xff]
        %v1489 = vld [vmem:[%s572 + $0x62] sm:$0xff]
        %v1490 = vld [vmem:[%s572 + $0x6a] sm:$0xff]
        %v1491 = vld [vmem:[%s572 + $0x72] sm:$0xff]
        %v1492 = vld [vmem:[%s572 + $0x7a] sm:$0xff]
        %v1493 = vld [vmem:[%s572 + $0x82] sm:$0xff]
        %v1494 = vld [vmem:[%s572 + $0x8a] sm:$0xff]
        %v1495 = vld [vmem:[%s572 + $0x92] sm:$0xff]
        %v1496 = vld [vmem:[%s572 + $0x9a] sm:$0xff]
        %v1497 = vld [vmem:[%s572 + $0xa2] sm:$0xff]
        %v1498 = vld [vmem:[%s572 + $0xaa] sm:$0xff]
        %v1499 = vld [vmem:[%s572 + $0xb2] sm:$0xff]
        %v1500 = vld [vmem:[%s572 + $0xba] sm:$0xff]
        %v1501 = vld [vmem:[%s572 + $0xc2] sm:$0xff]
        %v1502 = vld [vmem:[%s572 + $0xca] sm:$0xff]
        %v1503 = vld [vmem:[%s572 + $0xd2] sm:$0xff]
        %v1504 = vld [vmem:[%s572 + $0xda] sm:$0xff]
        %v1505 = vld [vmem:[%s572 + $0xe2] sm:$0xff]
        %v1506 = vld [vmem:[%s572 + $0xea] sm:$0xff]
        %v1507 = vld [vmem:[%s572 + $0xf2] sm:$0xff]
        %v1508 = vld [vmem:[%s572 + $0xfa] sm:$0x1f]
        %v1509 = vld [vmem:[%s1 + $0x4] sm:$0x1]
        %1511 = vset.pattern.permute.xlu0 0
        %1512 = vperm.xlu0 %1511, %v1477
        %v1513 = vpop.permute.xlu0 %1512
        %1516 = vset.pattern.permute.xlu0 0
        %1517 = vperm.xlu0 %1516, %v1478
        %v1518 = vpop.permute.xlu0 %1517
        %1521 = vset.pattern.permute.xlu0 0
        %1522 = vperm.xlu0 %1521, %v1479
        %v1523 = vpop.permute.xlu0 %1522
        %1526 = vset.pattern.permute.xlu0 0
        %1527 = vperm.xlu0 %1526, %v1480
        %v1528 = vpop.permute.xlu0 %1527
        %1531 = vset.pattern.permute.xlu0 0
        %1532 = vperm.xlu0 %1531, %v1481
        %v1533 = vpop.permute.xlu0 %1532
        %1536 = vset.pattern.permute.xlu0 0
        %1537 = vperm.xlu0 %1536, %v1482
        %v1538 = vpop.permute.xlu0 %1537
        %1541 = vset.pattern.permute.xlu0 0
        %1542 = vperm.xlu0 %1541, %v1483
        %v1543 = vpop.permute.xlu0 %1542
        %1546 = vset.pattern.permute.xlu0 0
        %1547 = vperm.xlu0 %1546, %v1484
        %v1548 = vpop.permute.xlu0 %1547
        %1551 = vset.pattern.permute.xlu0 0
        %1552 = vperm.xlu0 %1551, %v1485
        %v1553 = vpop.permute.xlu0 %1552
        %1556 = vset.pattern.permute.xlu0 0
        %1557 = vperm.xlu0 %1556, %v1486
        %v1558 = vpop.permute.xlu0 %1557
        %1561 = vset.pattern.permute.xlu0 0
        %1562 = vperm.xlu0 %1561, %v1487
        %v1563 = vpop.permute.xlu0 %1562
        %1566 = vset.pattern.permute.xlu0 0
        %1567 = vperm.xlu0 %1566, %v1488
        %v1568 = vpop.permute.xlu0 %1567
        %1571 = vset.pattern.permute.xlu0 0
        %1572 = vperm.xlu0 %1571, %v1489
        %v1573 = vpop.permute.xlu0 %1572
        %1576 = vset.pattern.permute.xlu0 0
        %1577 = vperm.xlu0 %1576, %v1490
        %v1578 = vpop.permute.xlu0 %1577
        %1581 = vset.pattern.permute.xlu0 0
        %1582 = vperm.xlu0 %1581, %v1491
        %v1583 = vpop.permute.xlu0 %1582
        %1586 = vset.pattern.permute.xlu0 0
        %1587 = vperm.xlu0 %1586, %v1492
        %v1588 = vpop.permute.xlu0 %1587
        %1591 = vset.pattern.permute.xlu0 0
        %1592 = vperm.xlu0 %1591, %v1493
        %v1593 = vpop.permute.xlu0 %1592
        %1596 = vset.pattern.permute.xlu0 0
        %1597 = vperm.xlu0 %1596, %v1494
        %v1598 = vpop.permute.xlu0 %1597
        %1601 = vset.pattern.permute.xlu0 0
        %1602 = vperm.xlu0 %1601, %v1495
        %v1603 = vpop.permute.xlu0 %1602
        %1606 = vset.pattern.permute.xlu0 0
        %1607 = vperm.xlu0 %1606, %v1496
        %v1608 = vpop.permute.xlu0 %1607
        %1611 = vset.pattern.permute.xlu0 0
        %1612 = vperm.xlu0 %1611, %v1497
        %v1613 = vpop.permute.xlu0 %1612
        %1616 = vset.pattern.permute.xlu0 0
        %1617 = vperm.xlu0 %1616, %v1498
        %v1618 = vpop.permute.xlu0 %1617
        %1621 = vset.pattern.permute.xlu0 0
        %1622 = vperm.xlu0 %1621, %v1499
        %v1623 = vpop.permute.xlu0 %1622
        %1626 = vset.pattern.permute.xlu0 0
        %1627 = vperm.xlu0 %1626, %v1500
        %v1628 = vpop.permute.xlu0 %1627
        %1631 = vset.pattern.permute.xlu0 0
        %1632 = vperm.xlu0 %1631, %v1501
        %v1633 = vpop.permute.xlu0 %1632
        %1636 = vset.pattern.permute.xlu0 0
        %1637 = vperm.xlu0 %1636, %v1502
        %v1638 = vpop.permute.xlu0 %1637
        %1641 = vset.pattern.permute.xlu0 0
        %1642 = vperm.xlu0 %1641, %v1503
        %v1643 = vpop.permute.xlu0 %1642
        %1646 = vset.pattern.permute.xlu0 0
        %1647 = vperm.xlu0 %1646, %v1504
        %v1648 = vpop.permute.xlu0 %1647
        %1651 = vset.pattern.permute.xlu0 0
        %1652 = vperm.xlu0 %1651, %v1505
        %v1653 = vpop.permute.xlu0 %1652
        %1656 = vset.pattern.permute.xlu0 0
        %1657 = vperm.xlu0 %1656, %v1506
        %v1658 = vpop.permute.xlu0 %1657
        %1661 = vset.pattern.permute.xlu0 0
        %1662 = vperm.xlu0 %1661, %v1507
        %v1663 = vpop.permute.xlu0 %1662
        %1666 = vset.pattern.permute.xlu0 0
        %1667 = vperm.xlu0 %1666, %v1508
        %v1668 = vpop.permute.xlu0 %1667
        %v1670 = vperm.slane %v1509, 0
        %v1671 = vmul.f32 %v1513, %v1670
        %v1672 = vmul.f32 %v1518, %v1670
        %v1673 = vmul.f32 %v1523, %v1670
        %v1674 = vmul.f32 %v1528, %v1670
        %v1675 = vmul.f32 %v1533, %v1670
        %v1676 = vmul.f32 %v1538, %v1670
        %v1677 = vmul.f32 %v1543, %v1670
        %v1678 = vmul.f32 %v1548, %v1670
        %v1679 = vmul.f32 %v1553, %v1670
        %v1680 = vmul.f32 %v1558, %v1670
        %v1681 = vmul.f32 %v1563, %v1670
        %v1682 = vmul.f32 %v1568, %v1670
        %v1683 = vmul.f32 %v1573, %v1670
        %v1684 = vmul.f32 %v1578, %v1670
        %v1685 = vmul.f32 %v1583, %v1670
        %v1686 = vmul.f32 %v1588, %v1670
        %v1687 = vmul.f32 %v1593, %v1670
        %v1688 = vmul.f32 %v1598, %v1670
        %v1689 = vmul.f32 %v1603, %v1670
        %v1690 = vmul.f32 %v1608, %v1670
        %v1691 = vmul.f32 %v1613, %v1670
        %v1692 = vmul.f32 %v1618, %v1670
        %v1693 = vmul.f32 %v1623, %v1670
        %v1694 = vmul.f32 %v1628, %v1670
        %v1695 = vmul.f32 %v1633, %v1670
        %v1696 = vmul.f32 %v1638, %v1670
        %v1697 = vmul.f32 %v1643, %v1670
        %v1698 = vmul.f32 %v1648, %v1670
        %v1699 = vmul.f32 %v1653, %v1670
        %v1700 = vmul.f32 %v1658, %v1670
        %v1701 = vmul.f32 %v1663, %v1670
        %v1702 = vmul.f32 %v1668, %v1670
        %v1703 = vadd.f32 %v1445, %v1671
        %v1704 = vadd.f32 %v1446, %v1672
        %v1705 = vadd.f32 %v1447, %v1673
        %v1706 = vadd.f32 %v1448, %v1674
        %v1707 = vadd.f32 %v1449, %v1675
        %v1708 = vadd.f32 %v1450, %v1676
        %v1709 = vadd.f32 %v1451, %v1677
        %v1710 = vadd.f32 %v1452, %v1678
        %v1711 = vadd.f32 %v1453, %v1679
        %v1712 = vadd.f32 %v1454, %v1680
        %v1713 = vadd.f32 %v1455, %v1681
        %v1714 = vadd.f32 %v1456, %v1682
        %v1715 = vadd.f32 %v1457, %v1683
        %v1716 = vadd.f32 %v1458, %v1684
        %v1717 = vadd.f32 %v1459, %v1685
        %v1718 = vadd.f32 %v1460, %v1686
        %v1719 = vadd.f32 %v1461, %v1687
        %v1720 = vadd.f32 %v1462, %v1688
        %v1721 = vadd.f32 %v1463, %v1689
        %v1722 = vadd.f32 %v1464, %v1690
        %v1723 = vadd.f32 %v1465, %v1691
        %v1724 = vadd.f32 %v1466, %v1692
        %v1725 = vadd.f32 %v1467, %v1693
        %v1726 = vadd.f32 %v1468, %v1694
        %v1727 = vadd.f32 %v1469, %v1695
        %v1728 = vadd.f32 %v1470, %v1696
        %v1729 = vadd.f32 %v1471, %v1697
        %v1730 = vadd.f32 %v1472, %v1698
        %v1731 = vadd.f32 %v1473, %v1699
        %v1732 = vadd.f32 %v1474, %v1700
        %v1733 = vadd.f32 %v1475, %v1701
        %v1734 = vadd.f32 %v1476, %v1702
        %v1735 = vld [vmem:[%s1 + $0x5] sm:$0x1]
        %1736 = vset.pattern.permute.xlu0 2
        %1737 = vperm.xlu0 %1736, %v1477
        %v1738 = vpop.permute.xlu0 %1737
        %1740 = vset.pattern.permute.xlu0 2
        %1741 = vperm.xlu0 %1740, %v1478
        %v1742 = vpop.permute.xlu0 %1741
        %1744 = vset.pattern.permute.xlu0 2
        %1745 = vperm.xlu0 %1744, %v1479
        %v1746 = vpop.permute.xlu0 %1745
        %1748 = vset.pattern.permute.xlu0 2
        %1749 = vperm.xlu0 %1748, %v1480
        %v1750 = vpop.permute.xlu0 %1749
        %1752 = vset.pattern.permute.xlu0 2
        %1753 = vperm.xlu0 %1752, %v1481
        %v1754 = vpop.permute.xlu0 %1753
        %1756 = vset.pattern.permute.xlu0 2
        %1757 = vperm.xlu0 %1756, %v1482
        %v1758 = vpop.permute.xlu0 %1757
        %1760 = vset.pattern.permute.xlu0 2
        %1761 = vperm.xlu0 %1760, %v1483
        %v1762 = vpop.permute.xlu0 %1761
        %1764 = vset.pattern.permute.xlu0 2
        %1765 = vperm.xlu0 %1764, %v1484
        %v1766 = vpop.permute.xlu0 %1765
        %1768 = vset.pattern.permute.xlu0 2
        %1769 = vperm.xlu0 %1768, %v1485
        %v1770 = vpop.permute.xlu0 %1769
        %1772 = vset.pattern.permute.xlu0 2
        %1773 = vperm.xlu0 %1772, %v1486
        %v1774 = vpop.permute.xlu0 %1773
        %1776 = vset.pattern.permute.xlu0 2
        %1777 = vperm.xlu0 %1776, %v1487
        %v1778 = vpop.permute.xlu0 %1777
        %1780 = vset.pattern.permute.xlu0 2
        %1781 = vperm.xlu0 %1780, %v1488
        %v1782 = vpop.permute.xlu0 %1781
        %1784 = vset.pattern.permute.xlu0 2
        %1785 = vperm.xlu0 %1784, %v1489
        %v1786 = vpop.permute.xlu0 %1785
        %1788 = vset.pattern.permute.xlu0 2
        %1789 = vperm.xlu0 %1788, %v1490
        %v1790 = vpop.permute.xlu0 %1789
        %1792 = vset.pattern.permute.xlu0 2
        %1793 = vperm.xlu0 %1792, %v1491
        %v1794 = vpop.permute.xlu0 %1793
        %1796 = vset.pattern.permute.xlu0 2
        %1797 = vperm.xlu0 %1796, %v1492
        %v1798 = vpop.permute.xlu0 %1797
        %1800 = vset.pattern.permute.xlu0 2
        %1801 = vperm.xlu0 %1800, %v1493
        %v1802 = vpop.permute.xlu0 %1801
        %1804 = vset.pattern.permute.xlu0 2
        %1805 = vperm.xlu0 %1804, %v1494
        %v1806 = vpop.permute.xlu0 %1805
        %1808 = vset.pattern.permute.xlu0 2
        %1809 = vperm.xlu0 %1808, %v1495
        %v1810 = vpop.permute.xlu0 %1809
        %1812 = vset.pattern.permute.xlu0 2
        %1813 = vperm.xlu0 %1812, %v1496
        %v1814 = vpop.permute.xlu0 %1813
        %1816 = vset.pattern.permute.xlu0 2
        %1817 = vperm.xlu0 %1816, %v1497
        %v1818 = vpop.permute.xlu0 %1817
        %1820 = vset.pattern.permute.xlu0 2
        %1821 = vperm.xlu0 %1820, %v1498
        %v1822 = vpop.permute.xlu0 %1821
        %1824 = vset.pattern.permute.xlu0 2
        %1825 = vperm.xlu0 %1824, %v1499
        %v1826 = vpop.permute.xlu0 %1825
        %1828 = vset.pattern.permute.xlu0 2
        %1829 = vperm.xlu0 %1828, %v1500
        %v1830 = vpop.permute.xlu0 %1829
        %1832 = vset.pattern.permute.xlu0 2
        %1833 = vperm.xlu0 %1832, %v1501
        %v1834 = vpop.permute.xlu0 %1833
        %1836 = vset.pattern.permute.xlu0 2
        %1837 = vperm.xlu0 %1836, %v1502
        %v1838 = vpop.permute.xlu0 %1837
        %1840 = vset.pattern.permute.xlu0 2
        %1841 = vperm.xlu0 %1840, %v1503
        %v1842 = vpop.permute.xlu0 %1841
        %1844 = vset.pattern.permute.xlu0 2
        %1845 = vperm.xlu0 %1844, %v1504
        %v1846 = vpop.permute.xlu0 %1845
        %1848 = vset.pattern.permute.xlu0 2
        %1849 = vperm.xlu0 %1848, %v1505
        %v1850 = vpop.permute.xlu0 %1849
        %1852 = vset.pattern.permute.xlu0 2
        %1853 = vperm.xlu0 %1852, %v1506
        %v1854 = vpop.permute.xlu0 %1853
        %1856 = vset.pattern.permute.xlu0 2
        %1857 = vperm.xlu0 %1856, %v1507
        %v1858 = vpop.permute.xlu0 %1857
        %1860 = vset.pattern.permute.xlu0 2
        %1861 = vperm.xlu0 %1860, %v1508
        %v1862 = vpop.permute.xlu0 %1861
        %v1864 = vperm.slane %v1735, 0
        %v1865 = vmul.f32 %v1738, %v1864
        %v1866 = vmul.f32 %v1742, %v1864
        %v1867 = vmul.f32 %v1746, %v1864
        %v1868 = vmul.f32 %v1750, %v1864
        %v1869 = vmul.f32 %v1754, %v1864
        %v1870 = vmul.f32 %v1758, %v1864
        %v1871 = vmul.f32 %v1762, %v1864
        %v1872 = vmul.f32 %v1766, %v1864
        %v1873 = vmul.f32 %v1770, %v1864
        %v1874 = vmul.f32 %v1774, %v1864
        %v1875 = vmul.f32 %v1778, %v1864
        %v1876 = vmul.f32 %v1782, %v1864
        %v1877 = vmul.f32 %v1786, %v1864
        %v1878 = vmul.f32 %v1790, %v1864
        %v1879 = vmul.f32 %v1794, %v1864
        %v1880 = vmul.f32 %v1798, %v1864
        %v1881 = vmul.f32 %v1802, %v1864
        %v1882 = vmul.f32 %v1806, %v1864
        %v1883 = vmul.f32 %v1810, %v1864
        %v1884 = vmul.f32 %v1814, %v1864
        %v1885 = vmul.f32 %v1818, %v1864
        %v1886 = vmul.f32 %v1822, %v1864
        %v1887 = vmul.f32 %v1826, %v1864
        %v1888 = vmul.f32 %v1830, %v1864
        %v1889 = vmul.f32 %v1834, %v1864
        %v1890 = vmul.f32 %v1838, %v1864
        %v1891 = vmul.f32 %v1842, %v1864
        %v1892 = vmul.f32 %v1846, %v1864
        %v1893 = vmul.f32 %v1850, %v1864
        %v1894 = vmul.f32 %v1854, %v1864
        %v1895 = vmul.f32 %v1858, %v1864
        %v1896 = vmul.f32 %v1862, %v1864
        %v1897 = vadd.f32 %v1703, %v1865
        %v1898 = vadd.f32 %v1704, %v1866
        %v1899 = vadd.f32 %v1705, %v1867
        %v1900 = vadd.f32 %v1706, %v1868
        %v1901 = vadd.f32 %v1707, %v1869
        %v1902 = vadd.f32 %v1708, %v1870
        %v1903 = vadd.f32 %v1709, %v1871
        %v1904 = vadd.f32 %v1710, %v1872
        %v1905 = vadd.f32 %v1711, %v1873
        %v1906 = vadd.f32 %v1712, %v1874
        %v1907 = vadd.f32 %v1713, %v1875
        %v1908 = vadd.f32 %v1714, %v1876
        %v1909 = vadd.f32 %v1715, %v1877
        %v1910 = vadd.f32 %v1716, %v1878
        %v1911 = vadd.f32 %v1717, %v1879
        %v1912 = vadd.f32 %v1718, %v1880
        %v1913 = vadd.f32 %v1719, %v1881
        %v1914 = vadd.f32 %v1720, %v1882
        %v1915 = vadd.f32 %v1721, %v1883
        %v1916 = vadd.f32 %v1722, %v1884
        %v1917 = vadd.f32 %v1723, %v1885
        %v1918 = vadd.f32 %v1724, %v1886
        %v1919 = vadd.f32 %v1725, %v1887
        %v1920 = vadd.f32 %v1726, %v1888
        %v1921 = vadd.f32 %v1727, %v1889
        %v1922 = vadd.f32 %v1728, %v1890
        %v1923 = vadd.f32 %v1729, %v1891
        %v1924 = vadd.f32 %v1730, %v1892
        %v1925 = vadd.f32 %v1731, %v1893
        %v1926 = vadd.f32 %v1732, %v1894
        %v1927 = vadd.f32 %v1733, %v1895
        %v1928 = vadd.f32 %v1734, %v1896
        %v1929 = vld [vmem:[%s572 + $0x3] sm:$0xff]
        %v1930 = vld [vmem:[%s572 + $0xb] sm:$0xff]
        %v1931 = vld [vmem:[%s572 + $0x13] sm:$0xff]
        %v1932 = vld [vmem:[%s572 + $0x1b] sm:$0xff]
        %v1933 = vld [vmem:[%s572 + $0x23] sm:$0xff]
        %v1934 = vld [vmem:[%s572 + $0x2b] sm:$0xff]
        %v1935 = vld [vmem:[%s572 + $0x33] sm:$0xff]
        %v1936 = vld [vmem:[%s572 + $0x3b] sm:$0xff]
        %v1937 = vld [vmem:[%s572 + $0x43] sm:$0xff]
        %v1938 = vld [vmem:[%s572 + $0x4b] sm:$0xff]
        %v1939 = vld [vmem:[%s572 + $0x53] sm:$0xff]
        %v1940 = vld [vmem:[%s572 + $0x5b] sm:$0xff]
        %v1941 = vld [vmem:[%s572 + $0x63] sm:$0xff]
        %v1942 = vld [vmem:[%s572 + $0x6b] sm:$0xff]
        %v1943 = vld [vmem:[%s572 + $0x73] sm:$0xff]
        %v1944 = vld [vmem:[%s572 + $0x7b] sm:$0xff]
        %v1945 = vld [vmem:[%s572 + $0x83] sm:$0xff]
        %v1946 = vld [vmem:[%s572 + $0x8b] sm:$0xff]
        %v1947 = vld [vmem:[%s572 + $0x93] sm:$0xff]
        %v1948 = vld [vmem:[%s572 + $0x9b] sm:$0xff]
        %v1949 = vld [vmem:[%s572 + $0xa3] sm:$0xff]
        %v1950 = vld [vmem:[%s572 + $0xab] sm:$0xff]
        %v1951 = vld [vmem:[%s572 + $0xb3] sm:$0xff]
        %v1952 = vld [vmem:[%s572 + $0xbb] sm:$0xff]
        %v1953 = vld [vmem:[%s572 + $0xc3] sm:$0xff]
        %v1954 = vld [vmem:[%s572 + $0xcb] sm:$0xff]
        %v1955 = vld [vmem:[%s572 + $0xd3] sm:$0xff]
        %v1956 = vld [vmem:[%s572 + $0xdb] sm:$0xff]
        %v1957 = vld [vmem:[%s572 + $0xe3] sm:$0xff]
        %v1958 = vld [vmem:[%s572 + $0xeb] sm:$0xff]
        %v1959 = vld [vmem:[%s572 + $0xf3] sm:$0xff]
        %v1960 = vld [vmem:[%s572 + $0xfb] sm:$0x1f]
        %v1961 = vld [vmem:[%s1 + $0x6] sm:$0x1]
        %1963 = vset.pattern.permute.xlu0 0
        %1964 = vperm.xlu0 %1963, %v1929
        %v1965 = vpop.permute.xlu0 %1964
        %1968 = vset.pattern.permute.xlu0 0
        %1969 = vperm.xlu0 %1968, %v1930
        %v1970 = vpop.permute.xlu0 %1969
        %1973 = vset.pattern.permute.xlu0 0
        %1974 = vperm.xlu0 %1973, %v1931
        %v1975 = vpop.permute.xlu0 %1974
        %1978 = vset.pattern.permute.xlu0 0
        %1979 = vperm.xlu0 %1978, %v1932
        %v1980 = vpop.permute.xlu0 %1979
        %1983 = vset.pattern.permute.xlu0 0
        %1984 = vperm.xlu0 %1983, %v1933
        %v1985 = vpop.permute.xlu0 %1984
        %1988 = vset.pattern.permute.xlu0 0
        %1989 = vperm.xlu0 %1988, %v1934
        %v1990 = vpop.permute.xlu0 %1989
        %1993 = vset.pattern.permute.xlu0 0
        %1994 = vperm.xlu0 %1993, %v1935
        %v1995 = vpop.permute.xlu0 %1994
        %1998 = vset.pattern.permute.xlu0 0
        %1999 = vperm.xlu0 %1998, %v1936
        %v2000 = vpop.permute.xlu0 %1999
        %2003 = vset.pattern.permute.xlu0 0
        %2004 = vperm.xlu0 %2003, %v1937
        %v2005 = vpop.permute.xlu0 %2004
        %2008 = vset.pattern.permute.xlu0 0
        %2009 = vperm.xlu0 %2008, %v1938
        %v2010 = vpop.permute.xlu0 %2009
        %2013 = vset.pattern.permute.xlu0 0
        %2014 = vperm.xlu0 %2013, %v1939
        %v2015 = vpop.permute.xlu0 %2014
        %2018 = vset.pattern.permute.xlu0 0
        %2019 = vperm.xlu0 %2018, %v1940
        %v2020 = vpop.permute.xlu0 %2019
        %2023 = vset.pattern.permute.xlu0 0
        %2024 = vperm.xlu0 %2023, %v1941
        %v2025 = vpop.permute.xlu0 %2024
        %2028 = vset.pattern.permute.xlu0 0
        %2029 = vperm.xlu0 %2028, %v1942
        %v2030 = vpop.permute.xlu0 %2029
        %2033 = vset.pattern.permute.xlu0 0
        %2034 = vperm.xlu0 %2033, %v1943
        %v2035 = vpop.permute.xlu0 %2034
        %2038 = vset.pattern.permute.xlu0 0
        %2039 = vperm.xlu0 %2038, %v1944
        %v2040 = vpop.permute.xlu0 %2039
        %2043 = vset.pattern.permute.xlu0 0
        %2044 = vperm.xlu0 %2043, %v1945
        %v2045 = vpop.permute.xlu0 %2044
        %2048 = vset.pattern.permute.xlu0 0
        %2049 = vperm.xlu0 %2048, %v1946
        %v2050 = vpop.permute.xlu0 %2049
        %2053 = vset.pattern.permute.xlu0 0
        %2054 = vperm.xlu0 %2053, %v1947
        %v2055 = vpop.permute.xlu0 %2054
        %2058 = vset.pattern.permute.xlu0 0
        %2059 = vperm.xlu0 %2058, %v1948
        %v2060 = vpop.permute.xlu0 %2059
        %2063 = vset.pattern.permute.xlu0 0
        %2064 = vperm.xlu0 %2063, %v1949
        %v2065 = vpop.permute.xlu0 %2064
        %2068 = vset.pattern.permute.xlu0 0
        %2069 = vperm.xlu0 %2068, %v1950
        %v2070 = vpop.permute.xlu0 %2069
        %2073 = vset.pattern.permute.xlu0 0
        %2074 = vperm.xlu0 %2073, %v1951
        %v2075 = vpop.permute.xlu0 %2074
        %2078 = vset.pattern.permute.xlu0 0
        %2079 = vperm.xlu0 %2078, %v1952
        %v2080 = vpop.permute.xlu0 %2079
        %2083 = vset.pattern.permute.xlu0 0
        %2084 = vperm.xlu0 %2083, %v1953
        %v2085 = vpop.permute.xlu0 %2084
        %2088 = vset.pattern.permute.xlu0 0
        %2089 = vperm.xlu0 %2088, %v1954
        %v2090 = vpop.permute.xlu0 %2089
        %2093 = vset.pattern.permute.xlu0 0
        %2094 = vperm.xlu0 %2093, %v1955
        %v2095 = vpop.permute.xlu0 %2094
        %2098 = vset.pattern.permute.xlu0 0
        %2099 = vperm.xlu0 %2098, %v1956
        %v2100 = vpop.permute.xlu0 %2099
        %2103 = vset.pattern.permute.xlu0 0
        %2104 = vperm.xlu0 %2103, %v1957
        %v2105 = vpop.permute.xlu0 %2104
        %2108 = vset.pattern.permute.xlu0 0
        %2109 = vperm.xlu0 %2108, %v1958
        %v2110 = vpop.permute.xlu0 %2109
        %2113 = vset.pattern.permute.xlu0 0
        %2114 = vperm.xlu0 %2113, %v1959
        %v2115 = vpop.permute.xlu0 %2114
        %2118 = vset.pattern.permute.xlu0 0
        %2119 = vperm.xlu0 %2118, %v1960
        %v2120 = vpop.permute.xlu0 %2119
        %v2122 = vperm.slane %v1961, 0
        %v2123 = vmul.f32 %v1965, %v2122
        %v2124 = vmul.f32 %v1970, %v2122
        %v2125 = vmul.f32 %v1975, %v2122
        %v2126 = vmul.f32 %v1980, %v2122
        %v2127 = vmul.f32 %v1985, %v2122
        %v2128 = vmul.f32 %v1990, %v2122
        %v2129 = vmul.f32 %v1995, %v2122
        %v2130 = vmul.f32 %v2000, %v2122
        %v2131 = vmul.f32 %v2005, %v2122
        %v2132 = vmul.f32 %v2010, %v2122
        %v2133 = vmul.f32 %v2015, %v2122
        %v2134 = vmul.f32 %v2020, %v2122
        %v2135 = vmul.f32 %v2025, %v2122
        %v2136 = vmul.f32 %v2030, %v2122
        %v2137 = vmul.f32 %v2035, %v2122
        %v2138 = vmul.f32 %v2040, %v2122
        %v2139 = vmul.f32 %v2045, %v2122
        %v2140 = vmul.f32 %v2050, %v2122
        %v2141 = vmul.f32 %v2055, %v2122
        %v2142 = vmul.f32 %v2060, %v2122
        %v2143 = vmul.f32 %v2065, %v2122
        %v2144 = vmul.f32 %v2070, %v2122
        %v2145 = vmul.f32 %v2075, %v2122
        %v2146 = vmul.f32 %v2080, %v2122
        %v2147 = vmul.f32 %v2085, %v2122
        %v2148 = vmul.f32 %v2090, %v2122
        %v2149 = vmul.f32 %v2095, %v2122
        %v2150 = vmul.f32 %v2100, %v2122
        %v2151 = vmul.f32 %v2105, %v2122
        %v2152 = vmul.f32 %v2110, %v2122
        %v2153 = vmul.f32 %v2115, %v2122
        %v2154 = vmul.f32 %v2120, %v2122
        %v2155 = vadd.f32 %v1897, %v2123
        %v2156 = vadd.f32 %v1898, %v2124
        %v2157 = vadd.f32 %v1899, %v2125
        %v2158 = vadd.f32 %v1900, %v2126
        %v2159 = vadd.f32 %v1901, %v2127
        %v2160 = vadd.f32 %v1902, %v2128
        %v2161 = vadd.f32 %v1903, %v2129
        %v2162 = vadd.f32 %v1904, %v2130
        %v2163 = vadd.f32 %v1905, %v2131
        %v2164 = vadd.f32 %v1906, %v2132
        %v2165 = vadd.f32 %v1907, %v2133
        %v2166 = vadd.f32 %v1908, %v2134
        %v2167 = vadd.f32 %v1909, %v2135
        %v2168 = vadd.f32 %v1910, %v2136
        %v2169 = vadd.f32 %v1911, %v2137
        %v2170 = vadd.f32 %v1912, %v2138
        %v2171 = vadd.f32 %v1913, %v2139
        %v2172 = vadd.f32 %v1914, %v2140
        %v2173 = vadd.f32 %v1915, %v2141
        %v2174 = vadd.f32 %v1916, %v2142
        %v2175 = vadd.f32 %v1917, %v2143
        %v2176 = vadd.f32 %v1918, %v2144
        %v2177 = vadd.f32 %v1919, %v2145
        %v2178 = vadd.f32 %v1920, %v2146
        %v2179 = vadd.f32 %v1921, %v2147
        %v2180 = vadd.f32 %v1922, %v2148
        %v2181 = vadd.f32 %v1923, %v2149
        %v2182 = vadd.f32 %v1924, %v2150
        %v2183 = vadd.f32 %v1925, %v2151
        %v2184 = vadd.f32 %v1926, %v2152
        %v2185 = vadd.f32 %v1927, %v2153
        %v2186 = vadd.f32 %v1928, %v2154
        %v2187 = vld [vmem:[%s1 + $0x7] sm:$0x1]
        %2188 = vset.pattern.permute.xlu0 2
        %2189 = vperm.xlu0 %2188, %v1929
        %v2190 = vpop.permute.xlu0 %2189
        %2192 = vset.pattern.permute.xlu0 2
        %2193 = vperm.xlu0 %2192, %v1930
        %v2194 = vpop.permute.xlu0 %2193
        %2196 = vset.pattern.permute.xlu0 2
        %2197 = vperm.xlu0 %2196, %v1931
        %v2198 = vpop.permute.xlu0 %2197
        %2200 = vset.pattern.permute.xlu0 2
        %2201 = vperm.xlu0 %2200, %v1932
        %v2202 = vpop.permute.xlu0 %2201
        %2204 = vset.pattern.permute.xlu0 2
        %2205 = vperm.xlu0 %2204, %v1933
        %v2206 = vpop.permute.xlu0 %2205
        %2208 = vset.pattern.permute.xlu0 2
        %2209 = vperm.xlu0 %2208, %v1934
        %v2210 = vpop.permute.xlu0 %2209
        %2212 = vset.pattern.permute.xlu0 2
        %2213 = vperm.xlu0 %2212, %v1935
        %v2214 = vpop.permute.xlu0 %2213
        %2216 = vset.pattern.permute.xlu0 2
        %2217 = vperm.xlu0 %2216, %v1936
        %v2218 = vpop.permute.xlu0 %2217
        %2220 = vset.pattern.permute.xlu0 2
        %2221 = vperm.xlu0 %2220, %v1937
        %v2222 = vpop.permute.xlu0 %2221
        %2224 = vset.pattern.permute.xlu0 2
        %2225 = vperm.xlu0 %2224, %v1938
        %v2226 = vpop.permute.xlu0 %2225
        %2228 = vset.pattern.permute.xlu0 2
        %2229 = vperm.xlu0 %2228, %v1939
        %v2230 = vpop.permute.xlu0 %2229
        %2232 = vset.pattern.permute.xlu0 2
        %2233 = vperm.xlu0 %2232, %v1940
        %v2234 = vpop.permute.xlu0 %2233
        %2236 = vset.pattern.permute.xlu0 2
        %2237 = vperm.xlu0 %2236, %v1941
        %v2238 = vpop.permute.xlu0 %2237
        %2240 = vset.pattern.permute.xlu0 2
        %2241 = vperm.xlu0 %2240, %v1942
        %v2242 = vpop.permute.xlu0 %2241
        %2244 = vset.pattern.permute.xlu0 2
        %2245 = vperm.xlu0 %2244, %v1943
        %v2246 = vpop.permute.xlu0 %2245
        %2248 = vset.pattern.permute.xlu0 2
        %2249 = vperm.xlu0 %2248, %v1944
        %v2250 = vpop.permute.xlu0 %2249
        %2252 = vset.pattern.permute.xlu0 2
        %2253 = vperm.xlu0 %2252, %v1945
        %v2254 = vpop.permute.xlu0 %2253
        %2256 = vset.pattern.permute.xlu0 2
        %2257 = vperm.xlu0 %2256, %v1946
        %v2258 = vpop.permute.xlu0 %2257
        %2260 = vset.pattern.permute.xlu0 2
        %2261 = vperm.xlu0 %2260, %v1947
        %v2262 = vpop.permute.xlu0 %2261
        %2264 = vset.pattern.permute.xlu0 2
        %2265 = vperm.xlu0 %2264, %v1948
        %v2266 = vpop.permute.xlu0 %2265
        %2268 = vset.pattern.permute.xlu0 2
        %2269 = vperm.xlu0 %2268, %v1949
        %v2270 = vpop.permute.xlu0 %2269
        %2272 = vset.pattern.permute.xlu0 2
        %2273 = vperm.xlu0 %2272, %v1950
        %v2274 = vpop.permute.xlu0 %2273
        %2276 = vset.pattern.permute.xlu0 2
        %2277 = vperm.xlu0 %2276, %v1951
        %v2278 = vpop.permute.xlu0 %2277
        %2280 = vset.pattern.permute.xlu0 2
        %2281 = vperm.xlu0 %2280, %v1952
        %v2282 = vpop.permute.xlu0 %2281
        %2284 = vset.pattern.permute.xlu0 2
        %2285 = vperm.xlu0 %2284, %v1953
        %v2286 = vpop.permute.xlu0 %2285
        %2288 = vset.pattern.permute.xlu0 2
        %2289 = vperm.xlu0 %2288, %v1954
        %v2290 = vpop.permute.xlu0 %2289
        %2292 = vset.pattern.permute.xlu0 2
        %2293 = vperm.xlu0 %2292, %v1955
        %v2294 = vpop.permute.xlu0 %2293
        %2296 = vset.pattern.permute.xlu0 2
        %2297 = vperm.xlu0 %2296, %v1956
        %v2298 = vpop.permute.xlu0 %2297
        %2300 = vset.pattern.permute.xlu0 2
        %2301 = vperm.xlu0 %2300, %v1957
        %v2302 = vpop.permute.xlu0 %2301
        %2304 = vset.pattern.permute.xlu0 2
        %2305 = vperm.xlu0 %2304, %v1958
        %v2306 = vpop.permute.xlu0 %2305
        %2308 = vset.pattern.permute.xlu0 2
        %2309 = vperm.xlu0 %2308, %v1959
        %v2310 = vpop.permute.xlu0 %2309
        %2312 = vset.pattern.permute.xlu0 2
        %2313 = vperm.xlu0 %2312, %v1960
        %v2314 = vpop.permute.xlu0 %2313
        %v2316 = vperm.slane %v2187, 0
        %v2317 = vmul.f32 %v2190, %v2316
        %v2318 = vmul.f32 %v2194, %v2316
        %v2319 = vmul.f32 %v2198, %v2316
        %v2320 = vmul.f32 %v2202, %v2316
        %v2321 = vmul.f32 %v2206, %v2316
        %v2322 = vmul.f32 %v2210, %v2316
        %v2323 = vmul.f32 %v2214, %v2316
        %v2324 = vmul.f32 %v2218, %v2316
        %v2325 = vmul.f32 %v2222, %v2316
        %v2326 = vmul.f32 %v2226, %v2316
        %v2327 = vmul.f32 %v2230, %v2316
        %v2328 = vmul.f32 %v2234, %v2316
        %v2329 = vmul.f32 %v2238, %v2316
        %v2330 = vmul.f32 %v2242, %v2316
        %v2331 = vmul.f32 %v2246, %v2316
        %v2332 = vmul.f32 %v2250, %v2316
        %v2333 = vmul.f32 %v2254, %v2316
        %v2334 = vmul.f32 %v2258, %v2316
        %v2335 = vmul.f32 %v2262, %v2316
        %v2336 = vmul.f32 %v2266, %v2316
        %v2337 = vmul.f32 %v2270, %v2316
        %v2338 = vmul.f32 %v2274, %v2316
        %v2339 = vmul.f32 %v2278, %v2316
        %v2340 = vmul.f32 %v2282, %v2316
        %v2341 = vmul.f32 %v2286, %v2316
        %v2342 = vmul.f32 %v2290, %v2316
        %v2343 = vmul.f32 %v2294, %v2316
        %v2344 = vmul.f32 %v2298, %v2316
        %v2345 = vmul.f32 %v2302, %v2316
        %v2346 = vmul.f32 %v2306, %v2316
        %v2347 = vmul.f32 %v2310, %v2316
        %v2348 = vmul.f32 %v2314, %v2316
        %v2349 = vadd.f32 %v2155, %v2317
        %v2350 = vadd.f32 %v2156, %v2318
        %v2351 = vadd.f32 %v2157, %v2319
        %v2352 = vadd.f32 %v2158, %v2320
        %v2353 = vadd.f32 %v2159, %v2321
        %v2354 = vadd.f32 %v2160, %v2322
        %v2355 = vadd.f32 %v2161, %v2323
        %v2356 = vadd.f32 %v2162, %v2324
        %v2357 = vadd.f32 %v2163, %v2325
        %v2358 = vadd.f32 %v2164, %v2326
        %v2359 = vadd.f32 %v2165, %v2327
        %v2360 = vadd.f32 %v2166, %v2328
        %v2361 = vadd.f32 %v2167, %v2329
        %v2362 = vadd.f32 %v2168, %v2330
        %v2363 = vadd.f32 %v2169, %v2331
        %v2364 = vadd.f32 %v2170, %v2332
        %v2365 = vadd.f32 %v2171, %v2333
        %v2366 = vadd.f32 %v2172, %v2334
        %v2367 = vadd.f32 %v2173, %v2335
        %v2368 = vadd.f32 %v2174, %v2336
        %v2369 = vadd.f32 %v2175, %v2337
        %v2370 = vadd.f32 %v2176, %v2338
        %v2371 = vadd.f32 %v2177, %v2339
        %v2372 = vadd.f32 %v2178, %v2340
        %v2373 = vadd.f32 %v2179, %v2341
        %v2374 = vadd.f32 %v2180, %v2342
        %v2375 = vadd.f32 %v2181, %v2343
        %v2376 = vadd.f32 %v2182, %v2344
        %v2377 = vadd.f32 %v2183, %v2345
        %v2378 = vadd.f32 %v2184, %v2346
        %v2379 = vadd.f32 %v2185, %v2347
        %v2380 = vadd.f32 %v2186, %v2348
        %v2381 = vld [vmem:[%s2] sm:$0x1]
        %v2383 = vperm.slane %v2381, 0
        %v2385 = vadd.f32 %v2349, %v2383
        %v2386 = vadd.f32 %v2350, %v2383
        %v2387 = vadd.f32 %v2351, %v2383
        %v2388 = vadd.f32 %v2352, %v2383
        %v2389 = vadd.f32 %v2353, %v2383
        %v2390 = vadd.f32 %v2354, %v2383
        %v2391 = vadd.f32 %v2355, %v2383
        %v2392 = vadd.f32 %v2356, %v2383
        %v2393 = vadd.f32 %v2357, %v2383
        %v2394 = vadd.f32 %v2358, %v2383
        %v2395 = vadd.f32 %v2359, %v2383
        %v2396 = vadd.f32 %v2360, %v2383
        %v2397 = vadd.f32 %v2361, %v2383
        %v2398 = vadd.f32 %v2362, %v2383
        %v2399 = vadd.f32 %v2363, %v2383
        %v2400 = vadd.f32 %v2364, %v2383
        %v2401 = vadd.f32 %v2365, %v2383
        %v2402 = vadd.f32 %v2366, %v2383
        %v2403 = vadd.f32 %v2367, %v2383
        %v2404 = vadd.f32 %v2368, %v2383
        %v2405 = vadd.f32 %v2369, %v2383
        %v2406 = vadd.f32 %v2370, %v2383
        %v2407 = vadd.f32 %v2371, %v2383
        %v2408 = vadd.f32 %v2372, %v2383
        %v2409 = vadd.f32 %v2373, %v2383
        %v2410 = vadd.f32 %v2374, %v2383
        %v2411 = vadd.f32 %v2375, %v2383
        %v2412 = vadd.f32 %v2376, %v2383
        %v2413 = vadd.f32 %v2377, %v2383
        %v2414 = vadd.f32 %v2378, %v2383
        %v2415 = vadd.f32 %v2379, %v2383
        %v2416 = vadd.f32 %v2380, %v2383
        %v2417 = vmax.f32 %v2385, 0.0
        %v2418 = vmax.f32 %v2386, 0.0
        %v2419 = vmax.f32 %v2387, 0.0
        %v2420 = vmax.f32 %v2388, 0.0
        %v2421 = vmax.f32 %v2389, 0.0
        %v2422 = vmax.f32 %v2390, 0.0
        %v2423 = vmax.f32 %v2391, 0.0
        %v2424 = vmax.f32 %v2392, 0.0
        %v2425 = vmax.f32 %v2393, 0.0
        %v2426 = vmax.f32 %v2394, 0.0
        %v2427 = vmax.f32 %v2395, 0.0
        %v2428 = vmax.f32 %v2396, 0.0
        %v2429 = vmax.f32 %v2397, 0.0
        %v2430 = vmax.f32 %v2398, 0.0
        %v2431 = vmax.f32 %v2399, 0.0
        %v2432 = vmax.f32 %v2400, 0.0
        %v2433 = vmax.f32 %v2401, 0.0
        %v2434 = vmax.f32 %v2402, 0.0
        %v2435 = vmax.f32 %v2403, 0.0
        %v2436 = vmax.f32 %v2404, 0.0
        %v2437 = vmax.f32 %v2405, 0.0
        %v2438 = vmax.f32 %v2406, 0.0
        %v2439 = vmax.f32 %v2407, 0.0
        %v2440 = vmax.f32 %v2408, 0.0
        %v2441 = vmax.f32 %v2409, 0.0
        %v2442 = vmax.f32 %v2410, 0.0
        %v2443 = vmax.f32 %v2411, 0.0
        %v2444 = vmax.f32 %v2412, 0.0
        %v2445 = vmax.f32 %v2413, 0.0
        %v2446 = vmax.f32 %v2414, 0.0
        %v2447 = vmax.f32 %v2415, 0.0
        %v2448 = vmax.f32 %v2416, 0.0
        %v2449 = vld [vmem:[%s3] sm:$0xff]
        %v2450 = vld [vmem:[%s3 + $0x8] sm:$0xff]
        %v2451 = vld [vmem:[%s3 + $0x10] sm:$0xff]
        %v2452 = vld [vmem:[%s3 + $0x18] sm:$0xff]
        %v2453 = vld [vmem:[%s3 + $0x20] sm:$0xff]
        %v2454 = vld [vmem:[%s3 + $0x28] sm:$0xff]
        %v2455 = vld [vmem:[%s3 + $0x30] sm:$0xff]
        %v2456 = vld [vmem:[%s3 + $0x38] sm:$0xff]
        %v2457 = vld [vmem:[%s3 + $0x40] sm:$0xff]
        %v2458 = vld [vmem:[%s3 + $0x48] sm:$0xff]
        %v2459 = vld [vmem:[%s3 + $0x50] sm:$0xff]
        %v2460 = vld [vmem:[%s3 + $0x58] sm:$0xff]
        %v2461 = vld [vmem:[%s3 + $0x60] sm:$0xff]
        %v2462 = vld [vmem:[%s3 + $0x68] sm:$0xff]
        %v2463 = vld [vmem:[%s3 + $0x70] sm:$0xf]
        %v2464 = vld [vmem:[%s3 + $0x78] sm:$0xf]
        %vm2465 = vcmask 1022976
        %v2467 = vsel %vm2465, %v2450, 0
        %v2470 = vsel %vm2465, %v2452, 0
        %v2473 = vsel %vm2465, %v2454, 0
        %v2476 = vsel %vm2465, %v2456, 0
        %v2479 = vsel %vm2465, %v2458, 0
        %v2482 = vsel %vm2465, %v2460, 0
        %v2485 = vsel %vm2465, %v2462, 0
        %v2488 = vsel %vm2465, %v2464, 0
        %vm2490 = vcmask 1044480
        %v2492 = vsel %vm2490, %v2448, 0
        %2494 = vmatpush.msra.mxu0 %v2432
        %2495 = vmatpush.msra.mxu0 %v2431
        %2496 = vmatpush.msra.mxu0 %v2430
        %2497 = vmatpush.msra.mxu0 %v2429
        %2498 = vmatpush.msra.mxu0 %v2428
        %2499 = vmatpush.msra.mxu0 %v2427
        %2500 = vmatpush.msra.mxu0 %v2426
        %2501 = vmatpush.msra.mxu0 %v2425
        %2502 = vmatpush.msra.mxu0 %v2424
        %2503 = vmatpush.msra.mxu0 %v2423
        %2504 = vmatpush.msra.mxu0 %v2422
        %2505 = vmatpush.msra.mxu0 %v2421
        %2506 = vmatpush.msra.mxu0 %v2420
        %2507 = vmatpush.msra.mxu0 %v2419
        %2508 = vmatpush.msra.mxu0 %v2418
        %2509 = vmatpush.msra.mxu0 %v2417
        %2510 = vmatmul.f32.gmra.mxu0 %v2449
        %v2511 = vpop.f32.mrf.mxu0
        %v2512 = vadd.f32 0.0, %v2511
        %2513 = vmatmul.f32.gmra.mxu0 %v2451
        %v2514 = vpop.f32.mrf.mxu0
        %v2515 = vadd.f32 0.0, %v2514
        %2516 = vmatmul.f32.gmra.mxu0 %v2453
        %v2517 = vpop.f32.mrf.mxu0
        %v2518 = vadd.f32 0.0, %v2517
        %2519 = vmatmul.f32.gmra.mxu0 %v2455
        %v2520 = vpop.f32.mrf.mxu0
        %v2521 = vadd.f32 0.0, %v2520
        %2522 = vmatmul.f32.gmra.mxu0 %v2457
        %v2523 = vpop.f32.mrf.mxu0
        %v2524 = vadd.f32 0.0, %v2523
        %2525 = vmatmul.f32.gmra.mxu0 %v2459
        %v2526 = vpop.f32.mrf.mxu0
        %v2527 = vadd.f32 0.0, %v2526
        %2528 = vmatmul.f32.gmra.mxu0 %v2461
        %v2529 = vpop.f32.mrf.mxu0
        %v2530 = vadd.f32 0.0, %v2529
        %2531 = vmatmul.f32.gmra.mxu0 %v2463
        %v2532 = vpop.f32.mrf.mxu0
        %v2533 = vadd.f32 0.0, %v2532
        %2534 = vdwg.mxu0
        %2535 = vmatpush.msra.mxu0 %v2492
        %2536 = vmatpush.msra.mxu0 %v2447
        %2537 = vmatpush.msra.mxu0 %v2446
        %2538 = vmatpush.msra.mxu0 %v2445
        %2539 = vmatpush.msra.mxu0 %v2444
        %2540 = vmatpush.msra.mxu0 %v2443
        %2541 = vmatpush.msra.mxu0 %v2442
        %2542 = vmatpush.msra.mxu0 %v2441
        %2543 = vmatpush.msra.mxu0 %v2440
        %2544 = vmatpush.msra.mxu0 %v2439
        %2545 = vmatpush.msra.mxu0 %v2438
        %2546 = vmatpush.msra.mxu0 %v2437
        %2547 = vmatpush.msra.mxu0 %v2436
        %2548 = vmatpush.msra.mxu0 %v2435
        %2549 = vmatpush.msra.mxu0 %v2434
        %2550 = vmatpush.msra.mxu0 %v2433
        %2551 = vmatmul.f32.gmra.mxu0 %v2467
        %v2552 = vpop.f32.mrf.mxu0
        %v2553 = vadd.f32 %v2512, %v2552
        %2554 = vmatmul.f32.gmra.mxu0 %v2470
        %v2555 = vpop.f32.mrf.mxu0
        %v2556 = vadd.f32 %v2515, %v2555
        %2557 = vmatmul.f32.gmra.mxu0 %v2473
        %v2558 = vpop.f32.mrf.mxu0
        %v2559 = vadd.f32 %v2518, %v2558
        %2560 = vmatmul.f32.gmra.mxu0 %v2476
        %v2561 = vpop.f32.mrf.mxu0
        %v2562 = vadd.f32 %v2521, %v2561
        %2563 = vmatmul.f32.gmra.mxu0 %v2479
        %v2564 = vpop.f32.mrf.mxu0
        %v2565 = vadd.f32 %v2524, %v2564
        %2566 = vmatmul.f32.gmra.mxu0 %v2482
        %v2567 = vpop.f32.mrf.mxu0
        %v2568 = vadd.f32 %v2527, %v2567
        %2569 = vmatmul.f32.gmra.mxu0 %v2485
        %v2570 = vpop.f32.mrf.mxu0
        %v2571 = vadd.f32 %v2530, %v2570
        %2572 = vmatmul.f32.gmra.mxu0 %v2488
        %v2573 = vpop.f32.mrf.mxu0
        %v2574 = vadd.f32 %v2533, %v2573
        %2575 = vdwg.mxu0
        %v2576 = vld [vmem:[%s4] sm:$0xff]
        %v2577 = vld [vmem:[%s4 + $0x8] sm:$0xff]
        %v2578 = vld [vmem:[%s4 + $0x10] sm:$0xff]
        %v2579 = vld [vmem:[%s4 + $0x18] sm:$0xff]
        %s2580 = scalar_lea.vmem %s3, 128
        %v2581 = vld [vmem:[%s2580] sm:$0xff]
        %v2582 = vld [vmem:[%s2580 + $0x8] sm:$0xff]
        %v2583 = vld [vmem:[%s2580 + $0x10] sm:$0xff]
        %v2584 = vld [vmem:[%s2580 + $0x18] sm:$0xff]
        %v2585 = vld [vmem:[%s2580 + $0x20] sm:$0xff]
        %v2586 = vld [vmem:[%s2580 + $0x28] sm:$0xff]
        %v2587 = vld [vmem:[%s2580 + $0x30] sm:$0xff]
        %v2588 = vld [vmem:[%s2580 + $0x38] sm:$0xff]
        %v2589 = vld [vmem:[%s2580 + $0x40] sm:$0xff]
        %v2590 = vld [vmem:[%s2580 + $0x48] sm:$0xff]
        %v2591 = vld [vmem:[%s2580 + $0x50] sm:$0xff]
        %v2592 = vld [vmem:[%s2580 + $0x58] sm:$0xff]
        %v2593 = vld [vmem:[%s2580 + $0x60] sm:$0xff]
        %v2594 = vld [vmem:[%s2580 + $0x68] sm:$0xff]
        %v2595 = vld [vmem:[%s2580 + $0x70] sm:$0xf]
        %v2596 = vld [vmem:[%s2580 + $0x78] sm:$0xf]
        %v2598 = vsel %vm2465, %v2582, 0
        %v2601 = vsel %vm2465, %v2584, 0
        %v2604 = vsel %vm2465, %v2586, 0
        %v2607 = vsel %vm2465, %v2588, 0
        %v2610 = vsel %vm2465, %v2590, 0
        %v2613 = vsel %vm2465, %v2592, 0
        %v2616 = vsel %vm2465, %v2594, 0
        %v2619 = vsel %vm2465, %v2596, 0
        %2621 = vmatpush.msra.mxu0 %v2432
        %2622 = vmatpush.msra.mxu0 %v2431
        %2623 = vmatpush.msra.mxu0 %v2430
        %2624 = vmatpush.msra.mxu0 %v2429
        %2625 = vmatpush.msra.mxu0 %v2428
        %2626 = vmatpush.msra.mxu0 %v2427
        %2627 = vmatpush.msra.mxu0 %v2426
        %2628 = vmatpush.msra.mxu0 %v2425
        %2629 = vmatpush.msra.mxu0 %v2424
        %2630 = vmatpush.msra.mxu0 %v2423
        %2631 = vmatpush.msra.mxu0 %v2422
        %2632 = vmatpush.msra.mxu0 %v2421
        %2633 = vmatpush.msra.mxu0 %v2420
        %2634 = vmatpush.msra.mxu0 %v2419
        %2635 = vmatpush.msra.mxu0 %v2418
        %2636 = vmatpush.msra.mxu0 %v2417
        %2637 = vmatmul.f32.gmra.mxu0 %v2581
        %v2638 = vpop.f32.mrf.mxu0
        %v2639 = vadd.f32 0.0, %v2638
        %2640 = vmatmul.f32.gmra.mxu0 %v2583
        %v2641 = vpop.f32.mrf.mxu0
        %v2642 = vadd.f32 0.0, %v2641
        %2643 = vmatmul.f32.gmra.mxu0 %v2585
        %v2644 = vpop.f32.mrf.mxu0
        %v2645 = vadd.f32 0.0, %v2644
        %2646 = vmatmul.f32.gmra.mxu0 %v2587
        %v2647 = vpop.f32.mrf.mxu0
        %v2648 = vadd.f32 0.0, %v2647
        %2649 = vmatmul.f32.gmra.mxu0 %v2589
        %v2650 = vpop.f32.mrf.mxu0
        %v2651 = vadd.f32 0.0, %v2650
        %2652 = vmatmul.f32.gmra.mxu0 %v2591
        %v2653 = vpop.f32.mrf.mxu0
        %v2654 = vadd.f32 0.0, %v2653
        %2655 = vmatmul.f32.gmra.mxu0 %v2593
        %v2656 = vpop.f32.mrf.mxu0
        %v2657 = vadd.f32 0.0, %v2656
        %2658 = vmatmul.f32.gmra.mxu0 %v2595
        %v2659 = vpop.f32.mrf.mxu0
        %v2660 = vadd.f32 0.0, %v2659
        %2661 = vdwg.mxu0
        %2662 = vmatpush.msra.mxu0 %v2492
        %2663 = vmatpush.msra.mxu0 %v2447
        %2664 = vmatpush.msra.mxu0 %v2446
        %2665 = vmatpush.msra.mxu0 %v2445
        %2666 = vmatpush.msra.mxu0 %v2444
        %2667 = vmatpush.msra.mxu0 %v2443
        %2668 = vmatpush.msra.mxu0 %v2442
        %2669 = vmatpush.msra.mxu0 %v2441
        %2670 = vmatpush.msra.mxu0 %v2440
        %2671 = vmatpush.msra.mxu0 %v2439
        %2672 = vmatpush.msra.mxu0 %v2438
        %2673 = vmatpush.msra.mxu0 %v2437
        %2674 = vmatpush.msra.mxu0 %v2436
        %2675 = vmatpush.msra.mxu0 %v2435
        %2676 = vmatpush.msra.mxu0 %v2434
        %2677 = vmatpush.msra.mxu0 %v2433
        %2678 = vmatmul.f32.gmra.mxu0 %v2598
        %v2679 = vpop.f32.mrf.mxu0
        %v2680 = vadd.f32 %v2639, %v2679
        %2681 = vmatmul.f32.gmra.mxu0 %v2601
        %v2682 = vpop.f32.mrf.mxu0
        %v2683 = vadd.f32 %v2642, %v2682
        %2684 = vmatmul.f32.gmra.mxu0 %v2604
        %v2685 = vpop.f32.mrf.mxu0
        %v2686 = vadd.f32 %v2645, %v2685
        %2687 = vmatmul.f32.gmra.mxu0 %v2607
        %v2688 = vpop.f32.mrf.mxu0
        %v2689 = vadd.f32 %v2648, %v2688
        %2690 = vmatmul.f32.gmra.mxu0 %v2610
        %v2691 = vpop.f32.mrf.mxu0
        %v2692 = vadd.f32 %v2651, %v2691
        %2693 = vmatmul.f32.gmra.mxu0 %v2613
        %v2694 = vpop.f32.mrf.mxu0
        %v2695 = vadd.f32 %v2654, %v2694
        %2696 = vmatmul.f32.gmra.mxu0 %v2616
        %v2697 = vpop.f32.mrf.mxu0
        %v2698 = vadd.f32 %v2657, %v2697
        %2699 = vmatmul.f32.gmra.mxu0 %v2619
        %v2700 = vpop.f32.mrf.mxu0
        %v2701 = vadd.f32 %v2660, %v2700
        %2702 = vdwg.mxu0
        %s2703 = scalar_lea.vmem %s4, 32
        %v2704 = vld [vmem:[%s2703] sm:$0xff]
        %v2705 = vld [vmem:[%s2703 + $0x8] sm:$0xff]
        %v2706 = vld [vmem:[%s2703 + $0x10] sm:$0xff]
        %v2707 = vld [vmem:[%s2703 + $0x18] sm:$0xff]
        %vm2708 = vcmask 261120
        %v2710 = vsel %vm2708, %v2680, 0
        %v2713 = vsel %vm2708, %v2683, 0
        %v2716 = vsel %vm2708, %v2686, 0
        %v2719 = vsel %vm2708, %v2689, 0
        %v2722 = vsel %vm2708, %v2692, 0
        %v2725 = vsel %vm2708, %v2695, 0
        %v2728 = vsel %vm2708, %v2698, 0
        %v2731 = vsel %vm2708, %v2701, 0
        %2733 = vmatpush.msra.mxu0 0.0
        %2734 = vmatpush.msra.mxu0 0.0
        %2735 = vmatpush.msra.mxu0 0.0
        %2736 = vmatpush.msra.mxu0 0.0
        %2737 = vmatpush.msra.mxu0 0.0
        %2738 = vmatpush.msra.mxu0 0.0
        %2739 = vmatpush.msra.mxu0 0.0
        %2740 = vmatpush.msra.mxu0 0.0
        %2741 = vmatpush.msra.mxu0 0.0
        %2742 = vmatpush.msra.mxu0 0.0
        %2743 = vmatpush.msra.mxu0 0.0
        %2744 = vmatpush.msra.mxu0 0.0
        %2745 = vmatpush.msra.mxu0 %v2707
        %2746 = vmatpush.msra.mxu0 %v2706
        %2747 = vmatpush.msra.mxu0 %v2705
        %2748 = vmatpush.msra.mxu0 %v2704
        %2749 = vmatmul.f32.gmra.mxu0 %v2710
        %v2750 = vpop.f32.mrf.mxu0
        %v2751 = vadd.f32 0.0, %v2750
        %2752 = vmatmul.f32.gmra.mxu0 %v2713
        %v2753 = vpop.f32.mrf.mxu0
        %v2754 = vadd.f32 0.0, %v2753
        %2755 = vmatmul.f32.gmra.mxu0 %v2716
        %v2756 = vpop.f32.mrf.mxu0
        %v2757 = vadd.f32 0.0, %v2756
        %2758 = vmatmul.f32.gmra.mxu0 %v2719
        %v2759 = vpop.f32.mrf.mxu0
        %v2760 = vadd.f32 0.0, %v2759
        %2761 = vmatmul.f32.gmra.mxu0 %v2722
        %v2762 = vpop.f32.mrf.mxu0
        %v2763 = vadd.f32 0.0, %v2762
        %2764 = vmatmul.f32.gmra.mxu0 %v2725
        %v2765 = vpop.f32.mrf.mxu0
        %v2766 = vadd.f32 0.0, %v2765
        %2767 = vmatmul.f32.gmra.mxu0 %v2728
        %v2768 = vpop.f32.mrf.mxu0
        %v2769 = vadd.f32 0.0, %v2768
        %2770 = vmatmul.f32.gmra.mxu0 %v2731
        %v2771 = vpop.f32.mrf.mxu0
        %v2772 = vadd.f32 0.0, %v2771
        %2773 = vdwg.mxu0
        %v2775 = vsel %vm2708, %v2553, 0
        %v2778 = vsel %vm2708, %v2556, 0
        %v2781 = vsel %vm2708, %v2559, 0
        %v2784 = vsel %vm2708, %v2562, 0
        %v2787 = vsel %vm2708, %v2565, 0
        %v2790 = vsel %vm2708, %v2568, 0
        %v2793 = vsel %vm2708, %v2571, 0
        %v2796 = vsel %vm2708, %v2574, 0
        %2798 = vmatpush.msra.mxu0 0.0
        %2799 = vmatpush.msra.mxu0 0.0
        %2800 = vmatpush.msra.mxu0 0.0
        %2801 = vmatpush.msra.mxu0 0.0
        %2802 = vmatpush.msra.mxu0 0.0
        %2803 = vmatpush.msra.mxu0 0.0
        %2804 = vmatpush.msra.mxu0 0.0
        %2805 = vmatpush.msra.mxu0 0.0
        %2806 = vmatpush.msra.mxu0 0.0
        %2807 = vmatpush.msra.mxu0 0.0
        %2808 = vmatpush.msra.mxu0 0.0
        %2809 = vmatpush.msra.mxu0 0.0
        %2810 = vmatpush.msra.mxu0 %v2579
        %2811 = vmatpush.msra.mxu0 %v2578
        %2812 = vmatpush.msra.mxu0 %v2577
        %2813 = vmatpush.msra.mxu0 %v2576
        %2814 = vmatmul.f32.gmra.mxu0 %v2775
        %v2815 = vpop.f32.mrf.mxu0
        %v2816 = vadd.f32 %v2751, %v2815
        %2817 = vmatmul.f32.gmra.mxu0 %v2778
        %v2818 = vpop.f32.mrf.mxu0
        %v2819 = vadd.f32 %v2754, %v2818
        %2820 = vmatmul.f32.gmra.mxu0 %v2781
        %v2821 = vpop.f32.mrf.mxu0
        %v2822 = vadd.f32 %v2757, %v2821
        %2823 = vmatmul.f32.gmra.mxu0 %v2784
        %v2824 = vpop.f32.mrf.mxu0
        %v2825 = vadd.f32 %v2760, %v2824
        %2826 = vmatmul.f32.gmra.mxu0 %v2787
        %v2827 = vpop.f32.mrf.mxu0
        %v2828 = vadd.f32 %v2763, %v2827
        %2829 = vmatmul.f32.gmra.mxu0 %v2790
        %v2830 = vpop.f32.mrf.mxu0
        %v2831 = vadd.f32 %v2766, %v2830
        %2832 = vmatmul.f32.gmra.mxu0 %v2793
        %v2833 = vpop.f32.mrf.mxu0
        %v2834 = vadd.f32 %v2769, %v2833
        %2835 = vmatmul.f32.gmra.mxu0 %v2796
        %v2836 = vpop.f32.mrf.mxu0
        %v2837 = vadd.f32 %v2772, %v2836
        %2838 = vdwg.mxu0
        %s2839 = scalar_lea.vmem %s3, 256
        %v2840 = vld [vmem:[%s2839] sm:$0xff]
        %v2841 = vld [vmem:[%s2839 + $0x8] sm:$0xff]
        %v2842 = vld [vmem:[%s2839 + $0x10] sm:$0xff]
        %v2843 = vld [vmem:[%s2839 + $0x18] sm:$0xff]
        %v2844 = vld [vmem:[%s2839 + $0x20] sm:$0xff]
        %v2845 = vld [vmem:[%s2839 + $0x28] sm:$0xff]
        %v2846 = vld [vmem:[%s2839 + $0x30] sm:$0xff]
        %v2847 = vld [vmem:[%s2839 + $0x38] sm:$0xff]
        %v2848 = vld [vmem:[%s2839 + $0x40] sm:$0xff]
        %v2849 = vld [vmem:[%s2839 + $0x48] sm:$0xff]
        %v2850 = vld [vmem:[%s2839 + $0x50] sm:$0xff]
        %v2851 = vld [vmem:[%s2839 + $0x58] sm:$0xff]
        %v2852 = vld [vmem:[%s2839 + $0x60] sm:$0xff]
        %v2853 = vld [vmem:[%s2839 + $0x68] sm:$0xff]
        %v2854 = vld [vmem:[%s2839 + $0x70] sm:$0xf]
        %v2855 = vld [vmem:[%s2839 + $0x78] sm:$0xf]
        %v2857 = vsel %vm2465, %v2841, 0
        %v2860 = vsel %vm2465, %v2843, 0
        %v2863 = vsel %vm2465, %v2845, 0
        %v2866 = vsel %vm2465, %v2847, 0
        %v2869 = vsel %vm2465, %v2849, 0
        %v2872 = vsel %vm2465, %v2851, 0
        %v2875 = vsel %vm2465, %v2853, 0
        %v2878 = vsel %vm2465, %v2855, 0
        %2880 = vmatpush.msra.mxu0 %v2432
        %2881 = vmatpush.msra.mxu0 %v2431
        %2882 = vmatpush.msra.mxu0 %v2430
        %2883 = vmatpush.msra.mxu0 %v2429
        %2884 = vmatpush.msra.mxu0 %v2428
        %2885 = vmatpush.msra.mxu0 %v2427
        %2886 = vmatpush.msra.mxu0 %v2426
        %2887 = vmatpush.msra.mxu0 %v2425
        %2888 = vmatpush.msra.mxu0 %v2424
        %2889 = vmatpush.msra.mxu0 %v2423
        %2890 = vmatpush.msra.mxu0 %v2422
        %2891 = vmatpush.msra.mxu0 %v2421
        %2892 = vmatpush.msra.mxu0 %v2420
        %2893 = vmatpush.msra.mxu0 %v2419
        %2894 = vmatpush.msra.mxu0 %v2418
        %2895 = vmatpush.msra.mxu0 %v2417
        %2896 = vmatmul.f32.gmra.mxu0 %v2840
        %v2897 = vpop.f32.mrf.mxu0
        %v2898 = vadd.f32 0.0, %v2897
        %2899 = vmatmul.f32.gmra.mxu0 %v2842
        %v2900 = vpop.f32.mrf.mxu0
        %v2901 = vadd.f32 0.0, %v2900
        %2902 = vmatmul.f32.gmra.mxu0 %v2844
        %v2903 = vpop.f32.mrf.mxu0
        %v2904 = vadd.f32 0.0, %v2903
        %2905 = vmatmul.f32.gmra.mxu0 %v2846
        %v2906 = vpop.f32.mrf.mxu0
        %v2907 = vadd.f32 0.0, %v2906
        %2908 = vmatmul.f32.gmra.mxu0 %v2848
        %v2909 = vpop.f32.mrf.mxu0
        %v2910 = vadd.f32 0.0, %v2909
        %2911 = vmatmul.f32.gmra.mxu0 %v2850
        %v2912 = vpop.f32.mrf.mxu0
        %v2913 = vadd.f32 0.0, %v2912
        %2914 = vmatmul.f32.gmra.mxu0 %v2852
        %v2915 = vpop.f32.mrf.mxu0
        %v2916 = vadd.f32 0.0, %v2915
        %2917 = vmatmul.f32.gmra.mxu0 %v2854
        %v2918 = vpop.f32.mrf.mxu0
        %v2919 = vadd.f32 0.0, %v2918
        %2920 = vdwg.mxu0
        %2921 = vmatpush.msra.mxu0 %v2492
        %2922 = vmatpush.msra.mxu0 %v2447
        %2923 = vmatpush.msra.mxu0 %v2446
        %2924 = vmatpush.msra.mxu0 %v2445
        %2925 = vmatpush.msra.mxu0 %v2444
        %2926 = vmatpush.msra.mxu0 %v2443
        %2927 = vmatpush.msra.mxu0 %v2442
        %2928 = vmatpush.msra.mxu0 %v2441
        %2929 = vmatpush.msra.mxu0 %v2440
        %2930 = vmatpush.msra.mxu0 %v2439
        %2931 = vmatpush.msra.mxu0 %v2438
        %2932 = vmatpush.msra.mxu0 %v2437
        %2933 = vmatpush.msra.mxu0 %v2436
        %2934 = vmatpush.msra.mxu0 %v2435
        %2935 = vmatpush.msra.mxu0 %v2434
        %2936 = vmatpush.msra.mxu0 %v2433
        %2937 = vmatmul.f32.gmra.mxu0 %v2857
        %v2938 = vpop.f32.mrf.mxu0
        %v2939 = vadd.f32 %v2898, %v2938
        %2940 = vmatmul.f32.gmra.mxu0 %v2860
        %v2941 = vpop.f32.mrf.mxu0
        %v2942 = vadd.f32 %v2901, %v2941
        %2943 = vmatmul.f32.gmra.mxu0 %v2863
        %v2944 = vpop.f32.mrf.mxu0
        %v2945 = vadd.f32 %v2904, %v2944
        %2946 = vmatmul.f32.gmra.mxu0 %v2866
        %v2947 = vpop.f32.mrf.mxu0
        %v2948 = vadd.f32 %v2907, %v2947
        %2949 = vmatmul.f32.gmra.mxu0 %v2869
        %v2950 = vpop.f32.mrf.mxu0
        %v2951 = vadd.f32 %v2910, %v2950
        %2952 = vmatmul.f32.gmra.mxu0 %v2872
        %v2953 = vpop.f32.mrf.mxu0
        %v2954 = vadd.f32 %v2913, %v2953
        %2955 = vmatmul.f32.gmra.mxu0 %v2875
        %v2956 = vpop.f32.mrf.mxu0
        %v2957 = vadd.f32 %v2916, %v2956
        %2958 = vmatmul.f32.gmra.mxu0 %v2878
        %v2959 = vpop.f32.mrf.mxu0
        %v2960 = vadd.f32 %v2919, %v2959
        %2961 = vdwg.mxu0
        %s2962 = scalar_lea.vmem %s4, 64
        %v2963 = vld [vmem:[%s2962] sm:$0xff]
        %v2964 = vld [vmem:[%s2962 + $0x8] sm:$0xff]
        %v2965 = vld [vmem:[%s2962 + $0x10] sm:$0xff]
        %v2966 = vld [vmem:[%s2962 + $0x18] sm:$0xff]
        %v2968 = vsel %vm2708, %v2939, 0
        %v2971 = vsel %vm2708, %v2942, 0
        %v2974 = vsel %vm2708, %v2945, 0
        %v2977 = vsel %vm2708, %v2948, 0
        %v2980 = vsel %vm2708, %v2951, 0
        %v2983 = vsel %vm2708, %v2954, 0
        %v2986 = vsel %vm2708, %v2957, 0
        %v2989 = vsel %vm2708, %v2960, 0
        %2991 = vmatpush.msra.mxu0 0.0
        %2992 = vmatpush.msra.mxu0 0.0
        %2993 = vmatpush.msra.mxu0 0.0
        %2994 = vmatpush.msra.mxu0 0.0
        %2995 = vmatpush.msra.mxu0 0.0
        %2996 = vmatpush.msra.mxu0 0.0
        %2997 = vmatpush.msra.mxu0 0.0
        %2998 = vmatpush.msra.mxu0 0.0
        %2999 = vmatpush.msra.mxu0 0.0
        %3000 = vmatpush.msra.mxu0 0.0
        %3001 = vmatpush.msra.mxu0 0.0
        %3002 = vmatpush.msra.mxu0 0.0
        %3003 = vmatpush.msra.mxu0 %v2966
        %3004 = vmatpush.msra.mxu0 %v2965
        %3005 = vmatpush.msra.mxu0 %v2964
        %3006 = vmatpush.msra.mxu0 %v2963
        %3007 = vmatmul.f32.gmra.mxu0 %v2968
        %v3008 = vpop.f32.mrf.mxu0
        %v3009 = vadd.f32 0.0, %v3008
        %3010 = vmatmul.f32.gmra.mxu0 %v2971
        %v3011 = vpop.f32.mrf.mxu0
        %v3012 = vadd.f32 0.0, %v3011
        %3013 = vmatmul.f32.gmra.mxu0 %v2974
        %v3014 = vpop.f32.mrf.mxu0
        %v3015 = vadd.f32 0.0, %v3014
        %3016 = vmatmul.f32.gmra.mxu0 %v2977
        %v3017 = vpop.f32.mrf.mxu0
        %v3018 = vadd.f32 0.0, %v3017
        %3019 = vmatmul.f32.gmra.mxu0 %v2980
        %v3020 = vpop.f32.mrf.mxu0
        %v3021 = vadd.f32 0.0, %v3020
        %3022 = vmatmul.f32.gmra.mxu0 %v2983
        %v3023 = vpop.f32.mrf.mxu0
        %v3024 = vadd.f32 0.0, %v3023
        %3025 = vmatmul.f32.gmra.mxu0 %v2986
        %v3026 = vpop.f32.mrf.mxu0
        %v3027 = vadd.f32 0.0, %v3026
        %3028 = vmatmul.f32.gmra.mxu0 %v2989
        %v3029 = vpop.f32.mrf.mxu0
        %v3030 = vadd.f32 0.0, %v3029
        %3031 = vdwg.mxu0
        %v3032 = vadd.f32 %v2816, %v3009
        %v3033 = vadd.f32 %v2819, %v3012
        %v3034 = vadd.f32 %v2822, %v3015
        %v3035 = vadd.f32 %v2825, %v3018
        %v3036 = vadd.f32 %v2828, %v3021
        %v3037 = vadd.f32 %v2831, %v3024
        %v3038 = vadd.f32 %v2834, %v3027
        %v3039 = vadd.f32 %v2837, %v3030
        %s3040 = scalar_lea.vmem %s3, 384
        %v3041 = vld [vmem:[%s3040] sm:$0xff]
        %v3042 = vld [vmem:[%s3040 + $0x8] sm:$0xff]
        %v3043 = vld [vmem:[%s3040 + $0x10] sm:$0xff]
        %v3044 = vld [vmem:[%s3040 + $0x18] sm:$0xff]
        %v3045 = vld [vmem:[%s3040 + $0x20] sm:$0xff]
        %v3046 = vld [vmem:[%s3040 + $0x28] sm:$0xff]
        %v3047 = vld [vmem:[%s3040 + $0x30] sm:$0xff]
        %v3048 = vld [vmem:[%s3040 + $0x38] sm:$0xff]
        %v3049 = vld [vmem:[%s3040 + $0x40] sm:$0xff]
        %v3050 = vld [vmem:[%s3040 + $0x48] sm:$0xff]
        %v3051 = vld [vmem:[%s3040 + $0x50] sm:$0xff]
        %v3052 = vld [vmem:[%s3040 + $0x58] sm:$0xff]
        %v3053 = vld [vmem:[%s3040 + $0x60] sm:$0xff]
        %v3054 = vld [vmem:[%s3040 + $0x68] sm:$0xff]
        %v3055 = vld [vmem:[%s3040 + $0x70] sm:$0xf]
        %v3056 = vld [vmem:[%s3040 + $0x78] sm:$0xf]
        %v3058 = vsel %vm2465, %v3042, 0
        %v3061 = vsel %vm2465, %v3044, 0
        %v3064 = vsel %vm2465, %v3046, 0
        %v3067 = vsel %vm2465, %v3048, 0
        %v3070 = vsel %vm2465, %v3050, 0
        %v3073 = vsel %vm2465, %v3052, 0
        %v3076 = vsel %vm2465, %v3054, 0
        %v3079 = vsel %vm2465, %v3056, 0
        %3081 = vmatpush.msra.mxu0 %v2432
        %3082 = vmatpush.msra.mxu0 %v2431
        %3083 = vmatpush.msra.mxu0 %v2430
        %3084 = vmatpush.msra.mxu0 %v2429
        %3085 = vmatpush.msra.mxu0 %v2428
        %3086 = vmatpush.msra.mxu0 %v2427
        %3087 = vmatpush.msra.mxu0 %v2426
        %3088 = vmatpush.msra.mxu0 %v2425
        %3089 = vmatpush.msra.mxu0 %v2424
        %3090 = vmatpush.msra.mxu0 %v2423
        %3091 = vmatpush.msra.mxu0 %v2422
        %3092 = vmatpush.msra.mxu0 %v2421
        %3093 = vmatpush.msra.mxu0 %v2420
        %3094 = vmatpush.msra.mxu0 %v2419
        %3095 = vmatpush.msra.mxu0 %v2418
        %3096 = vmatpush.msra.mxu0 %v2417
        %3097 = vmatmul.f32.gmra.mxu0 %v3041
        %v3098 = vpop.f32.mrf.mxu0
        %v3099 = vadd.f32 0.0, %v3098
        %3100 = vmatmul.f32.gmra.mxu0 %v3043
        %v3101 = vpop.f32.mrf.mxu0
        %v3102 = vadd.f32 0.0, %v3101
        %3103 = vmatmul.f32.gmra.mxu0 %v3045
        %v3104 = vpop.f32.mrf.mxu0
        %v3105 = vadd.f32 0.0, %v3104
        %3106 = vmatmul.f32.gmra.mxu0 %v3047
        %v3107 = vpop.f32.mrf.mxu0
        %v3108 = vadd.f32 0.0, %v3107
        %3109 = vmatmul.f32.gmra.mxu0 %v3049
        %v3110 = vpop.f32.mrf.mxu0
        %v3111 = vadd.f32 0.0, %v3110
        %3112 = vmatmul.f32.gmra.mxu0 %v3051
        %v3113 = vpop.f32.mrf.mxu0
        %v3114 = vadd.f32 0.0, %v3113
        %3115 = vmatmul.f32.gmra.mxu0 %v3053
        %v3116 = vpop.f32.mrf.mxu0
        %v3117 = vadd.f32 0.0, %v3116
        %3118 = vmatmul.f32.gmra.mxu0 %v3055
        %v3119 = vpop.f32.mrf.mxu0
        %v3120 = vadd.f32 0.0, %v3119
        %3121 = vdwg.mxu0
        %3122 = vmatpush.msra.mxu0 %v2492
        %3123 = vmatpush.msra.mxu0 %v2447
        %3124 = vmatpush.msra.mxu0 %v2446
        %3125 = vmatpush.msra.mxu0 %v2445
        %3126 = vmatpush.msra.mxu0 %v2444
        %3127 = vmatpush.msra.mxu0 %v2443
        %3128 = vmatpush.msra.mxu0 %v2442
        %3129 = vmatpush.msra.mxu0 %v2441
        %3130 = vmatpush.msra.mxu0 %v2440
        %3131 = vmatpush.msra.mxu0 %v2439
        %3132 = vmatpush.msra.mxu0 %v2438
        %3133 = vmatpush.msra.mxu0 %v2437
        %3134 = vmatpush.msra.mxu0 %v2436
        %3135 = vmatpush.msra.mxu0 %v2435
        %3136 = vmatpush.msra.mxu0 %v2434
        %3137 = vmatpush.msra.mxu0 %v2433
        %3138 = vmatmul.f32.gmra.mxu0 %v3058
        %v3139 = vpop.f32.mrf.mxu0
        %v3140 = vadd.f32 %v3099, %v3139
        %3141 = vmatmul.f32.gmra.mxu0 %v3061
        %v3142 = vpop.f32.mrf.mxu0
        %v3143 = vadd.f32 %v3102, %v3142
        %3144 = vmatmul.f32.gmra.mxu0 %v3064
        %v3145 = vpop.f32.mrf.mxu0
        %v3146 = vadd.f32 %v3105, %v3145
        %3147 = vmatmul.f32.gmra.mxu0 %v3067
        %v3148 = vpop.f32.mrf.mxu0
        %v3149 = vadd.f32 %v3108, %v3148
        %3150 = vmatmul.f32.gmra.mxu0 %v3070
        %v3151 = vpop.f32.mrf.mxu0
        %v3152 = vadd.f32 %v3111, %v3151
        %3153 = vmatmul.f32.gmra.mxu0 %v3073
        %v3154 = vpop.f32.mrf.mxu0
        %v3155 = vadd.f32 %v3114, %v3154
        %3156 = vmatmul.f32.gmra.mxu0 %v3076
        %v3157 = vpop.f32.mrf.mxu0
        %v3158 = vadd.f32 %v3117, %v3157
        %3159 = vmatmul.f32.gmra.mxu0 %v3079
        %v3160 = vpop.f32.mrf.mxu0
        %v3161 = vadd.f32 %v3120, %v3160
        %3162 = vdwg.mxu0
        %s3163 = scalar_lea.vmem %s4, 96
        %v3164 = vld [vmem:[%s3163] sm:$0xff]
        %v3165 = vld [vmem:[%s3163 + $0x8] sm:$0xff]
        %v3166 = vld [vmem:[%s3163 + $0x10] sm:$0xff]
        %v3167 = vld [vmem:[%s3163 + $0x18] sm:$0xff]
        %v3169 = vsel %vm2708, %v3140, 0
        %v3172 = vsel %vm2708, %v3143, 0
        %v3175 = vsel %vm2708, %v3146, 0
        %v3178 = vsel %vm2708, %v3149, 0
        %v3181 = vsel %vm2708, %v3152, 0
        %v3184 = vsel %vm2708, %v3155, 0
        %v3187 = vsel %vm2708, %v3158, 0
        %v3190 = vsel %vm2708, %v3161, 0
        %3192 = vmatpush.msra.mxu0 0.0
        %3193 = vmatpush.msra.mxu0 0.0
        %3194 = vmatpush.msra.mxu0 0.0
        %3195 = vmatpush.msra.mxu0 0.0
        %3196 = vmatpush.msra.mxu0 0.0
        %3197 = vmatpush.msra.mxu0 0.0
        %3198 = vmatpush.msra.mxu0 0.0
        %3199 = vmatpush.msra.mxu0 0.0
        %3200 = vmatpush.msra.mxu0 0.0
        %3201 = vmatpush.msra.mxu0 0.0
        %3202 = vmatpush.msra.mxu0 0.0
        %3203 = vmatpush.msra.mxu0 0.0
        %3204 = vmatpush.msra.mxu0 %v3167
        %3205 = vmatpush.msra.mxu0 %v3166
        %3206 = vmatpush.msra.mxu0 %v3165
        %3207 = vmatpush.msra.mxu0 %v3164
        %3208 = vmatmul.f32.gmra.mxu0 %v3169
        %v3209 = vpop.f32.mrf.mxu0
        %v3210 = vadd.f32 0.0, %v3209
        %3211 = vmatmul.f32.gmra.mxu0 %v3172
        %v3212 = vpop.f32.mrf.mxu0
        %v3213 = vadd.f32 0.0, %v3212
        %3214 = vmatmul.f32.gmra.mxu0 %v3175
        %v3215 = vpop.f32.mrf.mxu0
        %v3216 = vadd.f32 0.0, %v3215
        %3217 = vmatmul.f32.gmra.mxu0 %v3178
        %v3218 = vpop.f32.mrf.mxu0
        %v3219 = vadd.f32 0.0, %v3218
        %3220 = vmatmul.f32.gmra.mxu0 %v3181
        %v3221 = vpop.f32.mrf.mxu0
        %v3222 = vadd.f32 0.0, %v3221
        %3223 = vmatmul.f32.gmra.mxu0 %v3184
        %v3224 = vpop.f32.mrf.mxu0
        %v3225 = vadd.f32 0.0, %v3224
        %3226 = vmatmul.f32.gmra.mxu0 %v3187
        %v3227 = vpop.f32.mrf.mxu0
        %v3228 = vadd.f32 0.0, %v3227
        %3229 = vmatmul.f32.gmra.mxu0 %v3190
        %v3230 = vpop.f32.mrf.mxu0
        %v3231 = vadd.f32 0.0, %v3230
        %3232 = vdwg.mxu0
        %v3233 = vadd.f32 %v3032, %v3210
        %v3234 = vadd.f32 %v3033, %v3213
        %v3235 = vadd.f32 %v3034, %v3216
        %v3236 = vadd.f32 %v3035, %v3219
        %v3237 = vadd.f32 %v3036, %v3222
        %v3238 = vadd.f32 %v3037, %v3225
        %v3239 = vadd.f32 %v3038, %v3228
        %v3240 = vadd.f32 %v3039, %v3231
        %s3241 = scalar_lea.vmem %s3, 512
        %v3242 = vld [vmem:[%s3241] sm:$0xff]
        %v3243 = vld [vmem:[%s3241 + $0x8] sm:$0xff]
        %v3244 = vld [vmem:[%s3241 + $0x10] sm:$0xff]
        %v3245 = vld [vmem:[%s3241 + $0x18] sm:$0xff]
        %v3246 = vld [vmem:[%s3241 + $0x20] sm:$0xff]
        %v3247 = vld [vmem:[%s3241 + $0x28] sm:$0xff]
        %v3248 = vld [vmem:[%s3241 + $0x30] sm:$0xff]
        %v3249 = vld [vmem:[%s3241 + $0x38] sm:$0xff]
        %v3250 = vld [vmem:[%s3241 + $0x40] sm:$0xff]
        %v3251 = vld [vmem:[%s3241 + $0x48] sm:$0xff]
        %v3252 = vld [vmem:[%s3241 + $0x50] sm:$0xff]
        %v3253 = vld [vmem:[%s3241 + $0x58] sm:$0xff]
        %v3254 = vld [vmem:[%s3241 + $0x60] sm:$0xff]
        %v3255 = vld [vmem:[%s3241 + $0x68] sm:$0xff]
        %v3256 = vld [vmem:[%s3241 + $0x70] sm:$0xf]
        %v3257 = vld [vmem:[%s3241 + $0x78] sm:$0xf]
        %v3259 = vsel %vm2465, %v3243, 0
        %v3262 = vsel %vm2465, %v3245, 0
        %v3265 = vsel %vm2465, %v3247, 0
        %v3268 = vsel %vm2465, %v3249, 0
        %v3271 = vsel %vm2465, %v3251, 0
        %v3274 = vsel %vm2465, %v3253, 0
        %v3277 = vsel %vm2465, %v3255, 0
        %v3280 = vsel %vm2465, %v3257, 0
        %3282 = vmatpush.msra.mxu0 %v2432
        %3283 = vmatpush.msra.mxu0 %v2431
        %3284 = vmatpush.msra.mxu0 %v2430
        %3285 = vmatpush.msra.mxu0 %v2429
        %3286 = vmatpush.msra.mxu0 %v2428
        %3287 = vmatpush.msra.mxu0 %v2427
        %3288 = vmatpush.msra.mxu0 %v2426
        %3289 = vmatpush.msra.mxu0 %v2425
        %3290 = vmatpush.msra.mxu0 %v2424
        %3291 = vmatpush.msra.mxu0 %v2423
        %3292 = vmatpush.msra.mxu0 %v2422
        %3293 = vmatpush.msra.mxu0 %v2421
        %3294 = vmatpush.msra.mxu0 %v2420
        %3295 = vmatpush.msra.mxu0 %v2419
        %3296 = vmatpush.msra.mxu0 %v2418
        %3297 = vmatpush.msra.mxu0 %v2417
        %3298 = vmatmul.f32.gmra.mxu0 %v3242
        %v3299 = vpop.f32.mrf.mxu0
        %v3300 = vadd.f32 0.0, %v3299
        %3301 = vmatmul.f32.gmra.mxu0 %v3244
        %v3302 = vpop.f32.mrf.mxu0
        %v3303 = vadd.f32 0.0, %v3302
        %3304 = vmatmul.f32.gmra.mxu0 %v3246
        %v3305 = vpop.f32.mrf.mxu0
        %v3306 = vadd.f32 0.0, %v3305
        %3307 = vmatmul.f32.gmra.mxu0 %v3248
        %v3308 = vpop.f32.mrf.mxu0
        %v3309 = vadd.f32 0.0, %v3308
        %3310 = vmatmul.f32.gmra.mxu0 %v3250
        %v3311 = vpop.f32.mrf.mxu0
        %v3312 = vadd.f32 0.0, %v3311
        %3313 = vmatmul.f32.gmra.mxu0 %v3252
        %v3314 = vpop.f32.mrf.mxu0
        %v3315 = vadd.f32 0.0, %v3314
        %3316 = vmatmul.f32.gmra.mxu0 %v3254
        %v3317 = vpop.f32.mrf.mxu0
        %v3318 = vadd.f32 0.0, %v3317
        %3319 = vmatmul.f32.gmra.mxu0 %v3256
        %v3320 = vpop.f32.mrf.mxu0
        %v3321 = vadd.f32 0.0, %v3320
        %3322 = vdwg.mxu0
        %3323 = vmatpush.msra.mxu0 %v2492
        %3324 = vmatpush.msra.mxu0 %v2447
        %3325 = vmatpush.msra.mxu0 %v2446
        %3326 = vmatpush.msra.mxu0 %v2445
        %3327 = vmatpush.msra.mxu0 %v2444
        %3328 = vmatpush.msra.mxu0 %v2443
        %3329 = vmatpush.msra.mxu0 %v2442
        %3330 = vmatpush.msra.mxu0 %v2441
        %3331 = vmatpush.msra.mxu0 %v2440
        %3332 = vmatpush.msra.mxu0 %v2439
        %3333 = vmatpush.msra.mxu0 %v2438
        %3334 = vmatpush.msra.mxu0 %v2437
        %3335 = vmatpush.msra.mxu0 %v2436
        %3336 = vmatpush.msra.mxu0 %v2435
        %3337 = vmatpush.msra.mxu0 %v2434
        %3338 = vmatpush.msra.mxu0 %v2433
        %3339 = vmatmul.f32.gmra.mxu0 %v3259
        %v3340 = vpop.f32.mrf.mxu0
        %v3341 = vadd.f32 %v3300, %v3340
        %3342 = vmatmul.f32.gmra.mxu0 %v3262
        %v3343 = vpop.f32.mrf.mxu0
        %v3344 = vadd.f32 %v3303, %v3343
        %3345 = vmatmul.f32.gmra.mxu0 %v3265
        %v3346 = vpop.f32.mrf.mxu0
        %v3347 = vadd.f32 %v3306, %v3346
        %3348 = vmatmul.f32.gmra.mxu0 %v3268
        %v3349 = vpop.f32.mrf.mxu0
        %v3350 = vadd.f32 %v3309, %v3349
        %3351 = vmatmul.f32.gmra.mxu0 %v3271
        %v3352 = vpop.f32.mrf.mxu0
        %v3353 = vadd.f32 %v3312, %v3352
        %3354 = vmatmul.f32.gmra.mxu0 %v3274
        %v3355 = vpop.f32.mrf.mxu0
        %v3356 = vadd.f32 %v3315, %v3355
        %3357 = vmatmul.f32.gmra.mxu0 %v3277
        %v3358 = vpop.f32.mrf.mxu0
        %v3359 = vadd.f32 %v3318, %v3358
        %3360 = vmatmul.f32.gmra.mxu0 %v3280
        %v3361 = vpop.f32.mrf.mxu0
        %v3362 = vadd.f32 %v3321, %v3361
        %3363 = vdwg.mxu0
        %s3364 = scalar_lea.vmem %s4, 128
        %v3365 = vld [vmem:[%s3364] sm:$0xff]
        %v3366 = vld [vmem:[%s3364 + $0x8] sm:$0xff]
        %v3367 = vld [vmem:[%s3364 + $0x10] sm:$0xff]
        %v3368 = vld [vmem:[%s3364 + $0x18] sm:$0xff]
        %v3370 = vsel %vm2708, %v3341, 0
        %v3373 = vsel %vm2708, %v3344, 0
        %v3376 = vsel %vm2708, %v3347, 0
        %v3379 = vsel %vm2708, %v3350, 0
        %v3382 = vsel %vm2708, %v3353, 0
        %v3385 = vsel %vm2708, %v3356, 0
        %v3388 = vsel %vm2708, %v3359, 0
        %v3391 = vsel %vm2708, %v3362, 0
        %3393 = vmatpush.msra.mxu0 0.0
        %3394 = vmatpush.msra.mxu0 0.0
        %3395 = vmatpush.msra.mxu0 0.0
        %3396 = vmatpush.msra.mxu0 0.0
        %3397 = vmatpush.msra.mxu0 0.0
        %3398 = vmatpush.msra.mxu0 0.0
        %3399 = vmatpush.msra.mxu0 0.0
        %3400 = vmatpush.msra.mxu0 0.0
        %3401 = vmatpush.msra.mxu0 0.0
        %3402 = vmatpush.msra.mxu0 0.0
        %3403 = vmatpush.msra.mxu0 0.0
        %3404 = vmatpush.msra.mxu0 0.0
        %3405 = vmatpush.msra.mxu0 %v3368
        %3406 = vmatpush.msra.mxu0 %v3367
        %3407 = vmatpush.msra.mxu0 %v3366
        %3408 = vmatpush.msra.mxu0 %v3365
        %3409 = vmatmul.f32.gmra.mxu0 %v3370
        %v3410 = vpop.f32.mrf.mxu0
        %v3411 = vadd.f32 0.0, %v3410
        %3412 = vmatmul.f32.gmra.mxu0 %v3373
        %v3413 = vpop.f32.mrf.mxu0
        %v3414 = vadd.f32 0.0, %v3413
        %3415 = vmatmul.f32.gmra.mxu0 %v3376
        %v3416 = vpop.f32.mrf.mxu0
        %v3417 = vadd.f32 0.0, %v3416
        %3418 = vmatmul.f32.gmra.mxu0 %v3379
        %v3419 = vpop.f32.mrf.mxu0
        %v3420 = vadd.f32 0.0, %v3419
        %3421 = vmatmul.f32.gmra.mxu0 %v3382
        %v3422 = vpop.f32.mrf.mxu0
        %v3423 = vadd.f32 0.0, %v3422
        %3424 = vmatmul.f32.gmra.mxu0 %v3385
        %v3425 = vpop.f32.mrf.mxu0
        %v3426 = vadd.f32 0.0, %v3425
        %3427 = vmatmul.f32.gmra.mxu0 %v3388
        %v3428 = vpop.f32.mrf.mxu0
        %v3429 = vadd.f32 0.0, %v3428
        %3430 = vmatmul.f32.gmra.mxu0 %v3391
        %v3431 = vpop.f32.mrf.mxu0
        %v3432 = vadd.f32 0.0, %v3431
        %3433 = vdwg.mxu0
        %v3434 = vadd.f32 %v3233, %v3411
        %v3435 = vadd.f32 %v3234, %v3414
        %v3436 = vadd.f32 %v3235, %v3417
        %v3437 = vadd.f32 %v3236, %v3420
        %v3438 = vadd.f32 %v3237, %v3423
        %v3439 = vadd.f32 %v3238, %v3426
        %v3440 = vadd.f32 %v3239, %v3429
        %v3441 = vadd.f32 %v3240, %v3432
        %s3442 = scalar_lea.vmem %s3, 640
        %v3443 = vld [vmem:[%s3442] sm:$0xff]
        %v3444 = vld [vmem:[%s3442 + $0x8] sm:$0xff]
        %v3445 = vld [vmem:[%s3442 + $0x10] sm:$0xff]
        %v3446 = vld [vmem:[%s3442 + $0x18] sm:$0xff]
        %v3447 = vld [vmem:[%s3442 + $0x20] sm:$0xff]
        %v3448 = vld [vmem:[%s3442 + $0x28] sm:$0xff]
        %v3449 = vld [vmem:[%s3442 + $0x30] sm:$0xff]
        %v3450 = vld [vmem:[%s3442 + $0x38] sm:$0xff]
        %v3451 = vld [vmem:[%s3442 + $0x40] sm:$0xff]
        %v3452 = vld [vmem:[%s3442 + $0x48] sm:$0xff]
        %v3453 = vld [vmem:[%s3442 + $0x50] sm:$0xff]
        %v3454 = vld [vmem:[%s3442 + $0x58] sm:$0xff]
        %v3455 = vld [vmem:[%s3442 + $0x60] sm:$0xff]
        %v3456 = vld [vmem:[%s3442 + $0x68] sm:$0xff]
        %v3457 = vld [vmem:[%s3442 + $0x70] sm:$0xf]
        %v3458 = vld [vmem:[%s3442 + $0x78] sm:$0xf]
        %v3460 = vsel %vm2465, %v3444, 0
        %v3463 = vsel %vm2465, %v3446, 0
        %v3466 = vsel %vm2465, %v3448, 0
        %v3469 = vsel %vm2465, %v3450, 0
        %v3472 = vsel %vm2465, %v3452, 0
        %v3475 = vsel %vm2465, %v3454, 0
        %v3478 = vsel %vm2465, %v3456, 0
        %v3481 = vsel %vm2465, %v3458, 0
        %3483 = vmatpush.msra.mxu0 %v2432
        %3484 = vmatpush.msra.mxu0 %v2431
        %3485 = vmatpush.msra.mxu0 %v2430
        %3486 = vmatpush.msra.mxu0 %v2429
        %3487 = vmatpush.msra.mxu0 %v2428
        %3488 = vmatpush.msra.mxu0 %v2427
        %3489 = vmatpush.msra.mxu0 %v2426
        %3490 = vmatpush.msra.mxu0 %v2425
        %3491 = vmatpush.msra.mxu0 %v2424
        %3492 = vmatpush.msra.mxu0 %v2423
        %3493 = vmatpush.msra.mxu0 %v2422
        %3494 = vmatpush.msra.mxu0 %v2421
        %3495 = vmatpush.msra.mxu0 %v2420
        %3496 = vmatpush.msra.mxu0 %v2419
        %3497 = vmatpush.msra.mxu0 %v2418
        %3498 = vmatpush.msra.mxu0 %v2417
        %3499 = vmatmul.f32.gmra.mxu0 %v3443
        %v3500 = vpop.f32.mrf.mxu0
        %v3501 = vadd.f32 0.0, %v3500
        %3502 = vmatmul.f32.gmra.mxu0 %v3445
        %v3503 = vpop.f32.mrf.mxu0
        %v3504 = vadd.f32 0.0, %v3503
        %3505 = vmatmul.f32.gmra.mxu0 %v3447
        %v3506 = vpop.f32.mrf.mxu0
        %v3507 = vadd.f32 0.0, %v3506
        %3508 = vmatmul.f32.gmra.mxu0 %v3449
        %v3509 = vpop.f32.mrf.mxu0
        %v3510 = vadd.f32 0.0, %v3509
        %3511 = vmatmul.f32.gmra.mxu0 %v3451
        %v3512 = vpop.f32.mrf.mxu0
        %v3513 = vadd.f32 0.0, %v3512
        %3514 = vmatmul.f32.gmra.mxu0 %v3453
        %v3515 = vpop.f32.mrf.mxu0
        %v3516 = vadd.f32 0.0, %v3515
        %3517 = vmatmul.f32.gmra.mxu0 %v3455
        %v3518 = vpop.f32.mrf.mxu0
        %v3519 = vadd.f32 0.0, %v3518
        %3520 = vmatmul.f32.gmra.mxu0 %v3457
        %v3521 = vpop.f32.mrf.mxu0
        %v3522 = vadd.f32 0.0, %v3521
        %3523 = vdwg.mxu0
        %3524 = vmatpush.msra.mxu0 %v2492
        %3525 = vmatpush.msra.mxu0 %v2447
        %3526 = vmatpush.msra.mxu0 %v2446
        %3527 = vmatpush.msra.mxu0 %v2445
        %3528 = vmatpush.msra.mxu0 %v2444
        %3529 = vmatpush.msra.mxu0 %v2443
        %3530 = vmatpush.msra.mxu0 %v2442
        %3531 = vmatpush.msra.mxu0 %v2441
        %3532 = vmatpush.msra.mxu0 %v2440
        %3533 = vmatpush.msra.mxu0 %v2439
        %3534 = vmatpush.msra.mxu0 %v2438
        %3535 = vmatpush.msra.mxu0 %v2437
        %3536 = vmatpush.msra.mxu0 %v2436
        %3537 = vmatpush.msra.mxu0 %v2435
        %3538 = vmatpush.msra.mxu0 %v2434
        %3539 = vmatpush.msra.mxu0 %v2433
        %3540 = vmatmul.f32.gmra.mxu0 %v3460
        %v3541 = vpop.f32.mrf.mxu0
        %v3542 = vadd.f32 %v3501, %v3541
        %3543 = vmatmul.f32.gmra.mxu0 %v3463
        %v3544 = vpop.f32.mrf.mxu0
        %v3545 = vadd.f32 %v3504, %v3544
        %3546 = vmatmul.f32.gmra.mxu0 %v3466
        %v3547 = vpop.f32.mrf.mxu0
        %v3548 = vadd.f32 %v3507, %v3547
        %3549 = vmatmul.f32.gmra.mxu0 %v3469
        %v3550 = vpop.f32.mrf.mxu0
        %v3551 = vadd.f32 %v3510, %v3550
        %3552 = vmatmul.f32.gmra.mxu0 %v3472
        %v3553 = vpop.f32.mrf.mxu0
        %v3554 = vadd.f32 %v3513, %v3553
        %3555 = vmatmul.f32.gmra.mxu0 %v3475
        %v3556 = vpop.f32.mrf.mxu0
        %v3557 = vadd.f32 %v3516, %v3556
        %3558 = vmatmul.f32.gmra.mxu0 %v3478
        %v3559 = vpop.f32.mrf.mxu0
        %v3560 = vadd.f32 %v3519, %v3559
        %3561 = vmatmul.f32.gmra.mxu0 %v3481
        %v3562 = vpop.f32.mrf.mxu0
        %v3563 = vadd.f32 %v3522, %v3562
        %3564 = vdwg.mxu0
        %s3565 = scalar_lea.vmem %s4, 160
        %v3566 = vld [vmem:[%s3565] sm:$0xff]
        %v3567 = vld [vmem:[%s3565 + $0x8] sm:$0xff]
        %v3568 = vld [vmem:[%s3565 + $0x10] sm:$0xff]
        %v3569 = vld [vmem:[%s3565 + $0x18] sm:$0xff]
        %v3571 = vsel %vm2708, %v3542, 0
        %v3574 = vsel %vm2708, %v3545, 0
        %v3577 = vsel %vm2708, %v3548, 0
        %v3580 = vsel %vm2708, %v3551, 0
        %v3583 = vsel %vm2708, %v3554, 0
        %v3586 = vsel %vm2708, %v3557, 0
        %v3589 = vsel %vm2708, %v3560, 0
        %v3592 = vsel %vm2708, %v3563, 0
        %3594 = vmatpush.msra.mxu0 0.0
        %3595 = vmatpush.msra.mxu0 0.0
        %3596 = vmatpush.msra.mxu0 0.0
        %3597 = vmatpush.msra.mxu0 0.0
        %3598 = vmatpush.msra.mxu0 0.0
        %3599 = vmatpush.msra.mxu0 0.0
        %3600 = vmatpush.msra.mxu0 0.0
        %3601 = vmatpush.msra.mxu0 0.0
        %3602 = vmatpush.msra.mxu0 0.0
        %3603 = vmatpush.msra.mxu0 0.0
        %3604 = vmatpush.msra.mxu0 0.0
        %3605 = vmatpush.msra.mxu0 0.0
        %3606 = vmatpush.msra.mxu0 %v3569
        %3607 = vmatpush.msra.mxu0 %v3568
        %3608 = vmatpush.msra.mxu0 %v3567
        %3609 = vmatpush.msra.mxu0 %v3566
        %3610 = vmatmul.f32.gmra.mxu0 %v3571
        %v3611 = vpop.f32.mrf.mxu0
        %v3612 = vadd.f32 0.0, %v3611
        %3613 = vmatmul.f32.gmra.mxu0 %v3574
        %v3614 = vpop.f32.mrf.mxu0
        %v3615 = vadd.f32 0.0, %v3614
        %3616 = vmatmul.f32.gmra.mxu0 %v3577
        %v3617 = vpop.f32.mrf.mxu0
        %v3618 = vadd.f32 0.0, %v3617
        %3619 = vmatmul.f32.gmra.mxu0 %v3580
        %v3620 = vpop.f32.mrf.mxu0
        %v3621 = vadd.f32 0.0, %v3620
        %3622 = vmatmul.f32.gmra.mxu0 %v3583
        %v3623 = vpop.f32.mrf.mxu0
        %v3624 = vadd.f32 0.0, %v3623
        %3625 = vmatmul.f32.gmra.mxu0 %v3586
        %v3626 = vpop.f32.mrf.mxu0
        %v3627 = vadd.f32 0.0, %v3626
        %3628 = vmatmul.f32.gmra.mxu0 %v3589
        %v3629 = vpop.f32.mrf.mxu0
        %v3630 = vadd.f32 0.0, %v3629
        %3631 = vmatmul.f32.gmra.mxu0 %v3592
        %v3632 = vpop.f32.mrf.mxu0
        %v3633 = vadd.f32 0.0, %v3632
        %3634 = vdwg.mxu0
        %v3635 = vadd.f32 %v3434, %v3612
        %v3636 = vadd.f32 %v3435, %v3615
        %v3637 = vadd.f32 %v3436, %v3618
        %v3638 = vadd.f32 %v3437, %v3621
        %v3639 = vadd.f32 %v3438, %v3624
        %v3640 = vadd.f32 %v3439, %v3627
        %v3641 = vadd.f32 %v3440, %v3630
        %v3642 = vadd.f32 %v3441, %v3633
        %s3643 = scalar_lea.vmem %s3, 768
        %v3644 = vld [vmem:[%s3643] sm:$0xff]
        %v3645 = vld [vmem:[%s3643 + $0x8] sm:$0xff]
        %v3646 = vld [vmem:[%s3643 + $0x10] sm:$0xff]
        %v3647 = vld [vmem:[%s3643 + $0x18] sm:$0xff]
        %v3648 = vld [vmem:[%s3643 + $0x20] sm:$0xff]
        %v3649 = vld [vmem:[%s3643 + $0x28] sm:$0xff]
        %v3650 = vld [vmem:[%s3643 + $0x30] sm:$0xff]
        %v3651 = vld [vmem:[%s3643 + $0x38] sm:$0xff]
        %v3652 = vld [vmem:[%s3643 + $0x40] sm:$0xff]
        %v3653 = vld [vmem:[%s3643 + $0x48] sm:$0xff]
        %v3654 = vld [vmem:[%s3643 + $0x50] sm:$0xff]
        %v3655 = vld [vmem:[%s3643 + $0x58] sm:$0xff]
        %v3656 = vld [vmem:[%s3643 + $0x60] sm:$0xff]
        %v3657 = vld [vmem:[%s3643 + $0x68] sm:$0xff]
        %v3658 = vld [vmem:[%s3643 + $0x70] sm:$0xf]
        %v3659 = vld [vmem:[%s3643 + $0x78] sm:$0xf]
        %v3661 = vsel %vm2465, %v3645, 0
        %v3664 = vsel %vm2465, %v3647, 0
        %v3667 = vsel %vm2465, %v3649, 0
        %v3670 = vsel %vm2465, %v3651, 0
        %v3673 = vsel %vm2465, %v3653, 0
        %v3676 = vsel %vm2465, %v3655, 0
        %v3679 = vsel %vm2465, %v3657, 0
        %v3682 = vsel %vm2465, %v3659, 0
        %3684 = vmatpush.msra.mxu0 %v2432
        %3685 = vmatpush.msra.mxu0 %v2431
        %3686 = vmatpush.msra.mxu0 %v2430
        %3687 = vmatpush.msra.mxu0 %v2429
        %3688 = vmatpush.msra.mxu0 %v2428
        %3689 = vmatpush.msra.mxu0 %v2427
        %3690 = vmatpush.msra.mxu0 %v2426
        %3691 = vmatpush.msra.mxu0 %v2425
        %3692 = vmatpush.msra.mxu0 %v2424
        %3693 = vmatpush.msra.mxu0 %v2423
        %3694 = vmatpush.msra.mxu0 %v2422
        %3695 = vmatpush.msra.mxu0 %v2421
        %3696 = vmatpush.msra.mxu0 %v2420
        %3697 = vmatpush.msra.mxu0 %v2419
        %3698 = vmatpush.msra.mxu0 %v2418
        %3699 = vmatpush.msra.mxu0 %v2417
        %3700 = vmatmul.f32.gmra.mxu0 %v3644
        %v3701 = vpop.f32.mrf.mxu0
        %v3702 = vadd.f32 0.0, %v3701
        %3703 = vmatmul.f32.gmra.mxu0 %v3646
        %v3704 = vpop.f32.mrf.mxu0
        %v3705 = vadd.f32 0.0, %v3704
        %3706 = vmatmul.f32.gmra.mxu0 %v3648
        %v3707 = vpop.f32.mrf.mxu0
        %v3708 = vadd.f32 0.0, %v3707
        %3709 = vmatmul.f32.gmra.mxu0 %v3650
        %v3710 = vpop.f32.mrf.mxu0
        %v3711 = vadd.f32 0.0, %v3710
        %3712 = vmatmul.f32.gmra.mxu0 %v3652
        %v3713 = vpop.f32.mrf.mxu0
        %v3714 = vadd.f32 0.0, %v3713
        %3715 = vmatmul.f32.gmra.mxu0 %v3654
        %v3716 = vpop.f32.mrf.mxu0
        %v3717 = vadd.f32 0.0, %v3716
        %3718 = vmatmul.f32.gmra.mxu0 %v3656
        %v3719 = vpop.f32.mrf.mxu0
        %v3720 = vadd.f32 0.0, %v3719
        %3721 = vmatmul.f32.gmra.mxu0 %v3658
        %v3722 = vpop.f32.mrf.mxu0
        %v3723 = vadd.f32 0.0, %v3722
        %3724 = vdwg.mxu0
        %3725 = vmatpush.msra.mxu0 %v2492
        %3726 = vmatpush.msra.mxu0 %v2447
        %3727 = vmatpush.msra.mxu0 %v2446
        %3728 = vmatpush.msra.mxu0 %v2445
        %3729 = vmatpush.msra.mxu0 %v2444
        %3730 = vmatpush.msra.mxu0 %v2443
        %3731 = vmatpush.msra.mxu0 %v2442
        %3732 = vmatpush.msra.mxu0 %v2441
        %3733 = vmatpush.msra.mxu0 %v2440
        %3734 = vmatpush.msra.mxu0 %v2439
        %3735 = vmatpush.msra.mxu0 %v2438
        %3736 = vmatpush.msra.mxu0 %v2437
        %3737 = vmatpush.msra.mxu0 %v2436
        %3738 = vmatpush.msra.mxu0 %v2435
        %3739 = vmatpush.msra.mxu0 %v2434
        %3740 = vmatpush.msra.mxu0 %v2433
        %3741 = vmatmul.f32.gmra.mxu0 %v3661
        %v3742 = vpop.f32.mrf.mxu0
        %v3743 = vadd.f32 %v3702, %v3742
        %3744 = vmatmul.f32.gmra.mxu0 %v3664
        %v3745 = vpop.f32.mrf.mxu0
        %v3746 = vadd.f32 %v3705, %v3745
        %3747 = vmatmul.f32.gmra.mxu0 %v3667
        %v3748 = vpop.f32.mrf.mxu0
        %v3749 = vadd.f32 %v3708, %v3748
        %3750 = vmatmul.f32.gmra.mxu0 %v3670
        %v3751 = vpop.f32.mrf.mxu0
        %v3752 = vadd.f32 %v3711, %v3751
        %3753 = vmatmul.f32.gmra.mxu0 %v3673
        %v3754 = vpop.f32.mrf.mxu0
        %v3755 = vadd.f32 %v3714, %v3754
        %3756 = vmatmul.f32.gmra.mxu0 %v3676
        %v3757 = vpop.f32.mrf.mxu0
        %v3758 = vadd.f32 %v3717, %v3757
        %3759 = vmatmul.f32.gmra.mxu0 %v3679
        %v3760 = vpop.f32.mrf.mxu0
        %v3761 = vadd.f32 %v3720, %v3760
        %3762 = vmatmul.f32.gmra.mxu0 %v3682
        %v3763 = vpop.f32.mrf.mxu0
        %v3764 = vadd.f32 %v3723, %v3763
        %3765 = vdwg.mxu0
        %s3766 = scalar_lea.vmem %s4, 192
        %v3767 = vld [vmem:[%s3766] sm:$0xff]
        %v3768 = vld [vmem:[%s3766 + $0x8] sm:$0xff]
        %v3769 = vld [vmem:[%s3766 + $0x10] sm:$0xff]
        %v3770 = vld [vmem:[%s3766 + $0x18] sm:$0xff]
        %v3772 = vsel %vm2708, %v3743, 0
        %v3775 = vsel %vm2708, %v3746, 0
        %v3778 = vsel %vm2708, %v3749, 0
        %v3781 = vsel %vm2708, %v3752, 0
        %v3784 = vsel %vm2708, %v3755, 0
        %v3787 = vsel %vm2708, %v3758, 0
        %v3790 = vsel %vm2708, %v3761, 0
        %v3793 = vsel %vm2708, %v3764, 0
        %3795 = vmatpush.msra.mxu0 0.0
        %3796 = vmatpush.msra.mxu0 0.0
        %3797 = vmatpush.msra.mxu0 0.0
        %3798 = vmatpush.msra.mxu0 0.0
        %3799 = vmatpush.msra.mxu0 0.0
        %3800 = vmatpush.msra.mxu0 0.0
        %3801 = vmatpush.msra.mxu0 0.0
        %3802 = vmatpush.msra.mxu0 0.0
        %3803 = vmatpush.msra.mxu0 0.0
        %3804 = vmatpush.msra.mxu0 0.0
        %3805 = vmatpush.msra.mxu0 0.0
        %3806 = vmatpush.msra.mxu0 0.0
        %3807 = vmatpush.msra.mxu0 %v3770
        %3808 = vmatpush.msra.mxu0 %v3769
        %3809 = vmatpush.msra.mxu0 %v3768
        %3810 = vmatpush.msra.mxu0 %v3767
        %3811 = vmatmul.f32.gmra.mxu0 %v3772
        %v3812 = vpop.f32.mrf.mxu0
        %v3813 = vadd.f32 0.0, %v3812
        %3814 = vmatmul.f32.gmra.mxu0 %v3775
        %v3815 = vpop.f32.mrf.mxu0
        %v3816 = vadd.f32 0.0, %v3815
        %3817 = vmatmul.f32.gmra.mxu0 %v3778
        %v3818 = vpop.f32.mrf.mxu0
        %v3819 = vadd.f32 0.0, %v3818
        %3820 = vmatmul.f32.gmra.mxu0 %v3781
        %v3821 = vpop.f32.mrf.mxu0
        %v3822 = vadd.f32 0.0, %v3821
        %3823 = vmatmul.f32.gmra.mxu0 %v3784
        %v3824 = vpop.f32.mrf.mxu0
        %v3825 = vadd.f32 0.0, %v3824
        %3826 = vmatmul.f32.gmra.mxu0 %v3787
        %v3827 = vpop.f32.mrf.mxu0
        %v3828 = vadd.f32 0.0, %v3827
        %3829 = vmatmul.f32.gmra.mxu0 %v3790
        %v3830 = vpop.f32.mrf.mxu0
        %v3831 = vadd.f32 0.0, %v3830
        %3832 = vmatmul.f32.gmra.mxu0 %v3793
        %v3833 = vpop.f32.mrf.mxu0
        %v3834 = vadd.f32 0.0, %v3833
        %3835 = vdwg.mxu0
        %v3836 = vadd.f32 %v3635, %v3813
        %v3837 = vadd.f32 %v3636, %v3816
        %v3838 = vadd.f32 %v3637, %v3819
        %v3839 = vadd.f32 %v3638, %v3822
        %v3840 = vadd.f32 %v3639, %v3825
        %v3841 = vadd.f32 %v3640, %v3828
        %v3842 = vadd.f32 %v3641, %v3831
        %v3843 = vadd.f32 %v3642, %v3834
        %s3844 = scalar_lea.vmem %s3, 896
        %v3845 = vld [vmem:[%s3844] sm:$0xff]
        %v3846 = vld [vmem:[%s3844 + $0x8] sm:$0xff]
        %v3847 = vld [vmem:[%s3844 + $0x10] sm:$0xff]
        %v3848 = vld [vmem:[%s3844 + $0x18] sm:$0xff]
        %v3849 = vld [vmem:[%s3844 + $0x20] sm:$0xff]
        %v3850 = vld [vmem:[%s3844 + $0x28] sm:$0xff]
        %v3851 = vld [vmem:[%s3844 + $0x30] sm:$0xff]
        %v3852 = vld [vmem:[%s3844 + $0x38] sm:$0xff]
        %v3853 = vld [vmem:[%s3844 + $0x40] sm:$0xff]
        %v3854 = vld [vmem:[%s3844 + $0x48] sm:$0xff]
        %v3855 = vld [vmem:[%s3844 + $0x50] sm:$0xff]
        %v3856 = vld [vmem:[%s3844 + $0x58] sm:$0xff]
        %v3857 = vld [vmem:[%s3844 + $0x60] sm:$0xff]
        %v3858 = vld [vmem:[%s3844 + $0x68] sm:$0xff]
        %v3859 = vld [vmem:[%s3844 + $0x70] sm:$0xf]
        %v3860 = vld [vmem:[%s3844 + $0x78] sm:$0xf]
        %v3862 = vsel %vm2465, %v3846, 0
        %v3865 = vsel %vm2465, %v3848, 0
        %v3868 = vsel %vm2465, %v3850, 0
        %v3871 = vsel %vm2465, %v3852, 0
        %v3874 = vsel %vm2465, %v3854, 0
        %v3877 = vsel %vm2465, %v3856, 0
        %v3880 = vsel %vm2465, %v3858, 0
        %v3883 = vsel %vm2465, %v3860, 0
        %3885 = vmatpush.msra.mxu0 %v2432
        %3886 = vmatpush.msra.mxu0 %v2431
        %3887 = vmatpush.msra.mxu0 %v2430
        %3888 = vmatpush.msra.mxu0 %v2429
        %3889 = vmatpush.msra.mxu0 %v2428
        %3890 = vmatpush.msra.mxu0 %v2427
        %3891 = vmatpush.msra.mxu0 %v2426
        %3892 = vmatpush.msra.mxu0 %v2425
        %3893 = vmatpush.msra.mxu0 %v2424
        %3894 = vmatpush.msra.mxu0 %v2423
        %3895 = vmatpush.msra.mxu0 %v2422
        %3896 = vmatpush.msra.mxu0 %v2421
        %3897 = vmatpush.msra.mxu0 %v2420
        %3898 = vmatpush.msra.mxu0 %v2419
        %3899 = vmatpush.msra.mxu0 %v2418
        %3900 = vmatpush.msra.mxu0 %v2417
        %3901 = vmatmul.f32.gmra.mxu0 %v3845
        %v3902 = vpop.f32.mrf.mxu0
        %v3903 = vadd.f32 0.0, %v3902
        %3904 = vmatmul.f32.gmra.mxu0 %v3847
        %v3905 = vpop.f32.mrf.mxu0
        %v3906 = vadd.f32 0.0, %v3905
        %3907 = vmatmul.f32.gmra.mxu0 %v3849
        %v3908 = vpop.f32.mrf.mxu0
        %v3909 = vadd.f32 0.0, %v3908
        %3910 = vmatmul.f32.gmra.mxu0 %v3851
        %v3911 = vpop.f32.mrf.mxu0
        %v3912 = vadd.f32 0.0, %v3911
        %3913 = vmatmul.f32.gmra.mxu0 %v3853
        %v3914 = vpop.f32.mrf.mxu0
        %v3915 = vadd.f32 0.0, %v3914
        %3916 = vmatmul.f32.gmra.mxu0 %v3855
        %v3917 = vpop.f32.mrf.mxu0
        %v3918 = vadd.f32 0.0, %v3917
        %3919 = vmatmul.f32.gmra.mxu0 %v3857
        %v3920 = vpop.f32.mrf.mxu0
        %v3921 = vadd.f32 0.0, %v3920
        %3922 = vmatmul.f32.gmra.mxu0 %v3859
        %v3923 = vpop.f32.mrf.mxu0
        %v3924 = vadd.f32 0.0, %v3923
        %3925 = vdwg.mxu0
        %3926 = vmatpush.msra.mxu0 %v2492
        %3927 = vmatpush.msra.mxu0 %v2447
        %3928 = vmatpush.msra.mxu0 %v2446
        %3929 = vmatpush.msra.mxu0 %v2445
        %3930 = vmatpush.msra.mxu0 %v2444
        %3931 = vmatpush.msra.mxu0 %v2443
        %3932 = vmatpush.msra.mxu0 %v2442
        %3933 = vmatpush.msra.mxu0 %v2441
        %3934 = vmatpush.msra.mxu0 %v2440
        %3935 = vmatpush.msra.mxu0 %v2439
        %3936 = vmatpush.msra.mxu0 %v2438
        %3937 = vmatpush.msra.mxu0 %v2437
        %3938 = vmatpush.msra.mxu0 %v2436
        %3939 = vmatpush.msra.mxu0 %v2435
        %3940 = vmatpush.msra.mxu0 %v2434
        %3941 = vmatpush.msra.mxu0 %v2433
        %3942 = vmatmul.f32.gmra.mxu0 %v3862
        %v3943 = vpop.f32.mrf.mxu0
        %v3944 = vadd.f32 %v3903, %v3943
        %3945 = vmatmul.f32.gmra.mxu0 %v3865
        %v3946 = vpop.f32.mrf.mxu0
        %v3947 = vadd.f32 %v3906, %v3946
        %3948 = vmatmul.f32.gmra.mxu0 %v3868
        %v3949 = vpop.f32.mrf.mxu0
        %v3950 = vadd.f32 %v3909, %v3949
        %3951 = vmatmul.f32.gmra.mxu0 %v3871
        %v3952 = vpop.f32.mrf.mxu0
        %v3953 = vadd.f32 %v3912, %v3952
        %3954 = vmatmul.f32.gmra.mxu0 %v3874
        %v3955 = vpop.f32.mrf.mxu0
        %v3956 = vadd.f32 %v3915, %v3955
        %3957 = vmatmul.f32.gmra.mxu0 %v3877
        %v3958 = vpop.f32.mrf.mxu0
        %v3959 = vadd.f32 %v3918, %v3958
        %3960 = vmatmul.f32.gmra.mxu0 %v3880
        %v3961 = vpop.f32.mrf.mxu0
        %v3962 = vadd.f32 %v3921, %v3961
        %3963 = vmatmul.f32.gmra.mxu0 %v3883
        %v3964 = vpop.f32.mrf.mxu0
        %v3965 = vadd.f32 %v3924, %v3964
        %3966 = vdwg.mxu0
        %s3967 = scalar_lea.vmem %s4, 224
        %v3968 = vld [vmem:[%s3967] sm:$0xff]
        %v3969 = vld [vmem:[%s3967 + $0x8] sm:$0xff]
        %v3970 = vld [vmem:[%s3967 + $0x10] sm:$0xff]
        %v3971 = vld [vmem:[%s3967 + $0x18] sm:$0xff]
        %v3973 = vsel %vm2708, %v3944, 0
        %v3976 = vsel %vm2708, %v3947, 0
        %v3979 = vsel %vm2708, %v3950, 0
        %v3982 = vsel %vm2708, %v3953, 0
        %v3985 = vsel %vm2708, %v3956, 0
        %v3988 = vsel %vm2708, %v3959, 0
        %v3991 = vsel %vm2708, %v3962, 0
        %v3994 = vsel %vm2708, %v3965, 0
        %3996 = vmatpush.msra.mxu0 0.0
        %3997 = vmatpush.msra.mxu0 0.0
        %3998 = vmatpush.msra.mxu0 0.0
        %3999 = vmatpush.msra.mxu0 0.0
        %4000 = vmatpush.msra.mxu0 0.0
        %4001 = vmatpush.msra.mxu0 0.0
        %4002 = vmatpush.msra.mxu0 0.0
        %4003 = vmatpush.msra.mxu0 0.0
        %4004 = vmatpush.msra.mxu0 0.0
        %4005 = vmatpush.msra.mxu0 0.0
        %4006 = vmatpush.msra.mxu0 0.0
        %4007 = vmatpush.msra.mxu0 0.0
        %4008 = vmatpush.msra.mxu0 %v3971
        %4009 = vmatpush.msra.mxu0 %v3970
        %4010 = vmatpush.msra.mxu0 %v3969
        %4011 = vmatpush.msra.mxu0 %v3968
        %4012 = vmatmul.f32.gmra.mxu0 %v3973
        %v4013 = vpop.f32.mrf.mxu0
        %v4014 = vadd.f32 0.0, %v4013
        %4015 = vmatmul.f32.gmra.mxu0 %v3976
        %v4016 = vpop.f32.mrf.mxu0
        %v4017 = vadd.f32 0.0, %v4016
        %4018 = vmatmul.f32.gmra.mxu0 %v3979
        %v4019 = vpop.f32.mrf.mxu0
        %v4020 = vadd.f32 0.0, %v4019
        %4021 = vmatmul.f32.gmra.mxu0 %v3982
        %v4022 = vpop.f32.mrf.mxu0
        %v4023 = vadd.f32 0.0, %v4022
        %4024 = vmatmul.f32.gmra.mxu0 %v3985
        %v4025 = vpop.f32.mrf.mxu0
        %v4026 = vadd.f32 0.0, %v4025
        %4027 = vmatmul.f32.gmra.mxu0 %v3988
        %v4028 = vpop.f32.mrf.mxu0
        %v4029 = vadd.f32 0.0, %v4028
        %4030 = vmatmul.f32.gmra.mxu0 %v3991
        %v4031 = vpop.f32.mrf.mxu0
        %v4032 = vadd.f32 0.0, %v4031
        %4033 = vmatmul.f32.gmra.mxu0 %v3994
        %v4034 = vpop.f32.mrf.mxu0
        %v4035 = vadd.f32 0.0, %v4034
        %4036 = vdwg.mxu0
        %v4037 = vadd.f32 %v3836, %v4014
        %v4038 = vadd.f32 %v3837, %v4017
        %v4039 = vadd.f32 %v3838, %v4020
        %v4040 = vadd.f32 %v3839, %v4023
        %v4041 = vadd.f32 %v3840, %v4026
        %v4042 = vadd.f32 %v3841, %v4029
        %v4043 = vadd.f32 %v3842, %v4032
        %v4044 = vadd.f32 %v3843, %v4035
        %v4045 = vld [vmem:[%s5] sm:$0x1]
        %v4047 = vperm.slane %v4045, 0
        %v4049 = vadd.f32 %v4037, %v4047
        %v4050 = vadd.f32 %v4038, %v4047
        %v4051 = vadd.f32 %v4039, %v4047
        %v4052 = vadd.f32 %v4040, %v4047
        %v4053 = vadd.f32 %v4041, %v4047
        %v4054 = vadd.f32 %v4042, %v4047
        %v4055 = vadd.f32 %v4043, %v4047
        %v4056 = vadd.f32 %v4044, %v4047
        %v4057 = vmax.f32 %v4049, 0.0
        %v4058 = vmax.f32 %v4050, 0.0
        %v4059 = vmax.f32 %v4051, 0.0
        %v4060 = vmax.f32 %v4052, 0.0
        %v4061 = vmax.f32 %v4053, 0.0
        %v4062 = vmax.f32 %v4054, 0.0
        %v4063 = vmax.f32 %v4055, 0.0
        %v4064 = vmax.f32 %v4056, 0.0
        %v4065 = vld [vmem:[%s6] sm:$0xff]
        %v4066 = vld [vmem:[%s6 + $0x8] sm:$0x3f]
        %vm4067 = vcmask 490496
        %v4069 = vsel %vm4067, %v4065, 0
        %v4072 = vsel %vm4067, %v4066, 0
        %vm4074 = vcmask 1043456
        %v4076 = vsel %vm4074, %v4064, 0
        %4078 = vmatpush.msra.mxu0 0.0
        %4079 = vmatpush.msra.mxu0 0.0
        %4080 = vmatpush.msra.mxu0 0.0
        %4081 = vmatpush.msra.mxu0 0.0
        %4082 = vmatpush.msra.mxu0 0.0
        %4083 = vmatpush.msra.mxu0 0.0
        %4084 = vmatpush.msra.mxu0 0.0
        %4085 = vmatpush.msra.mxu0 0.0
        %4086 = vmatpush.msra.mxu0 %v4076
        %4087 = vmatpush.msra.mxu0 %v4063
        %4088 = vmatpush.msra.mxu0 %v4062
        %4089 = vmatpush.msra.mxu0 %v4061
        %4090 = vmatpush.msra.mxu0 %v4060
        %4091 = vmatpush.msra.mxu0 %v4059
        %4092 = vmatpush.msra.mxu0 %v4058
        %4093 = vmatpush.msra.mxu0 %v4057
        %4094 = vmatmul.f32.gmra.mxu0 %v4069
        %v4095 = vpop.f32.mrf.mxu0
        %v4096 = vadd.f32 0.0, %v4095
        %4097 = vmatmul.f32.gmra.mxu0 %v4072
        %v4098 = vpop.f32.mrf.mxu0
        %v4099 = vadd.f32 0.0, %v4098
        %4100 = vdwg.mxu0
        %v4101 = vld [vmem:[%s7] sm:$0xff]
        %v4102 = vld [vmem:[%s7 + $0x8] sm:$0xff]
        %v4103 = vld [vmem:[%s7 + $0x10] sm:$0xff]
        %v4104 = vld [vmem:[%s7 + $0x18] sm:$0xff]
        %s4105 = scalar_lea.vmem %s6, 16
        %v4106 = vld [vmem:[%s4105] sm:$0xff]
        %v4107 = vld [vmem:[%s4105 + $0x8] sm:$0x3f]
        %v4109 = vsel %vm4067, %v4106, 0
        %v4112 = vsel %vm4067, %v4107, 0
        %4114 = vmatpush.msra.mxu0 0.0
        %4115 = vmatpush.msra.mxu0 0.0
        %4116 = vmatpush.msra.mxu0 0.0
        %4117 = vmatpush.msra.mxu0 0.0
        %4118 = vmatpush.msra.mxu0 0.0
        %4119 = vmatpush.msra.mxu0 0.0
        %4120 = vmatpush.msra.mxu0 0.0
        %4121 = vmatpush.msra.mxu0 0.0
        %4122 = vmatpush.msra.mxu0 %v4076
        %4123 = vmatpush.msra.mxu0 %v4063
        %4124 = vmatpush.msra.mxu0 %v4062
        %4125 = vmatpush.msra.mxu0 %v4061
        %4126 = vmatpush.msra.mxu0 %v4060
        %4127 = vmatpush.msra.mxu0 %v4059
        %4128 = vmatpush.msra.mxu0 %v4058
        %4129 = vmatpush.msra.mxu0 %v4057
        %4130 = vmatmul.f32.gmra.mxu0 %v4109
        %v4131 = vpop.f32.mrf.mxu0
        %v4132 = vadd.f32 0.0, %v4131
        %4133 = vmatmul.f32.gmra.mxu0 %v4112
        %v4134 = vpop.f32.mrf.mxu0
        %v4135 = vadd.f32 0.0, %v4134
        %4136 = vdwg.mxu0
        %s4137 = scalar_lea.vmem %s7, 32
        %v4138 = vld [vmem:[%s4137] sm:$0xff]
        %v4139 = vld [vmem:[%s4137 + $0x8] sm:$0xff]
        %v4140 = vld [vmem:[%s4137 + $0x10] sm:$0xff]
        %v4141 = vld [vmem:[%s4137 + $0x18] sm:$0xff]
        %v4143 = vsel %vm2708, %v4132, 0
        %v4146 = vsel %vm2708, %v4135, 0
        %4148 = vmatpush.msra.mxu0 0.0
        %4149 = vmatpush.msra.mxu0 0.0
        %4150 = vmatpush.msra.mxu0 0.0
        %4151 = vmatpush.msra.mxu0 0.0
        %4152 = vmatpush.msra.mxu0 0.0
        %4153 = vmatpush.msra.mxu0 0.0
        %4154 = vmatpush.msra.mxu0 0.0
        %4155 = vmatpush.msra.mxu0 0.0
        %4156 = vmatpush.msra.mxu0 0.0
        %4157 = vmatpush.msra.mxu0 0.0
        %4158 = vmatpush.msra.mxu0 0.0
        %4159 = vmatpush.msra.mxu0 0.0
        %4160 = vmatpush.msra.mxu0 %v4141
        %4161 = vmatpush.msra.mxu0 %v4140
        %4162 = vmatpush.msra.mxu0 %v4139
        %4163 = vmatpush.msra.mxu0 %v4138
        %4164 = vmatmul.f32.gmra.mxu0 %v4143
        %v4165 = vpop.f32.mrf.mxu0
        %v4166 = vadd.f32 0.0, %v4165
        %4167 = vmatmul.f32.gmra.mxu0 %v4146
        %v4168 = vpop.f32.mrf.mxu0
        %v4169 = vadd.f32 0.0, %v4168
        %4170 = vdwg.mxu0
        %v4172 = vsel %vm2708, %v4096, 0
        %v4175 = vsel %vm2708, %v4099, 0
        %4177 = vmatpush.msra.mxu0 0.0
        %4178 = vmatpush.msra.mxu0 0.0
        %4179 = vmatpush.msra.mxu0 0.0
        %4180 = vmatpush.msra.mxu0 0.0
        %4181 = vmatpush.msra.mxu0 0.0
        %4182 = vmatpush.msra.mxu0 0.0
        %4183 = vmatpush.msra.mxu0 0.0
        %4184 = vmatpush.msra.mxu0 0.0
        %4185 = vmatpush.msra.mxu0 0.0
        %4186 = vmatpush.msra.mxu0 0.0
        %4187 = vmatpush.msra.mxu0 0.0
        %4188 = vmatpush.msra.mxu0 0.0
        %4189 = vmatpush.msra.mxu0 %v4104
        %4190 = vmatpush.msra.mxu0 %v4103
        %4191 = vmatpush.msra.mxu0 %v4102
        %4192 = vmatpush.msra.mxu0 %v4101
        %4193 = vmatmul.f32.gmra.mxu0 %v4172
        %v4194 = vpop.f32.mrf.mxu0
        %v4195 = vadd.f32 %v4166, %v4194
        %4196 = vmatmul.f32.gmra.mxu0 %v4175
        %v4197 = vpop.f32.mrf.mxu0
        %v4198 = vadd.f32 %v4169, %v4197
        %4199 = vdwg.mxu0
        %s4200 = scalar_lea.vmem %s6, 32
        %v4201 = vld [vmem:[%s4200] sm:$0xff]
        %v4202 = vld [vmem:[%s4200 + $0x8] sm:$0x3f]
        %v4204 = vsel %vm4067, %v4201, 0
        %v4207 = vsel %vm4067, %v4202, 0
        %4209 = vmatpush.msra.mxu0 0.0
        %4210 = vmatpush.msra.mxu0 0.0
        %4211 = vmatpush.msra.mxu0 0.0
        %4212 = vmatpush.msra.mxu0 0.0
        %4213 = vmatpush.msra.mxu0 0.0
        %4214 = vmatpush.msra.mxu0 0.0
        %4215 = vmatpush.msra.mxu0 0.0
        %4216 = vmatpush.msra.mxu0 0.0
        %4217 = vmatpush.msra.mxu0 %v4076
        %4218 = vmatpush.msra.mxu0 %v4063
        %4219 = vmatpush.msra.mxu0 %v4062
        %4220 = vmatpush.msra.mxu0 %v4061
        %4221 = vmatpush.msra.mxu0 %v4060
        %4222 = vmatpush.msra.mxu0 %v4059
        %4223 = vmatpush.msra.mxu0 %v4058
        %4224 = vmatpush.msra.mxu0 %v4057
        %4225 = vmatmul.f32.gmra.mxu0 %v4204
        %v4226 = vpop.f32.mrf.mxu0
        %v4227 = vadd.f32 0.0, %v4226
        %4228 = vmatmul.f32.gmra.mxu0 %v4207
        %v4229 = vpop.f32.mrf.mxu0
        %v4230 = vadd.f32 0.0, %v4229
        %4231 = vdwg.mxu0
        %s4232 = scalar_lea.vmem %s7, 64
        %v4233 = vld [vmem:[%s4232] sm:$0xff]
        %v4234 = vld [vmem:[%s4232 + $0x8] sm:$0xff]
        %v4235 = vld [vmem:[%s4232 + $0x10] sm:$0xff]
        %v4236 = vld [vmem:[%s4232 + $0x18] sm:$0xff]
        %v4238 = vsel %vm2708, %v4227, 0
        %v4241 = vsel %vm2708, %v4230, 0
        %4243 = vmatpush.msra.mxu0 0.0
        %4244 = vmatpush.msra.mxu0 0.0
        %4245 = vmatpush.msra.mxu0 0.0
        %4246 = vmatpush.msra.mxu0 0.0
        %4247 = vmatpush.msra.mxu0 0.0
        %4248 = vmatpush.msra.mxu0 0.0
        %4249 = vmatpush.msra.mxu0 0.0
        %4250 = vmatpush.msra.mxu0 0.0
        %4251 = vmatpush.msra.mxu0 0.0
        %4252 = vmatpush.msra.mxu0 0.0
        %4253 = vmatpush.msra.mxu0 0.0
        %4254 = vmatpush.msra.mxu0 0.0
        %4255 = vmatpush.msra.mxu0 %v4236
        %4256 = vmatpush.msra.mxu0 %v4235
        %4257 = vmatpush.msra.mxu0 %v4234
        %4258 = vmatpush.msra.mxu0 %v4233
        %4259 = vmatmul.f32.gmra.mxu0 %v4238
        %v4260 = vpop.f32.mrf.mxu0
        %v4261 = vadd.f32 0.0, %v4260
        %4262 = vmatmul.f32.gmra.mxu0 %v4241
        %v4263 = vpop.f32.mrf.mxu0
        %v4264 = vadd.f32 0.0, %v4263
        %4265 = vdwg.mxu0
        %v4266 = vadd.f32 %v4195, %v4261
        %v4267 = vadd.f32 %v4198, %v4264
        %s4268 = scalar_lea.vmem %s6, 48
        %v4269 = vld [vmem:[%s4268] sm:$0xff]
        %v4270 = vld [vmem:[%s4268 + $0x8] sm:$0x3f]
        %v4272 = vsel %vm4067, %v4269, 0
        %v4275 = vsel %vm4067, %v4270, 0
        %4277 = vmatpush.msra.mxu0 0.0
        %4278 = vmatpush.msra.mxu0 0.0
        %4279 = vmatpush.msra.mxu0 0.0
        %4280 = vmatpush.msra.mxu0 0.0
        %4281 = vmatpush.msra.mxu0 0.0
        %4282 = vmatpush.msra.mxu0 0.0
        %4283 = vmatpush.msra.mxu0 0.0
        %4284 = vmatpush.msra.mxu0 0.0
        %4285 = vmatpush.msra.mxu0 %v4076
        %4286 = vmatpush.msra.mxu0 %v4063
        %4287 = vmatpush.msra.mxu0 %v4062
        %4288 = vmatpush.msra.mxu0 %v4061
        %4289 = vmatpush.msra.mxu0 %v4060
        %4290 = vmatpush.msra.mxu0 %v4059
        %4291 = vmatpush.msra.mxu0 %v4058
        %4292 = vmatpush.msra.mxu0 %v4057
        %4293 = vmatmul.f32.gmra.mxu0 %v4272
        %v4294 = vpop.f32.mrf.mxu0
        %v4295 = vadd.f32 0.0, %v4294
        %4296 = vmatmul.f32.gmra.mxu0 %v4275
        %v4297 = vpop.f32.mrf.mxu0
        %v4298 = vadd.f32 0.0, %v4297
        %4299 = vdwg.mxu0
        %s4300 = scalar_lea.vmem %s7, 96
        %v4301 = vld [vmem:[%s4300] sm:$0xff]
        %v4302 = vld [vmem:[%s4300 + $0x8] sm:$0xff]
        %v4303 = vld [vmem:[%s4300 + $0x10] sm:$0xff]
        %v4304 = vld [vmem:[%s4300 + $0x18] sm:$0xff]
        %v4306 = vsel %vm2708, %v4295, 0
        %v4309 = vsel %vm2708, %v4298, 0
        %4311 = vmatpush.msra.mxu0 0.0
        %4312 = vmatpush.msra.mxu0 0.0
        %4313 = vmatpush.msra.mxu0 0.0
        %4314 = vmatpush.msra.mxu0 0.0
        %4315 = vmatpush.msra.mxu0 0.0
        %4316 = vmatpush.msra.mxu0 0.0
        %4317 = vmatpush.msra.mxu0 0.0
        %4318 = vmatpush.msra.mxu0 0.0
        %4319 = vmatpush.msra.mxu0 0.0
        %4320 = vmatpush.msra.mxu0 0.0
        %4321 = vmatpush.msra.mxu0 0.0
        %4322 = vmatpush.msra.mxu0 0.0
        %4323 = vmatpush.msra.mxu0 %v4304
        %4324 = vmatpush.msra.mxu0 %v4303
        %4325 = vmatpush.msra.mxu0 %v4302
        %4326 = vmatpush.msra.mxu0 %v4301
        %4327 = vmatmul.f32.gmra.mxu0 %v4306
        %v4328 = vpop.f32.mrf.mxu0
        %v4329 = vadd.f32 0.0, %v4328
        %4330 = vmatmul.f32.gmra.mxu0 %v4309
        %v4331 = vpop.f32.mrf.mxu0
        %v4332 = vadd.f32 0.0, %v4331
        %4333 = vdwg.mxu0
        %v4334 = vadd.f32 %v4266, %v4329
        %v4335 = vadd.f32 %v4267, %v4332
        %s4336 = scalar_lea.vmem %s6, 64
        %v4337 = vld [vmem:[%s4336] sm:$0xff]
        %v4338 = vld [vmem:[%s4336 + $0x8] sm:$0x3f]
        %v4340 = vsel %vm4067, %v4337, 0
        %v4343 = vsel %vm4067, %v4338, 0
        %4345 = vmatpush.msra.mxu0 0.0
        %4346 = vmatpush.msra.mxu0 0.0
        %4347 = vmatpush.msra.mxu0 0.0
        %4348 = vmatpush.msra.mxu0 0.0
        %4349 = vmatpush.msra.mxu0 0.0
        %4350 = vmatpush.msra.mxu0 0.0
        %4351 = vmatpush.msra.mxu0 0.0
        %4352 = vmatpush.msra.mxu0 0.0
        %4353 = vmatpush.msra.mxu0 %v4076
        %4354 = vmatpush.msra.mxu0 %v4063
        %4355 = vmatpush.msra.mxu0 %v4062
        %4356 = vmatpush.msra.mxu0 %v4061
        %4357 = vmatpush.msra.mxu0 %v4060
        %4358 = vmatpush.msra.mxu0 %v4059
        %4359 = vmatpush.msra.mxu0 %v4058
        %4360 = vmatpush.msra.mxu0 %v4057
        %4361 = vmatmul.f32.gmra.mxu0 %v4340
        %v4362 = vpop.f32.mrf.mxu0
        %v4363 = vadd.f32 0.0, %v4362
        %4364 = vmatmul.f32.gmra.mxu0 %v4343
        %v4365 = vpop.f32.mrf.mxu0
        %v4366 = vadd.f32 0.0, %v4365
        %4367 = vdwg.mxu0
        %s4368 = scalar_lea.vmem %s7, 128
        %v4369 = vld [vmem:[%s4368] sm:$0xff]
        %v4370 = vld [vmem:[%s4368 + $0x8] sm:$0xff]
        %v4371 = vld [vmem:[%s4368 + $0x10] sm:$0xff]
        %v4372 = vld [vmem:[%s4368 + $0x18] sm:$0xff]
        %v4374 = vsel %vm2708, %v4363, 0
        %v4377 = vsel %vm2708, %v4366, 0
        %4379 = vmatpush.msra.mxu0 0.0
        %4380 = vmatpush.msra.mxu0 0.0
        %4381 = vmatpush.msra.mxu0 0.0
        %4382 = vmatpush.msra.mxu0 0.0
        %4383 = vmatpush.msra.mxu0 0.0
        %4384 = vmatpush.msra.mxu0 0.0
        %4385 = vmatpush.msra.mxu0 0.0
        %4386 = vmatpush.msra.mxu0 0.0
        %4387 = vmatpush.msra.mxu0 0.0
        %4388 = vmatpush.msra.mxu0 0.0
        %4389 = vmatpush.msra.mxu0 0.0
        %4390 = vmatpush.msra.mxu0 0.0
        %4391 = vmatpush.msra.mxu0 %v4372
        %4392 = vmatpush.msra.mxu0 %v4371
        %4393 = vmatpush.msra.mxu0 %v4370
        %4394 = vmatpush.msra.mxu0 %v4369
        %4395 = vmatmul.f32.gmra.mxu0 %v4374
        %v4396 = vpop.f32.mrf.mxu0
        %v4397 = vadd.f32 0.0, %v4396
        %4398 = vmatmul.f32.gmra.mxu0 %v4377
        %v4399 = vpop.f32.mrf.mxu0
        %v4400 = vadd.f32 0.0, %v4399
        %4401 = vdwg.mxu0
        %v4402 = vadd.f32 %v4334, %v4397
        %v4403 = vadd.f32 %v4335, %v4400
        %s4404 = scalar_lea.vmem %s6, 80
        %v4405 = vld [vmem:[%s4404] sm:$0xff]
        %v4406 = vld [vmem:[%s4404 + $0x8] sm:$0x3f]
        %v4408 = vsel %vm4067, %v4405, 0
        %v4411 = vsel %vm4067, %v4406, 0
        %4413 = vmatpush.msra.mxu0 0.0
        %4414 = vmatpush.msra.mxu0 0.0
        %4415 = vmatpush.msra.mxu0 0.0
        %4416 = vmatpush.msra.mxu0 0.0
        %4417 = vmatpush.msra.mxu0 0.0
        %4418 = vmatpush.msra.mxu0 0.0
        %4419 = vmatpush.msra.mxu0 0.0
        %4420 = vmatpush.msra.mxu0 0.0
        %4421 = vmatpush.msra.mxu0 %v4076
        %4422 = vmatpush.msra.mxu0 %v4063
        %4423 = vmatpush.msra.mxu0 %v4062
        %4424 = vmatpush.msra.mxu0 %v4061
        %4425 = vmatpush.msra.mxu0 %v4060
        %4426 = vmatpush.msra.mxu0 %v4059
        %4427 = vmatpush.msra.mxu0 %v4058
        %4428 = vmatpush.msra.mxu0 %v4057
        %4429 = vmatmul.f32.gmra.mxu0 %v4408
        %v4430 = vpop.f32.mrf.mxu0
        %v4431 = vadd.f32 0.0, %v4430
        %4432 = vmatmul.f32.gmra.mxu0 %v4411
        %v4433 = vpop.f32.mrf.mxu0
        %v4434 = vadd.f32 0.0, %v4433
        %4435 = vdwg.mxu0
        %s4436 = scalar_lea.vmem %s7, 160
        %v4437 = vld [vmem:[%s4436] sm:$0xff]
        %v4438 = vld [vmem:[%s4436 + $0x8] sm:$0xff]
        %v4439 = vld [vmem:[%s4436 + $0x10] sm:$0xff]
        %v4440 = vld [vmem:[%s4436 + $0x18] sm:$0xff]
        %v4442 = vsel %vm2708, %v4431, 0
        %v4445 = vsel %vm2708, %v4434, 0
        %4447 = vmatpush.msra.mxu0 0.0
        %4448 = vmatpush.msra.mxu0 0.0
        %4449 = vmatpush.msra.mxu0 0.0
        %4450 = vmatpush.msra.mxu0 0.0
        %4451 = vmatpush.msra.mxu0 0.0
        %4452 = vmatpush.msra.mxu0 0.0
        %4453 = vmatpush.msra.mxu0 0.0
        %4454 = vmatpush.msra.mxu0 0.0
        %4455 = vmatpush.msra.mxu0 0.0
        %4456 = vmatpush.msra.mxu0 0.0
        %4457 = vmatpush.msra.mxu0 0.0
        %4458 = vmatpush.msra.mxu0 0.0
        %4459 = vmatpush.msra.mxu0 %v4440
        %4460 = vmatpush.msra.mxu0 %v4439
        %4461 = vmatpush.msra.mxu0 %v4438
        %4462 = vmatpush.msra.mxu0 %v4437
        %4463 = vmatmul.f32.gmra.mxu0 %v4442
        %v4464 = vpop.f32.mrf.mxu0
        %v4465 = vadd.f32 0.0, %v4464
        %4466 = vmatmul.f32.gmra.mxu0 %v4445
        %v4467 = vpop.f32.mrf.mxu0
        %v4468 = vadd.f32 0.0, %v4467
        %4469 = vdwg.mxu0
        %v4470 = vadd.f32 %v4402, %v4465
        %v4471 = vadd.f32 %v4403, %v4468
        %s4472 = scalar_lea.vmem %s6, 96
        %v4473 = vld [vmem:[%s4472] sm:$0xff]
        %v4474 = vld [vmem:[%s4472 + $0x8] sm:$0x3f]
        %v4476 = vsel %vm4067, %v4473, 0
        %v4479 = vsel %vm4067, %v4474, 0
        %4481 = vmatpush.msra.mxu0 0.0
        %4482 = vmatpush.msra.mxu0 0.0
        %4483 = vmatpush.msra.mxu0 0.0
        %4484 = vmatpush.msra.mxu0 0.0
        %4485 = vmatpush.msra.mxu0 0.0
        %4486 = vmatpush.msra.mxu0 0.0
        %4487 = vmatpush.msra.mxu0 0.0
        %4488 = vmatpush.msra.mxu0 0.0
        %4489 = vmatpush.msra.mxu0 %v4076
        %4490 = vmatpush.msra.mxu0 %v4063
        %4491 = vmatpush.msra.mxu0 %v4062
        %4492 = vmatpush.msra.mxu0 %v4061
        %4493 = vmatpush.msra.mxu0 %v4060
        %4494 = vmatpush.msra.mxu0 %v4059
        %4495 = vmatpush.msra.mxu0 %v4058
        %4496 = vmatpush.msra.mxu0 %v4057
        %4497 = vmatmul.f32.gmra.mxu0 %v4476
        %v4498 = vpop.f32.mrf.mxu0
        %v4499 = vadd.f32 0.0, %v4498
        %4500 = vmatmul.f32.gmra.mxu0 %v4479
        %v4501 = vpop.f32.mrf.mxu0
        %v4502 = vadd.f32 0.0, %v4501
        %4503 = vdwg.mxu0
        %s4504 = scalar_lea.vmem %s7, 192
        %v4505 = vld [vmem:[%s4504] sm:$0xff]
        %v4506 = vld [vmem:[%s4504 + $0x8] sm:$0xff]
        %v4507 = vld [vmem:[%s4504 + $0x10] sm:$0xff]
        %v4508 = vld [vmem:[%s4504 + $0x18] sm:$0xff]
        %v4510 = vsel %vm2708, %v4499, 0
        %v4513 = vsel %vm2708, %v4502, 0
        %4515 = vmatpush.msra.mxu0 0.0
        %4516 = vmatpush.msra.mxu0 0.0
        %4517 = vmatpush.msra.mxu0 0.0
        %4518 = vmatpush.msra.mxu0 0.0
        %4519 = vmatpush.msra.mxu0 0.0
        %4520 = vmatpush.msra.mxu0 0.0
        %4521 = vmatpush.msra.mxu0 0.0
        %4522 = vmatpush.msra.mxu0 0.0
        %4523 = vmatpush.msra.mxu0 0.0
        %4524 = vmatpush.msra.mxu0 0.0
        %4525 = vmatpush.msra.mxu0 0.0
        %4526 = vmatpush.msra.mxu0 0.0
        %4527 = vmatpush.msra.mxu0 %v4508
        %4528 = vmatpush.msra.mxu0 %v4507
        %4529 = vmatpush.msra.mxu0 %v4506
        %4530 = vmatpush.msra.mxu0 %v4505
        %4531 = vmatmul.f32.gmra.mxu0 %v4510
        %v4532 = vpop.f32.mrf.mxu0
        %v4533 = vadd.f32 0.0, %v4532
        %4534 = vmatmul.f32.gmra.mxu0 %v4513
        %v4535 = vpop.f32.mrf.mxu0
        %v4536 = vadd.f32 0.0, %v4535
        %4537 = vdwg.mxu0
        %v4538 = vadd.f32 %v4470, %v4533
        %v4539 = vadd.f32 %v4471, %v4536
        %s4540 = scalar_lea.vmem %s6, 112
        %v4541 = vld [vmem:[%s4540] sm:$0xff]
        %v4542 = vld [vmem:[%s4540 + $0x8] sm:$0x3f]
        %v4544 = vsel %vm4067, %v4541, 0
        %v4547 = vsel %vm4067, %v4542, 0
        %4549 = vmatpush.msra.mxu0 0.0
        %4550 = vmatpush.msra.mxu0 0.0
        %4551 = vmatpush.msra.mxu0 0.0
        %4552 = vmatpush.msra.mxu0 0.0
        %4553 = vmatpush.msra.mxu0 0.0
        %4554 = vmatpush.msra.mxu0 0.0
        %4555 = vmatpush.msra.mxu0 0.0
        %4556 = vmatpush.msra.mxu0 0.0
        %4557 = vmatpush.msra.mxu0 %v4076
        %4558 = vmatpush.msra.mxu0 %v4063
        %4559 = vmatpush.msra.mxu0 %v4062
        %4560 = vmatpush.msra.mxu0 %v4061
        %4561 = vmatpush.msra.mxu0 %v4060
        %4562 = vmatpush.msra.mxu0 %v4059
        %4563 = vmatpush.msra.mxu0 %v4058
        %4564 = vmatpush.msra.mxu0 %v4057
        %4565 = vmatmul.f32.gmra.mxu0 %v4544
        %v4566 = vpop.f32.mrf.mxu0
        %v4567 = vadd.f32 0.0, %v4566
        %4568 = vmatmul.f32.gmra.mxu0 %v4547
        %v4569 = vpop.f32.mrf.mxu0
        %v4570 = vadd.f32 0.0, %v4569
        %4571 = vdwg.mxu0
        %s4572 = scalar_lea.vmem %s7, 224
        %v4573 = vld [vmem:[%s4572] sm:$0xff]
        %v4574 = vld [vmem:[%s4572 + $0x8] sm:$0xff]
        %v4575 = vld [vmem:[%s4572 + $0x10] sm:$0xff]
        %v4576 = vld [vmem:[%s4572 + $0x18] sm:$0xff]
        %v4578 = vsel %vm2708, %v4567, 0
        %v4581 = vsel %vm2708, %v4570, 0
        %4583 = vmatpush.msra.mxu0 0.0
        %4584 = vmatpush.msra.mxu0 0.0
        %4585 = vmatpush.msra.mxu0 0.0
        %4586 = vmatpush.msra.mxu0 0.0
        %4587 = vmatpush.msra.mxu0 0.0
        %4588 = vmatpush.msra.mxu0 0.0
        %4589 = vmatpush.msra.mxu0 0.0
        %4590 = vmatpush.msra.mxu0 0.0
        %4591 = vmatpush.msra.mxu0 0.0
        %4592 = vmatpush.msra.mxu0 0.0
        %4593 = vmatpush.msra.mxu0 0.0
        %4594 = vmatpush.msra.mxu0 0.0
        %4595 = vmatpush.msra.mxu0 %v4576
        %4596 = vmatpush.msra.mxu0 %v4575
        %4597 = vmatpush.msra.mxu0 %v4574
        %4598 = vmatpush.msra.mxu0 %v4573
        %4599 = vmatmul.f32.gmra.mxu0 %v4578
        %v4600 = vpop.f32.mrf.mxu0
        %v4601 = vadd.f32 0.0, %v4600
        %4602 = vmatmul.f32.gmra.mxu0 %v4581
        %v4603 = vpop.f32.mrf.mxu0
        %v4604 = vadd.f32 0.0, %v4603
        %4605 = vdwg.mxu0
        %v4606 = vadd.f32 %v4538, %v4601
        %v4607 = vadd.f32 %v4539, %v4604
        %v4608 = vld [vmem:[%s8] sm:$0x1]
        %v4610 = vperm.slane %v4608, 0
        %v4612 = vadd.f32 %v4606, %v4610
        %v4613 = vadd.f32 %v4607, %v4610
        %v4614 = vmax.f32 %v4612, 0.0
        %v4615 = vmax.f32 %v4613, 0.0
        %v4616 = vld [vmem:[%s9] sm:$0x3]
        %vm4617 = vcmask 113664
        %v4619 = vsel %vm4617, %v4616, 0
        %vm4621 = vcmask 1045504
        %v4623 = vsel %vm4621, %v4615, 0
        %4625 = vmatpush.msra.mxu0 0.0
        %4626 = vmatpush.msra.mxu0 0.0
        %4627 = vmatpush.msra.mxu0 0.0
        %4628 = vmatpush.msra.mxu0 0.0
        %4629 = vmatpush.msra.mxu0 0.0
        %4630 = vmatpush.msra.mxu0 0.0
        %4631 = vmatpush.msra.mxu0 0.0
        %4632 = vmatpush.msra.mxu0 0.0
        %4633 = vmatpush.msra.mxu0 0.0
        %4634 = vmatpush.msra.mxu0 0.0
        %4635 = vmatpush.msra.mxu0 0.0
        %4636 = vmatpush.msra.mxu0 0.0
        %4637 = vmatpush.msra.mxu0 0.0
        %4638 = vmatpush.msra.mxu0 0.0
        %4639 = vmatpush.msra.mxu0 %v4623
        %4640 = vmatpush.msra.mxu0 %v4614
        %4641 = vmatmul.f32.gmra.mxu0 %v4619
        %v4642 = vpop.f32.mrf.mxu0
        %v4643 = vadd.f32 0.0, %v4642
        %4644 = vdwg.mxu0
        %v4645 = vld [vmem:[%s10] sm:$0xff]
        %v4646 = vld [vmem:[%s10 + $0x8] sm:$0xff]
        %v4647 = vld [vmem:[%s10 + $0x10] sm:$0xff]
        %v4648 = vld [vmem:[%s10 + $0x18] sm:$0xff]
        %s4649 = scalar_lea.vmem %s9, 2
        %v4650 = vld [vmem:[%s4649] sm:$0x3]
        %v4652 = vsel %vm4617, %v4650, 0
        %4654 = vmatpush.msra.mxu0 0.0
        %4655 = vmatpush.msra.mxu0 0.0
        %4656 = vmatpush.msra.mxu0 0.0
        %4657 = vmatpush.msra.mxu0 0.0
        %4658 = vmatpush.msra.mxu0 0.0
        %4659 = vmatpush.msra.mxu0 0.0
        %4660 = vmatpush.msra.mxu0 0.0
        %4661 = vmatpush.msra.mxu0 0.0
        %4662 = vmatpush.msra.mxu0 0.0
        %4663 = vmatpush.msra.mxu0 0.0
        %4664 = vmatpush.msra.mxu0 0.0
        %4665 = vmatpush.msra.mxu0 0.0
        %4666 = vmatpush.msra.mxu0 0.0
        %4667 = vmatpush.msra.mxu0 0.0
        %4668 = vmatpush.msra.mxu0 %v4623
        %4669 = vmatpush.msra.mxu0 %v4614
        %4670 = vmatmul.f32.gmra.mxu0 %v4652
        %v4671 = vpop.f32.mrf.mxu0
        %v4672 = vadd.f32 0.0, %v4671
        %4673 = vdwg.mxu0
        %s4674 = scalar_lea.vmem %s10, 32
        %v4675 = vld [vmem:[%s4674] sm:$0xff]
        %v4676 = vld [vmem:[%s4674 + $0x8] sm:$0xff]
        %v4677 = vld [vmem:[%s4674 + $0x10] sm:$0xff]
        %v4678 = vld [vmem:[%s4674 + $0x18] sm:$0xff]
        %v4680 = vsel %vm2708, %v4672, 0
        %4682 = vmatpush.msra.mxu0 0.0
        %4683 = vmatpush.msra.mxu0 0.0
        %4684 = vmatpush.msra.mxu0 0.0
        %4685 = vmatpush.msra.mxu0 0.0
        %4686 = vmatpush.msra.mxu0 0.0
        %4687 = vmatpush.msra.mxu0 0.0
        %4688 = vmatpush.msra.mxu0 0.0
        %4689 = vmatpush.msra.mxu0 0.0
        %4690 = vmatpush.msra.mxu0 0.0
        %4691 = vmatpush.msra.mxu0 0.0
        %4692 = vmatpush.msra.mxu0 0.0
        %4693 = vmatpush.msra.mxu0 0.0
        %4694 = vmatpush.msra.mxu0 %v4678
        %4695 = vmatpush.msra.mxu0 %v4677
        %4696 = vmatpush.msra.mxu0 %v4676
        %4697 = vmatpush.msra.mxu0 %v4675
        %4698 = vmatmul.f32.gmra.mxu0 %v4680
        %v4699 = vpop.f32.mrf.mxu0
        %v4700 = vadd.f32 0.0, %v4699
        %4701 = vdwg.mxu0
        %v4703 = vsel %vm2708, %v4643, 0
        %4705 = vmatpush.msra.mxu0 0.0
        %4706 = vmatpush.msra.mxu0 0.0
        %4707 = vmatpush.msra.mxu0 0.0
        %4708 = vmatpush.msra.mxu0 0.0
        %4709 = vmatpush.msra.mxu0 0.0
        %4710 = vmatpush.msra.mxu0 0.0
        %4711 = vmatpush.msra.mxu0 0.0
        %4712 = vmatpush.msra.mxu0 0.0
        %4713 = vmatpush.msra.mxu0 0.0
        %4714 = vmatpush.msra.mxu0 0.0
        %4715 = vmatpush.msra.mxu0 0.0
        %4716 = vmatpush.msra.mxu0 0.0
        %4717 = vmatpush.msra.mxu0 %v4648
        %4718 = vmatpush.msra.mxu0 %v4647
        %4719 = vmatpush.msra.mxu0 %v4646
        %4720 = vmatpush.msra.mxu0 %v4645
        %4721 = vmatmul.f32.gmra.mxu0 %v4703
        %v4722 = vpop.f32.mrf.mxu0
        %v4723 = vadd.f32 %v4700, %v4722
        %4724 = vdwg.mxu0
        %s4725 = scalar_lea.vmem %s9, 4
        %v4726 = vld [vmem:[%s4725] sm:$0x3]
        %v4728 = vsel %vm4617, %v4726, 0
        %4730 = vmatpush.msra.mxu0 0.0
        %4731 = vmatpush.msra.mxu0 0.0
        %4732 = vmatpush.msra.mxu0 0.0
        %4733 = vmatpush.msra.mxu0 0.0
        %4734 = vmatpush.msra.mxu0 0.0
        %4735 = vmatpush.msra.mxu0 0.0
        %4736 = vmatpush.msra.mxu0 0.0
        %4737 = vmatpush.msra.mxu0 0.0
        %4738 = vmatpush.msra.mxu0 0.0
        %4739 = vmatpush.msra.mxu0 0.0
        %4740 = vmatpush.msra.mxu0 0.0
        %4741 = vmatpush.msra.mxu0 0.0
        %4742 = vmatpush.msra.mxu0 0.0
        %4743 = vmatpush.msra.mxu0 0.0
        %4744 = vmatpush.msra.mxu0 %v4623
        %4745 = vmatpush.msra.mxu0 %v4614
        %4746 = vmatmul.f32.gmra.mxu0 %v4728
        %v4747 = vpop.f32.mrf.mxu0
        %v4748 = vadd.f32 0.0, %v4747
        %4749 = vdwg.mxu0
        %s4750 = scalar_lea.vmem %s10, 64
        %v4751 = vld [vmem:[%s4750] sm:$0xff]
        %v4752 = vld [vmem:[%s4750 + $0x8] sm:$0xff]
        %v4753 = vld [vmem:[%s4750 + $0x10] sm:$0xff]
        %v4754 = vld [vmem:[%s4750 + $0x18] sm:$0xff]
        %v4756 = vsel %vm2708, %v4748, 0
        %4758 = vmatpush.msra.mxu0 0.0
        %4759 = vmatpush.msra.mxu0 0.0
        %4760 = vmatpush.msra.mxu0 0.0
        %4761 = vmatpush.msra.mxu0 0.0
        %4762 = vmatpush.msra.mxu0 0.0
        %4763 = vmatpush.msra.mxu0 0.0
        %4764 = vmatpush.msra.mxu0 0.0
        %4765 = vmatpush.msra.mxu0 0.0
        %4766 = vmatpush.msra.mxu0 0.0
        %4767 = vmatpush.msra.mxu0 0.0
        %4768 = vmatpush.msra.mxu0 0.0
        %4769 = vmatpush.msra.mxu0 0.0
        %4770 = vmatpush.msra.mxu0 %v4754
        %4771 = vmatpush.msra.mxu0 %v4753
        %4772 = vmatpush.msra.mxu0 %v4752
        %4773 = vmatpush.msra.mxu0 %v4751
        %4774 = vmatmul.f32.gmra.mxu0 %v4756
        %v4775 = vpop.f32.mrf.mxu0
        %v4776 = vadd.f32 0.0, %v4775
        %4777 = vdwg.mxu0
        %v4778 = vadd.f32 %v4723, %v4776
        %s4779 = scalar_lea.vmem %s9, 6
        %v4780 = vld [vmem:[%s4779] sm:$0x3]
        %v4782 = vsel %vm4617, %v4780, 0
        %4784 = vmatpush.msra.mxu0 0.0
        %4785 = vmatpush.msra.mxu0 0.0
        %4786 = vmatpush.msra.mxu0 0.0
        %4787 = vmatpush.msra.mxu0 0.0
        %4788 = vmatpush.msra.mxu0 0.0
        %4789 = vmatpush.msra.mxu0 0.0
        %4790 = vmatpush.msra.mxu0 0.0
        %4791 = vmatpush.msra.mxu0 0.0
        %4792 = vmatpush.msra.mxu0 0.0
        %4793 = vmatpush.msra.mxu0 0.0
        %4794 = vmatpush.msra.mxu0 0.0
        %4795 = vmatpush.msra.mxu0 0.0
        %4796 = vmatpush.msra.mxu0 0.0
        %4797 = vmatpush.msra.mxu0 0.0
        %4798 = vmatpush.msra.mxu0 %v4623
        %4799 = vmatpush.msra.mxu0 %v4614
        %4800 = vmatmul.f32.gmra.mxu0 %v4782
        %v4801 = vpop.f32.mrf.mxu0
        %v4802 = vadd.f32 0.0, %v4801
        %4803 = vdwg.mxu0
        %s4804 = scalar_lea.vmem %s10, 96
        %v4805 = vld [vmem:[%s4804] sm:$0xff]
        %v4806 = vld [vmem:[%s4804 + $0x8] sm:$0xff]
        %v4807 = vld [vmem:[%s4804 + $0x10] sm:$0xff]
        %v4808 = vld [vmem:[%s4804 + $0x18] sm:$0xff]
        %v4810 = vsel %vm2708, %v4802, 0
        %4812 = vmatpush.msra.mxu0 0.0
        %4813 = vmatpush.msra.mxu0 0.0
        %4814 = vmatpush.msra.mxu0 0.0
        %4815 = vmatpush.msra.mxu0 0.0
        %4816 = vmatpush.msra.mxu0 0.0
        %4817 = vmatpush.msra.mxu0 0.0
        %4818 = vmatpush.msra.mxu0 0.0
        %4819 = vmatpush.msra.mxu0 0.0
        %4820 = vmatpush.msra.mxu0 0.0
        %4821 = vmatpush.msra.mxu0 0.0
        %4822 = vmatpush.msra.mxu0 0.0
        %4823 = vmatpush.msra.mxu0 0.0
        %4824 = vmatpush.msra.mxu0 %v4808
        %4825 = vmatpush.msra.mxu0 %v4807
        %4826 = vmatpush.msra.mxu0 %v4806
        %4827 = vmatpush.msra.mxu0 %v4805
        %4828 = vmatmul.f32.gmra.mxu0 %v4810
        %v4829 = vpop.f32.mrf.mxu0
        %v4830 = vadd.f32 0.0, %v4829
        %4831 = vdwg.mxu0
        %v4832 = vadd.f32 %v4778, %v4830
        %s4833 = scalar_lea.vmem %s9, 8
        %v4834 = vld [vmem:[%s4833] sm:$0x3]
        %v4836 = vsel %vm4617, %v4834, 0
        %4838 = vmatpush.msra.mxu0 0.0
        %4839 = vmatpush.msra.mxu0 0.0
        %4840 = vmatpush.msra.mxu0 0.0
        %4841 = vmatpush.msra.mxu0 0.0
        %4842 = vmatpush.msra.mxu0 0.0
        %4843 = vmatpush.msra.mxu0 0.0
        %4844 = vmatpush.msra.mxu0 0.0
        %4845 = vmatpush.msra.mxu0 0.0
        %4846 = vmatpush.msra.mxu0 0.0
        %4847 = vmatpush.msra.mxu0 0.0
        %4848 = vmatpush.msra.mxu0 0.0
        %4849 = vmatpush.msra.mxu0 0.0
        %4850 = vmatpush.msra.mxu0 0.0
        %4851 = vmatpush.msra.mxu0 0.0
        %4852 = vmatpush.msra.mxu0 %v4623
        %4853 = vmatpush.msra.mxu0 %v4614
        %4854 = vmatmul.f32.gmra.mxu0 %v4836
        %v4855 = vpop.f32.mrf.mxu0
        %v4856 = vadd.f32 0.0, %v4855
        %4857 = vdwg.mxu0
        %s4858 = scalar_lea.vmem %s10, 128
        %v4859 = vld [vmem:[%s4858] sm:$0xff]
        %v4860 = vld [vmem:[%s4858 + $0x8] sm:$0xff]
        %v4861 = vld [vmem:[%s4858 + $0x10] sm:$0xff]
        %v4862 = vld [vmem:[%s4858 + $0x18] sm:$0xff]
        %v4864 = vsel %vm2708, %v4856, 0
        %4866 = vmatpush.msra.mxu0 0.0
        %4867 = vmatpush.msra.mxu0 0.0
        %4868 = vmatpush.msra.mxu0 0.0
        %4869 = vmatpush.msra.mxu0 0.0
        %4870 = vmatpush.msra.mxu0 0.0
        %4871 = vmatpush.msra.mxu0 0.0
        %4872 = vmatpush.msra.mxu0 0.0
        %4873 = vmatpush.msra.mxu0 0.0
        %4874 = vmatpush.msra.mxu0 0.0
        %4875 = vmatpush.msra.mxu0 0.0
        %4876 = vmatpush.msra.mxu0 0.0
        %4877 = vmatpush.msra.mxu0 0.0
        %4878 = vmatpush.msra.mxu0 %v4862
        %4879 = vmatpush.msra.mxu0 %v4861
        %4880 = vmatpush.msra.mxu0 %v4860
        %4881 = vmatpush.msra.mxu0 %v4859
        %4882 = vmatmul.f32.gmra.mxu0 %v4864
        %v4883 = vpop.f32.mrf.mxu0
        %v4884 = vadd.f32 0.0, %v4883
        %4885 = vdwg.mxu0
        %v4886 = vadd.f32 %v4832, %v4884
        %s4887 = scalar_lea.vmem %s9, 10
        %v4888 = vld [vmem:[%s4887] sm:$0x3]
        %v4890 = vsel %vm4617, %v4888, 0
        %4892 = vmatpush.msra.mxu0 0.0
        %4893 = vmatpush.msra.mxu0 0.0
        %4894 = vmatpush.msra.mxu0 0.0
        %4895 = vmatpush.msra.mxu0 0.0
        %4896 = vmatpush.msra.mxu0 0.0
        %4897 = vmatpush.msra.mxu0 0.0
        %4898 = vmatpush.msra.mxu0 0.0
        %4899 = vmatpush.msra.mxu0 0.0
        %4900 = vmatpush.msra.mxu0 0.0
        %4901 = vmatpush.msra.mxu0 0.0
        %4902 = vmatpush.msra.mxu0 0.0
        %4903 = vmatpush.msra.mxu0 0.0
        %4904 = vmatpush.msra.mxu0 0.0
        %4905 = vmatpush.msra.mxu0 0.0
        %4906 = vmatpush.msra.mxu0 %v4623
        %4907 = vmatpush.msra.mxu0 %v4614
        %4908 = vmatmul.f32.gmra.mxu0 %v4890
        %v4909 = vpop.f32.mrf.mxu0
        %v4910 = vadd.f32 0.0, %v4909
        %4911 = vdwg.mxu0
        %s4912 = scalar_lea.vmem %s10, 160
        %v4913 = vld [vmem:[%s4912] sm:$0xff]
        %v4914 = vld [vmem:[%s4912 + $0x8] sm:$0xff]
        %v4915 = vld [vmem:[%s4912 + $0x10] sm:$0xff]
        %v4916 = vld [vmem:[%s4912 + $0x18] sm:$0xff]
        %v4918 = vsel %vm2708, %v4910, 0
        %4920 = vmatpush.msra.mxu0 0.0
        %4921 = vmatpush.msra.mxu0 0.0
        %4922 = vmatpush.msra.mxu0 0.0
        %4923 = vmatpush.msra.mxu0 0.0
        %4924 = vmatpush.msra.mxu0 0.0
        %4925 = vmatpush.msra.mxu0 0.0
        %4926 = vmatpush.msra.mxu0 0.0
        %4927 = vmatpush.msra.mxu0 0.0
        %4928 = vmatpush.msra.mxu0 0.0
        %4929 = vmatpush.msra.mxu0 0.0
        %4930 = vmatpush.msra.mxu0 0.0
        %4931 = vmatpush.msra.mxu0 0.0
        %4932 = vmatpush.msra.mxu0 %v4916
        %4933 = vmatpush.msra.mxu0 %v4915
        %4934 = vmatpush.msra.mxu0 %v4914
        %4935 = vmatpush.msra.mxu0 %v4913
        %4936 = vmatmul.f32.gmra.mxu0 %v4918
        %v4937 = vpop.f32.mrf.mxu0
        %v4938 = vadd.f32 0.0, %v4937
        %4939 = vdwg.mxu0
        %v4940 = vadd.f32 %v4886, %v4938
        %s4941 = scalar_lea.vmem %s9, 12
        %v4942 = vld [vmem:[%s4941] sm:$0x3]
        %v4944 = vsel %vm4617, %v4942, 0
        %4946 = vmatpush.msra.mxu0 0.0
        %4947 = vmatpush.msra.mxu0 0.0
        %4948 = vmatpush.msra.mxu0 0.0
        %4949 = vmatpush.msra.mxu0 0.0
        %4950 = vmatpush.msra.mxu0 0.0
        %4951 = vmatpush.msra.mxu0 0.0
        %4952 = vmatpush.msra.mxu0 0.0
        %4953 = vmatpush.msra.mxu0 0.0
        %4954 = vmatpush.msra.mxu0 0.0
        %4955 = vmatpush.msra.mxu0 0.0
        %4956 = vmatpush.msra.mxu0 0.0
        %4957 = vmatpush.msra.mxu0 0.0
        %4958 = vmatpush.msra.mxu0 0.0
        %4959 = vmatpush.msra.mxu0 0.0
        %4960 = vmatpush.msra.mxu0 %v4623
        %4961 = vmatpush.msra.mxu0 %v4614
        %4962 = vmatmul.f32.gmra.mxu0 %v4944
        %v4963 = vpop.f32.mrf.mxu0
        %v4964 = vadd.f32 0.0, %v4963
        %4965 = vdwg.mxu0
        %s4966 = scalar_lea.vmem %s10, 192
        %v4967 = vld [vmem:[%s4966] sm:$0xff]
        %v4968 = vld [vmem:[%s4966 + $0x8] sm:$0xff]
        %v4969 = vld [vmem:[%s4966 + $0x10] sm:$0xff]
        %v4970 = vld [vmem:[%s4966 + $0x18] sm:$0xff]
        %v4972 = vsel %vm2708, %v4964, 0
        %4974 = vmatpush.msra.mxu0 0.0
        %4975 = vmatpush.msra.mxu0 0.0
        %4976 = vmatpush.msra.mxu0 0.0
        %4977 = vmatpush.msra.mxu0 0.0
        %4978 = vmatpush.msra.mxu0 0.0
        %4979 = vmatpush.msra.mxu0 0.0
        %4980 = vmatpush.msra.mxu0 0.0
        %4981 = vmatpush.msra.mxu0 0.0
        %4982 = vmatpush.msra.mxu0 0.0
        %4983 = vmatpush.msra.mxu0 0.0
        %4984 = vmatpush.msra.mxu0 0.0
        %4985 = vmatpush.msra.mxu0 0.0
        %4986 = vmatpush.msra.mxu0 %v4970
        %4987 = vmatpush.msra.mxu0 %v4969
        %4988 = vmatpush.msra.mxu0 %v4968
        %4989 = vmatpush.msra.mxu0 %v4967
        %4990 = vmatmul.f32.gmra.mxu0 %v4972
        %v4991 = vpop.f32.mrf.mxu0
        %v4992 = vadd.f32 0.0, %v4991
        %4993 = vdwg.mxu0
        %v4994 = vadd.f32 %v4940, %v4992
        %s4995 = scalar_lea.vmem %s9, 14
        %v4996 = vld [vmem:[%s4995] sm:$0x3]
        %v4998 = vsel %vm4617, %v4996, 0
        %5000 = vmatpush.msra.mxu0 0.0
        %5001 = vmatpush.msra.mxu0 0.0
        %5002 = vmatpush.msra.mxu0 0.0
        %5003 = vmatpush.msra.mxu0 0.0
        %5004 = vmatpush.msra.mxu0 0.0
        %5005 = vmatpush.msra.mxu0 0.0
        %5006 = vmatpush.msra.mxu0 0.0
        %5007 = vmatpush.msra.mxu0 0.0
        %5008 = vmatpush.msra.mxu0 0.0
        %5009 = vmatpush.msra.mxu0 0.0
        %5010 = vmatpush.msra.mxu0 0.0
        %5011 = vmatpush.msra.mxu0 0.0
        %5012 = vmatpush.msra.mxu0 0.0
        %5013 = vmatpush.msra.mxu0 0.0
        %5014 = vmatpush.msra.mxu0 %v4623
        %5015 = vmatpush.msra.mxu0 %v4614
        %5016 = vmatmul.f32.gmra.mxu0 %v4998
        %v5017 = vpop.f32.mrf.mxu0
        %v5018 = vadd.f32 0.0, %v5017
        %5019 = vdwg.mxu0
        %s5020 = scalar_lea.vmem %s10, 224
        %v5021 = vld [vmem:[%s5020] sm:$0xff]
        %v5022 = vld [vmem:[%s5020 + $0x8] sm:$0xff]
        %v5023 = vld [vmem:[%s5020 + $0x10] sm:$0xff]
        %v5024 = vld [vmem:[%s5020 + $0x18] sm:$0xff]
        %v5026 = vsel %vm2708, %v5018, 0
        %5028 = vmatpush.msra.mxu0 0.0
        %5029 = vmatpush.msra.mxu0 0.0
        %5030 = vmatpush.msra.mxu0 0.0
        %5031 = vmatpush.msra.mxu0 0.0
        %5032 = vmatpush.msra.mxu0 0.0
        %5033 = vmatpush.msra.mxu0 0.0
        %5034 = vmatpush.msra.mxu0 0.0
        %5035 = vmatpush.msra.mxu0 0.0
        %5036 = vmatpush.msra.mxu0 0.0
        %5037 = vmatpush.msra.mxu0 0.0
        %5038 = vmatpush.msra.mxu0 0.0
        %5039 = vmatpush.msra.mxu0 0.0
        %5040 = vmatpush.msra.mxu0 %v5024
        %5041 = vmatpush.msra.mxu0 %v5023
        %5042 = vmatpush.msra.mxu0 %v5022
        %5043 = vmatpush.msra.mxu0 %v5021
        %5044 = vmatmul.f32.gmra.mxu0 %v5026
        %v5045 = vpop.f32.mrf.mxu0
        %v5046 = vadd.f32 0.0, %v5045
        %5047 = vdwg.mxu0
        %v5048 = vadd.f32 %v4994, %v5046
        %v5049 = vld [vmem:[%s11] sm:$0x1]
        %v5051 = vperm.slane %v5049, 0
        %v5053 = vadd.f32 %v5048, %v5051
        %v5054 = vmax.f32 %v5053, 0.0
        %vm5055 = vcmask 254976
        %v5056 = vsel %vm5055, %v5054, 0.0
        %v5057 = vrot.slane %v5056, 4
        %v5058 = vadd.f32 %v5056, %v5057
        %v5059 = vrot.slane %v5058, 2
        %v5060 = vadd.f32 %v5058, %v5059
        %v5061 = vrot.slane %v5060, 1
        %v5062 = vadd.f32 %v5060, %v5061
        %v5063 = vrcp.pop 2.0
        %v5064 = vmul.f32 2.0, %v5063
        %v5065 = vsub.f32 1.0, %v5064
        %v5066 = vmul.f32 %v5063, %v5065
        %v5067 = vadd.f32 %v5063, %v5066
        %vm5068 = vweird.f32 %v5063
        %v5069 = vsel %vm5068, %v5063, %v5067
        %v5070 = vmul.f32 %v5062, %v5069
        %v5071 = vld [vmem:[%s12] sm:$0xff]
        %v5072 = vld [vmem:[%s12 + $0x8] sm:$0xff]
        %v5073 = vld [vmem:[%s12 + $0x10] sm:$0xff]
        %v5074 = vld [vmem:[%s12 + $0x18] sm:$0xff]
        %v5075 = vld [vmem:[%s13] sm:$0x1]
        %v5077 = vsel %vm2708, %v5070, 0
        %5079 = vmatpush.msra.mxu0 0.0
        %5080 = vmatpush.msra.mxu0 0.0
        %5081 = vmatpush.msra.mxu0 0.0
        %5082 = vmatpush.msra.mxu0 0.0
        %5083 = vmatpush.msra.mxu0 0.0
        %5084 = vmatpush.msra.mxu0 0.0
        %5085 = vmatpush.msra.mxu0 0.0
        %5086 = vmatpush.msra.mxu0 0.0
        %5087 = vmatpush.msra.mxu0 0.0
        %5088 = vmatpush.msra.mxu0 0.0
        %5089 = vmatpush.msra.mxu0 0.0
        %5090 = vmatpush.msra.mxu0 0.0
        %5091 = vmatpush.msra.mxu0 %v5074
        %5092 = vmatpush.msra.mxu0 %v5073
        %5093 = vmatpush.msra.mxu0 %v5072
        %5094 = vmatpush.msra.mxu0 %v5071
        %5095 = vmatmul.f32.gmra.mxu0 %v5077
        %v5096 = vpop.f32.mrf.mxu0
        %v5097 = vadd.f32 %v5075, %v5096
        %5098 = vdwg.mxu0
        %v5099 = vmax.f32 %v5097, 0.0
        %v5100 = vld [vmem:[%s14] sm:$0xff]
        %v5101 = vld [vmem:[%s14 + $0x8] sm:$0xff]
        %v5102 = vld [vmem:[%s14 + $0x10] sm:$0xff]
        %v5103 = vld [vmem:[%s14 + $0x18] sm:$0xff]
        %v5104 = vld [vmem:[%s15] sm:$0x1]
        %v5106 = vsel %vm2708, %v5099, 0
        %5108 = vmatpush.msra.mxu0 0.0
        %5109 = vmatpush.msra.mxu0 0.0
        %5110 = vmatpush.msra.mxu0 0.0
        %5111 = vmatpush.msra.mxu0 0.0
        %5112 = vmatpush.msra.mxu0 0.0
        %5113 = vmatpush.msra.mxu0 0.0
        %5114 = vmatpush.msra.mxu0 0.0
        %5115 = vmatpush.msra.mxu0 0.0
        %5116 = vmatpush.msra.mxu0 0.0
        %5117 = vmatpush.msra.mxu0 0.0
        %5118 = vmatpush.msra.mxu0 0.0
        %5119 = vmatpush.msra.mxu0 0.0
        %5120 = vmatpush.msra.mxu0 %v5103
        %5121 = vmatpush.msra.mxu0 %v5102
        %5122 = vmatpush.msra.mxu0 %v5101
        %5123 = vmatpush.msra.mxu0 %v5100
        %5124 = vmatmul.f32.gmra.mxu0 %v5106
        %v5125 = vpop.f32.mrf.mxu0
        %v5126 = vadd.f32 %v5104, %v5125
        %5127 = vdwg.mxu0
        %v5128 = vmax.f32 %v5126, 0.0
        %v5129 = vld [vmem:[%s16] sm:$0xff]
        %v5130 = vld [vmem:[%s16 + $0x8] sm:$0xff]
        %v5131 = vld [vmem:[%s16 + $0x10] sm:$0xff]
        %v5132 = vld [vmem:[%s16 + $0x18] sm:$0xff]
        %v5133 = vld [vmem:[%s17] sm:$0x1]
        %v5135 = vsel %vm2708, %v5128, 0
        %5137 = vmatpush.msra.mxu0 0.0
        %5138 = vmatpush.msra.mxu0 0.0
        %5139 = vmatpush.msra.mxu0 0.0
        %5140 = vmatpush.msra.mxu0 0.0
        %5141 = vmatpush.msra.mxu0 0.0
        %5142 = vmatpush.msra.mxu0 0.0
        %5143 = vmatpush.msra.mxu0 0.0
        %5144 = vmatpush.msra.mxu0 0.0
        %5145 = vmatpush.msra.mxu0 0.0
        %5146 = vmatpush.msra.mxu0 0.0
        %5147 = vmatpush.msra.mxu0 0.0
        %5148 = vmatpush.msra.mxu0 0.0
        %5149 = vmatpush.msra.mxu0 %v5132
        %5150 = vmatpush.msra.mxu0 %v5131
        %5151 = vmatpush.msra.mxu0 %v5130
        %5152 = vmatpush.msra.mxu0 %v5129
        %5153 = vmatmul.f32.gmra.mxu0 %v5135
        %v5154 = vpop.f32.mrf.mxu0
        %v5155 = vadd.f32 %v5133, %v5154
        %5156 = vdwg.mxu0
        %vm5157 = vcmask 40960
        %5158 = vst.msk [vmem:[%s567] sm:$0x1] %vm5157, %v5155
        %s5159 = sand.u32 %s423, 1
        %s5160 = scalar_lea.sflag [#allocation3], %s5159
        %s5161 = sand.u32 %s423, 1
        %s5162 = scalar_lea.vmem [#allocation2], %s5161
        // Predicated region
        $region93: #{dil_model_forward.1} parent=91 // pred_check
          %p5163 = pneg %p433
        $region94: #{dil_model_forward.1} parent=91 // pred_check_branch
          %5165 = sbr.rel (%p5163) target = $region96
        $region95: #{dil_model_forward.1} parent=91 // pred_region
          %5167 = vsyncadd %s5160, 0
          %s5168 = scalar_lea.hbm %s18, %s32
          %s5170 = sshll.u32 %s5162, 4
          %s5171 = int_to_ptr.vmem [resolvable:$true] %s5170
          %s5172 = sshll.u32 %s5168, 4
          %s5173 = int_to_ptr.hbm [resolvable:$true] %s5172
          %5175 = dma.vmem_to_hbm [thread:$0]  %s5171, 16, %s5173, %s5160
        $region96: #{dil_model_forward.1} parent=91 // pred_fallthru
          _
      $region92: #{dil_model_forward.1} parent=5 // pred_fallthru
        _
      %p5176 = scmp.le.s32.totalorder 2, %s27
      // Predicated region
      $region97: #{dil_model_forward.1} parent=5 // pred_check
        %p5177 = pneg %p5176
      $region98: #{dil_model_forward.1} parent=5 // pred_check_branch
        %5179 = sbr.rel (%p5177) target = $region100
      $region99: #{dil_model_forward.1} parent=5 // pred_region
        %s5180 = ssub.s32 %s27, 2
        // Predicated region
        $region101: #{dil_model_forward.1} parent=99 // pred_check
          %p5181 = pneg %p439
        $region102: #{dil_model_forward.1} parent=99 // pred_check_branch
          %5183 = sbr.rel (%p5181) target = $region104
        $region103: #{dil_model_forward.1} parent=99 // pred_region
          %s5184 = sand.u32 %s424, 1
          %s5185 = scalar_lea.sflag [#allocation3], %s5184
          %s5186 = sand.u32 %s424, 1
          %s5187 = scalar_lea.vmem [#allocation2], %s5186
          %5189 = dma.done %s5185, 16
        $region104: #{dil_model_forward.1} parent=99 // pred_fallthru
          _
      $region100: #{dil_model_forward.1} parent=5 // pred_fallthru
        _
    $region6: #{dil_model_forward.1} parent=1 // loop_footer
      %s31 = sadd.s32 1, %s27
    $region7: #{dil_model_forward.1} parent=1 // loop_footer_branch
      %26 = sbr.rel target = $region3
    $region8: #{dil_model_forward.1} parent=1 // loop_exit
      _
    %5190 = vsyncpa [#allocation3], 1
    %s5191 = scalar_lea.sflag [#allocation3], 1
    %5192 = vsyncpa %s5191, 1

</llo_original>
